<compile_context>
chip_gen: v6e
topology: v6e:2x2x1
jax: 0.10.0
libtpu: 0.0.40
codegen_flags: <defaults>
</compile_context>

<pallas_src>
import functools

import jax
import jax.numpy as jnp
import numpy as np
from jax.experimental import pallas as pl
from jax.experimental.pallas import tpu as pltpu


# ---------------------------------------------------------------------------
# Fused kernel: BN-fold + Chebyshev GCN + MultiHead_Hyper_Attention + fc head.
# One Bt-sized batch block per grid step; everything stays in VMEM.
# ---------------------------------------------------------------------------
def _fused_kernel(x_ref, slab_ref, tv_ref, gw_ref, wqkva_ref, w1b_ref,
                  hmask_ref, gones_ref, wp_ref, wfc1_ref, msel_ref,
                  bsum_ref, rsel_ref, fc2w_ref, out_ref,
                  *, K, N, C, F, D, HN, H, Bt, hidden):
    dot = functools.partial(jnp.dot, preferred_element_type=jnp.float32)
    R = Bt * N                                                # rows per step

    # ---- Stage 1: folded (eval) BatchNorm + Chebyshev GCN + ReLU -------------
    x = x_ref[0]                                              # (Bt*N, C)
    x = x * slab_ref[0:1, 0:C] + slab_ref[1:2, 0:C]           # eval BN folded
    sx = dot(tv_ref[...], x)                                  # (K*Bt*N, C)
    acc = dot(sx[0:R, :], gw_ref[0])                          # (Bt*N, F)
    for k in range(1, K):                                     # K small & static
        acc = acc + dot(sx[k * R:(k + 1) * R, :], gw_ref[k])
    xg = jnp.maximum(acc, 0.0)                                # (Bt*N, F)

    # ---- Stage 2: fused [a1-logits | Q | K | V] projection (w0 folded) -------
    big = dot(xg, wqkva_ref[...]) + slab_ref[2:3, :]          # (Bt*N, HN + 384)
    a1l = big[:, 0:HN]                                        # pre-softmax attn1 logits
    q = big[:, HN:HN + D]                                     # (Bt*N, D)
    kk = big[:, HN + 128:HN + 128 + D]
    v = big[:, HN + 256:HN + 256 + D]

    mask = hmask_ref[...]                                     # (H*N, D) head block mask
    w1b = w1b_ref[...]                                        # (HN, D)  block-diag linear_1
    gones = gones_ref[...]                                    # (HN, HN) per-head ones blocks

    def col_softmax(a):                                       # softmax over nodes (dim=-2)
        a = a - jnp.max(a, axis=0, keepdims=True)
        e = jnp.exp(a)
        return e / jnp.sum(e, axis=0, keepdims=True)

    def head_renorm(a):                                       # a / (1e-9 + per-head row sum)
        return a / (1e-9 + dot(a, gones))

    outs = []
    for b in range(Bt):                                       # tiny unrolled per-graph core
        r0 = b * N
        a1 = head_renorm(col_softmax(a1l[r0:r0 + N, :]))      # (N, HN), == attn3
        k_rep = mask * jnp.concatenate([kk[r0:r0 + N, :]] * H, axis=0)   # (H*N, D)
        v_rep = mask * jnp.concatenate([v[r0:r0 + N, :]] * H, axis=0)
        a2 = jax.lax.dot_general(q[r0:r0 + N, :], k_rep, (((1,), (1,)), ((), ())),
                                 preferred_element_type=jnp.float32)     # (N, H*N)
        a2 = head_renorm(col_softmax(a2))
        # out1+out3 share a1; fold with out2 into one 2*HN-deep contraction.
        lhs = jnp.concatenate([a1, a2], axis=1)               # (N, 2*HN)
        rhs = jnp.concatenate([w1b + v_rep, w1b], axis=0)     # (2*HN, D)
        outs.append(dot(lhs, rhs))                            # (N, D)
    o = outs[0] if Bt == 1 else jnp.concatenate(outs, axis=0)  # (Bt*N, D)

    proj = dot(o, wp_ref[...]) + slab_ref[3:4, 0:F]           # (Bt*N, F)
    x2 = jnp.maximum(xg + proj, 0.0)                          # residual + ReLU

    # ---- Stage 3: fc head, no flatten loop (block-select matmul trick) -------
    pbig = dot(x2, wfc1_ref[...]) * msel_ref[...]             # (Bt*N, N*hidden)
    hsum = dot(bsum_ref[...], pbig)                           # (Bt, N*hidden)
    h1 = jnp.maximum(dot(hsum, rsel_ref[...]) + slab_ref[4:5, 0:hidden], 0.0)
    logits = dot(h1, fc2w_ref[...]) + slab_ref[5:6, 0:128]    # (Bt, 128) lane-padded
    out_ref[0] = logits.astype(out_ref.dtype)


# ---------------------------------------------------------------------------
# Host-side glue: normalize_A, Chebyshev supports, folded / packed parameters.
# ---------------------------------------------------------------------------
def normalize_A(A):
    A = jnp.maximum(A, 0.0)
    d = jnp.sum(A, axis=1)
    d_inv = 1.0 / jnp.sqrt(d + 1e-10)
    return d_inv[:, None] * A * d_inv[None, :]


def chebyshev_supports(L, K):
    N = L.shape[0]
    sup = [jnp.eye(N, dtype=L.dtype)]
    if K > 1:
        sup.append(L)
    for _ in range(2, K):
        sup.append(jnp.matmul(sup[-1], L))
    return jnp.stack(sup, axis=0)                             # (K, N, N)


def gcn_hyper_attention_forward(x, p, *, K, num_heads, batch_tile=None):
    B, N, C = x.shape
    Fo = p["gcn_w"].shape[-1]
    D = p["wq_t"].shape[1]
    hd = D // num_heads
    kdim = p["w0_t"].shape[1]
    hidden = p["fc1_w_t"].shape[1]
    nclass = p["fc2_w_t"].shape[1]
    assert D % num_heads == 0 and D <= 128
    assert kdim == N, "hyper-attention o2 path requires linear_0 width (k) == num_nodes"
    assert p["fc1_w_t"].shape[0] == N * Fo
    assert nclass <= 128

    Bt = B if batch_tile is None else batch_tile              # v7x: set Bt=B//2 -> grid=(2,)
    assert B % Bt == 0
    nblk = B // Bt
    HN = num_heads * kdim

    f32 = jnp.float32
    # --- parameter-only folding (constant-folded / hoisted under jit) ---------
    L = normalize_A(p["A"])
    sup = chebyshev_supports(L, K)                            # (K, N, N) (T_k = L^k, T_0 = I)
    eyeB = jnp.eye(Bt, dtype=f32)
    tv_b = jnp.concatenate([jnp.kron(eyeB, sup[k]) for k in range(K)], axis=0)  # (K*Bt*N, Bt*N)

    eyeH = jnp.eye(num_heads, dtype=f32)
    w0_blk = jnp.kron(eyeH, p["w0_t"])                        # (D, HN)  block-diag linear_0
    w1_blk = jnp.kron(eyeH, p["w1_t"])                        # (HN, D)  block-diag linear_1
    hmask = jnp.kron(eyeH, jnp.ones((N, hd), f32))            # (H*N, D) head block mask
    gones = jnp.kron(eyeH, jnp.ones((kdim, kdim), f32))       # (HN, HN) per-head row-sum

    zp = jnp.zeros((Fo, 128 - D), f32)                        # pad Q/K/V blocks to 128 lanes
    wqkva = jnp.concatenate([p["wq_t"] @ w0_blk,              # linear_0 folded into Q
                             p["wq_t"], zp, p["wk_t"], zp, p["wv_t"], zp], axis=1)
    zb = jnp.zeros((1, 128 - D), f32)
    b_big = jnp.concatenate([p["bq"] @ w0_blk, p["bq"], zb, p["bk"], zb, p["bv"], zb], axis=1)
    slabw = b_big.shape[1]
    assert wqkva.shape[1] == slabw                            # (F, HN + 384)

    # fc1 as a block-select matmul (no flatten): W_wide[f, n*hidden+j] = fc1_w[n*F+f, j]
    fc1_3 = p["fc1_w_t"].reshape(N, Fo, hidden)
    wfc1_wide = jnp.transpose(fc1_3, (1, 0, 2)).reshape(Fo, N * hidden)
    msel = jnp.tile(jnp.kron(jnp.eye(N, dtype=f32), jnp.ones((1, hidden), f32)), (Bt, 1))
    bsum = jnp.kron(jnp.eye(Bt, dtype=f32), jnp.ones((1, N), f32))      # (Bt, Bt*N)
    rsel = jnp.kron(jnp.ones((N, 1), f32), jnp.eye(hidden, dtype=f32))  # (N*hidden, hidden)

    fc2w_pad = jnp.zeros((hidden, 128), f32).at[:, :nclass].set(p["fc2_w_t"])
    fc2b_pad = jnp.zeros((1, 128), f32).at[:, :nclass].set(p["fc2_b"])

    # Pack every small vector into one lane-dense slab (1 DMA instead of 6).
    slab = jnp.zeros((8, slabw), f32)
    slab = slab.at[0, :C].set(p["bn_scale"][0])
    slab = slab.at[1, :C].set(p["bn_shift"][0])
    slab = slab.at[2, :].set(b_big[0])
    slab = slab.at[3, :Fo].set(p["bp"][0])
    slab = slab.at[4, :hidden].set(p["fc1_b"][0])
    slab = slab.at[5, :128].set(fc2b_pad[0])

    kernel = functools.partial(_fused_kernel, K=K, N=N, C=C, F=Fo, D=D,
                               HN=HN, H=num_heads, Bt=Bt, hidden=hidden)

    def full_spec(arr):
        nd = arr.ndim
        return pl.BlockSpec(arr.shape, lambda g, _nd=nd: (0,) * _nd)

    x3 = x.reshape(nblk, Bt * N, C)
    out = pl.pallas_call(
        kernel,
        out_shape=jax.ShapeDtypeStruct((nblk, Bt, 128), jnp.float32),
        grid=(nblk,),
        in_specs=[
            pl.BlockSpec((1, Bt * N, C), lambda g: (g, 0, 0)),   # x (Bt graphs per step)
            full_spec(slab),                                     # packed small params
            full_spec(tv_b),                                     # batched Chebyshev supports
            full_spec(p["gcn_w"]),                               # (K, C, F)
            full_spec(wqkva),                                    # [a1-logits | Q | K | V]
            full_spec(w1_blk),
            full_spec(hmask),
            full_spec(gones),
            full_spec(p["wp_t"]),
            full_spec(wfc1_wide),                                # fc1 wide weight
            full_spec(msel),                                     # node block-select mask
            full_spec(bsum),                                     # per-graph row reduce
            full_spec(rsel),                                     # hidden-lane reduce
            full_spec(fc2w_pad),                                 # fc2 (lane padded to 128)
        ],
        out_specs=pl.BlockSpec((1, Bt, 128), lambda g: (g, 0, 0)),
        compiler_params=pltpu.CompilerParams(dimension_semantics=("parallel",)),
    )(x3, slab, tv_b, p["gcn_w"], wqkva, w1_blk, hmask, gones, p["wp_t"],
      wfc1_wide, msel, bsum, rsel, fc2w_pad)
    return out.reshape(B, 128)[:, :nclass]


# ---------------------------------------------------------------------------
# Pure-JAX reference (mirrors the PyTorch math directly) for a correctness check
# ---------------------------------------------------------------------------
def reference_forward(x, p, *, K, num_heads):
    xbn = x * p["bn_scale"] + p["bn_shift"]
    L = normalize_A(p["A"])
    sup = chebyshev_supports(L, K)
    res = jnp.zeros(xbn.shape[:2] + (p["gcn_w"].shape[-1],), jnp.float32)
    for k in range(K):
        res = res + jnp.einsum("ij,bjc->bic", sup[k], xbn) @ p["gcn_w"][k]
    res = jnp.maximum(res, 0.0)

    B, N, _ = res.shape
    D = p["wq_t"].shape[1]
    hd = D // num_heads
    Q = res @ p["wq_t"] + p["bq"]
    Km = res @ p["wk_t"] + p["bk"]
    V = res @ p["wv_t"] + p["bv"]

    def split(t):
        return t.reshape(B, N, num_heads, hd).transpose(0, 2, 1, 3)   # (B,H,N,hd)

    Qh, Kh, Vh = split(Q), split(Km), split(V)
    a1 = jax.nn.softmax(Qh @ p["w0_t"], axis=-2)
    a1 = a1 / (1e-9 + a1.sum(-1, keepdims=True))
    o1 = a1 @ p["w1_t"]
    a2 = jax.nn.softmax(Qh @ Kh.transpose(0, 1, 3, 2), axis=-2)
    a2 = a2 / (1e-9 + a2.sum(-1, keepdims=True))
    o2 = a2 @ p["w1_t"]
    o3 = a1 @ Vh
    out = (o1 + o2 + o3).transpose(0, 2, 1, 3).reshape(B, N, -1)
    out = out @ p["wp_t"] + p["bp"]
    res = jnp.maximum(res + out, 0.0)

    flat = res.reshape(B, -1)
    h = jnp.maximum(flat @ p["fc1_w_t"] + p["fc1_b"], 0.0)
    return h @ p["fc2_w_t"] + p["fc2_b"]


def xavier_normal(key, shape):
    fan_in, fan_out = shape[-2], shape[-1]
    std = (2.0 / (fan_in + fan_out)) ** 0.5
    return std * jax.random.normal(key, shape, dtype=jnp.float32)


if __name__ == "__main__":
    # Small, module-consistent shapes: xdim = (B, num_nodes, in_feat)
    B, N, C = 2, 16, 8          # batch, graph nodes (xdim[1]), input features (xdim[2])
    K = 3                       # k_adj (Chebyshev order)
    F = 32                      # num_out
    nclass = 3
    num_heads, att_dim = 8, 64
    hd = att_dim // num_heads   # 8
    kdim = N                    # linear_0 / linear_1 width (= num_nodes)

    key = jax.random.PRNGKey(0)
    ks = jax.random.split(key, 20)

    # Eval-mode BatchNorm1d folded into per-channel scale/shift.
    gamma = 1.0 + 0.1 * jnp.arange(C, dtype=jnp.float32)
    beta = 0.01 * jnp.arange(C, dtype=jnp.float32)
    run_mean = 0.05 * jnp.arange(C, dtype=jnp.float32)
    run_var = 1.0 + 0.02 * jnp.arange(C, dtype=jnp.float32)
    bn_scale = (gamma / jnp.sqrt(run_var + 1e-5)).reshape(1, C)
    bn_shift = (beta - run_mean * gamma / jnp.sqrt(run_var + 1e-5)).reshape(1, C)

    params = {
        "A": xavier_normal(ks[0], (N, N)),
        "gcn_w": jnp.stack([xavier_normal(ks[1 + i], (C, F)) for i in range(K)], 0),
        "bn_scale": bn_scale,
        "bn_shift": bn_shift,
        # attention weights, stored transposed (in, out)
        "wq_t": xavier_normal(ks[5], (F, att_dim)),
        "bq": 0.01 * jax.random.normal(ks[6], (1, att_dim), jnp.float32),
        "wk_t": xavier_normal(ks[7], (F, att_dim)),
        "bk": 0.01 * jax.random.normal(ks[8], (1, att_dim), jnp.float32),
        "wv_t": xavier_normal(ks[9], (F, att_dim)),
        "bv": 0.01 * jax.random.normal(ks[10], (1, att_dim), jnp.float32),
        "w0_t": xavier_normal(ks[11], (hd, kdim)),       # linear_0 (no bias)
        "w1_t": xavier_normal(ks[12], (kdim, hd)),       # linear_1 (no bias)
        "wp_t": xavier_normal(ks[13], (att_dim, F)),     # proj
        "bp": 0.01 * jax.random.normal(ks[14], (1, F), jnp.float32),
        # classification head
        "fc1_w_t": xavier_normal(ks[15], (N * F, 64)),
        "fc1_b": 0.01 * jax.random.normal(ks[16], (1, 64), jnp.float32),
        "fc2_w_t": xavier_normal(ks[17], (64, nclass)),
        "fc2_b": 0.01 * jax.random.normal(ks[18], (1, nclass), jnp.float32),
    }

    x = jax.random.normal(ks[19], (B, N, C), jnp.float32)

    fwd = jax.jit(functools.partial(gcn_hyper_attention_forward, K=K, num_heads=num_heads))
    out = jax.block_until_ready(fwd(x, params))

    ref = jax.block_until_ready(reference_forward(x, params, K=K, num_heads=num_heads))
    np.testing.assert_allclose(np.asarray(out), np.asarray(ref), rtol=5e-4, atol=5e-4)

    print("KERNEL_OK")
</pallas_src>

<mosaic_0001>
module attributes {stable_mosaic.version = 11 : i64} {
  func.func @_fused_kernel(%arg0: i32, %arg1: memref<1x32x8xf32, #tpu.memory_space<vmem>>, %arg2: memref<8x512xf32, #tpu.memory_space<vmem>>, %arg3: memref<96x32xf32, #tpu.memory_space<vmem>>, %arg4: memref<3x8x32xf32, #tpu.memory_space<vmem>>, %arg5: memref<32x512xf32, #tpu.memory_space<vmem>>, %arg6: memref<128x64xf32, #tpu.memory_space<vmem>>, %arg7: memref<128x64xf32, #tpu.memory_space<vmem>>, %arg8: memref<128x128xf32, #tpu.memory_space<vmem>>, %arg9: memref<64x32xf32, #tpu.memory_space<vmem>>, %arg10: memref<32x1024xf32, #tpu.memory_space<vmem>>, %arg11: memref<32x1024xf32, #tpu.memory_space<vmem>>, %arg12: memref<2x32xf32, #tpu.memory_space<vmem>>, %arg13: memref<1024x64xf32, #tpu.memory_space<vmem>>, %arg14: memref<64x128xf32, #tpu.memory_space<vmem>>, %arg15: memref<1x2x128xf32, #tpu.memory_space<vmem>>) attributes {dimension_semantics = [#tpu.dimension_semantics<parallel>], iteration_bounds = array<i64: 1>, scalar_prefetch = 0 : i64, scratch_operands = 0 : i64, tpu.core_type = #tpu.core_type<tc>, window_params = [{transform_indices = @transform_0, window_bounds = array<i64: 1, 32, 8>}, {pipeline_mode = #tpu.pipeline_mode<synchronous>, transform_indices = @transform_1, window_bounds = array<i64: 8, 512>}, {pipeline_mode = #tpu.pipeline_mode<synchronous>, transform_indices = @transform_2, window_bounds = array<i64: 96, 32>}, {pipeline_mode = #tpu.pipeline_mode<synchronous>, transform_indices = @transform_3, window_bounds = array<i64: 3, 8, 32>}, {pipeline_mode = #tpu.pipeline_mode<synchronous>, transform_indices = @transform_4, window_bounds = array<i64: 32, 512>}, {pipeline_mode = #tpu.pipeline_mode<synchronous>, transform_indices = @transform_5, window_bounds = array<i64: 128, 64>}, {pipeline_mode = #tpu.pipeline_mode<synchronous>, transform_indices = @transform_6, window_bounds = array<i64: 128, 64>}, {pipeline_mode = #tpu.pipeline_mode<synchronous>, transform_indices = @transform_7, window_bounds = array<i64: 128, 128>}, {pipeline_mode = #tpu.pipeline_mode<synchronous>, transform_indices = @transform_8, window_bounds = array<i64: 64, 32>}, {pipeline_mode = #tpu.pipeline_mode<synchronous>, transform_indices = @transform_9, window_bounds = array<i64: 32, 1024>}, {pipeline_mode = #tpu.pipeline_mode<synchronous>, transform_indices = @transform_10, window_bounds = array<i64: 32, 1024>}, {pipeline_mode = #tpu.pipeline_mode<synchronous>, transform_indices = @transform_11, window_bounds = array<i64: 2, 32>}, {pipeline_mode = #tpu.pipeline_mode<synchronous>, transform_indices = @transform_12, window_bounds = array<i64: 1024, 64>}, {pipeline_mode = #tpu.pipeline_mode<synchronous>, transform_indices = @transform_13, window_bounds = array<i64: 64, 128>}, {transform_indices = @transform_14, window_bounds = array<i64: 1, 2, 128>}]} {
    %c0 = arith.constant 0 : index
    %c0_0 = arith.constant 0 : index
    %c0_1 = arith.constant 0 : index
    %0 = vector.load %arg1[%c0, %c0_0, %c0_1] : memref<1x32x8xf32, #tpu.memory_space<vmem>>, vector<1x32x8xf32>
    %1 = vector.shape_cast %0 : vector<1x32x8xf32> to vector<32x8xf32>
    %c0_2 = arith.constant 0 : index
    %c0_3 = arith.constant 0 : index
    %2 = vector.load %arg2[%c0_2, %c0_3] : memref<8x512xf32, #tpu.memory_space<vmem>>, vector<1x8xf32>
    %3 = vector.broadcast %2 : vector<1x8xf32> to vector<32x8xf32>
    %4 = arith.mulf %1, %3 : vector<32x8xf32>
    %c1 = arith.constant 1 : index
    %c0_4 = arith.constant 0 : index
    %5 = vector.load %arg2[%c1, %c0_4] : memref<8x512xf32, #tpu.memory_space<vmem>>, vector<1x8xf32>
    %6 = vector.broadcast %5 : vector<1x8xf32> to vector<32x8xf32>
    %7 = arith.addf %4, %6 : vector<32x8xf32>
    %c0_5 = arith.constant 0 : index
    %c0_6 = arith.constant 0 : index
    %8 = vector.load %arg3[%c0_5, %c0_6] : memref<96x32xf32, #tpu.memory_space<vmem>>, vector<96x32xf32>
    %cst = arith.constant dense<0.000000e+00> : vector<96x8xf32>
    %9 = tpu.matmul %8, %7, %cst {dimension_numbers = #tpu.dot_dimension_numbers<[1], [0], [0], [1], [0, 0, 1, 1], [], []>} : vector<96x32xf32>, vector<32x8xf32>, vector<96x8xf32> -> vector<96x8xf32>
    %10 = vector.extract_strided_slice %9 {offsets = [0, 0], sizes = [32, 8], strides = [1, 1]} : vector<96x8xf32> to vector<32x8xf32>
    %c0_7 = arith.constant 0 : index
    %c0_8 = arith.constant 0 : index
    %c0_9 = arith.constant 0 : index
    %11 = vector.load %arg4[%c0_7, %c0_8, %c0_9] : memref<3x8x32xf32, #tpu.memory_space<vmem>>, vector<1x8x32xf32>
    %12 = vector.shape_cast %11 : vector<1x8x32xf32> to vector<8x32xf32>
    %cst_10 = arith.constant dense<0.000000e+00> : vector<32x32xf32>
    %13 = tpu.matmul %10, %12, %cst_10 {dimension_numbers = #tpu.dot_dimension_numbers<[1], [0], [0], [1], [0, 0, 1, 1], [], []>} : vector<32x8xf32>, vector<8x32xf32>, vector<32x32xf32> -> vector<32x32xf32>
    %14 = vector.extract_strided_slice %9 {offsets = [32, 0], sizes = [32, 8], strides = [1, 1]} : vector<96x8xf32> to vector<32x8xf32>
    %c1_11 = arith.constant 1 : index
    %c0_12 = arith.constant 0 : index
    %c0_13 = arith.constant 0 : index
    %15 = vector.load %arg4[%c1_11, %c0_12, %c0_13] : memref<3x8x32xf32, #tpu.memory_space<vmem>>, vector<1x8x32xf32>
    %16 = vector.shape_cast %15 : vector<1x8x32xf32> to vector<8x32xf32>
    %cst_14 = arith.constant dense<0.000000e+00> : vector<32x32xf32>
    %17 = tpu.matmul %14, %16, %cst_14 {dimension_numbers = #tpu.dot_dimension_numbers<[1], [0], [0], [1], [0, 0, 1, 1], [], []>} : vector<32x8xf32>, vector<8x32xf32>, vector<32x32xf32> -> vector<32x32xf32>
    %18 = arith.addf %13, %17 : vector<32x32xf32>
    %19 = vector.extract_strided_slice %9 {offsets = [64, 0], sizes = [32, 8], strides = [1, 1]} : vector<96x8xf32> to vector<32x8xf32>
    %c2 = arith.constant 2 : index
    %c0_15 = arith.constant 0 : index
    %c0_16 = arith.constant 0 : index
    %20 = vector.load %arg4[%c2, %c0_15, %c0_16] : memref<3x8x32xf32, #tpu.memory_space<vmem>>, vector<1x8x32xf32>
    %21 = vector.shape_cast %20 : vector<1x8x32xf32> to vector<8x32xf32>
    %cst_17 = arith.constant dense<0.000000e+00> : vector<32x32xf32>
    %22 = tpu.matmul %19, %21, %cst_17 {dimension_numbers = #tpu.dot_dimension_numbers<[1], [0], [0], [1], [0, 0, 1, 1], [], []>} : vector<32x8xf32>, vector<8x32xf32>, vector<32x32xf32> -> vector<32x32xf32>
    %23 = arith.addf %18, %22 : vector<32x32xf32>
    %cst_18 = arith.constant 0.000000e+00 : f32
    %24 = vector.broadcast %cst_18 : f32 to vector<32x32xf32>
    %25 = arith.maximumf %23, %24 : vector<32x32xf32>
    %c0_19 = arith.constant 0 : index
    %c0_20 = arith.constant 0 : index
    %26 = vector.load %arg5[%c0_19, %c0_20] : memref<32x512xf32, #tpu.memory_space<vmem>>, vector<32x512xf32>
    %cst_21 = arith.constant dense<0.000000e+00> : vector<32x512xf32>
    %27 = tpu.matmul %25, %26, %cst_21 {dimension_numbers = #tpu.dot_dimension_numbers<[1], [0], [0], [1], [0, 0, 1, 1], [], []>} : vector<32x32xf32>, vector<32x512xf32>, vector<32x512xf32> -> vector<32x512xf32>
    %c2_22 = arith.constant 2 : index
    %c0_23 = arith.constant 0 : index
    %28 = vector.load %arg2[%c2_22, %c0_23] : memref<8x512xf32, #tpu.memory_space<vmem>>, vector<1x512xf32>
    %29 = vector.broadcast %28 : vector<1x512xf32> to vector<32x512xf32>
    %30 = arith.addf %27, %29 : vector<32x512xf32>
    %31 = vector.extract_strided_slice %30 {offsets = [0, 0], sizes = [32, 128], strides = [1, 1]} : vector<32x512xf32> to vector<32x128xf32>
    %32 = vector.extract_strided_slice %30 {offsets = [0, 128], sizes = [32, 64], strides = [1, 1]} : vector<32x512xf32> to vector<32x64xf32>
    %33 = vector.extract_strided_slice %30 {offsets = [0, 256], sizes = [32, 64], strides = [1, 1]} : vector<32x512xf32> to vector<32x64xf32>
    %34 = vector.extract_strided_slice %30 {offsets = [0, 384], sizes = [32, 64], strides = [1, 1]} : vector<32x512xf32> to vector<32x64xf32>
    %c0_24 = arith.constant 0 : index
    %c0_25 = arith.constant 0 : index
    %35 = vector.load %arg7[%c0_24, %c0_25] : memref<128x64xf32, #tpu.memory_space<vmem>>, vector<128x64xf32>
    %c0_26 = arith.constant 0 : index
    %c0_27 = arith.constant 0 : index
    %36 = vector.load %arg6[%c0_26, %c0_27] : memref<128x64xf32, #tpu.memory_space<vmem>>, vector<128x64xf32>
    %c0_28 = arith.constant 0 : index
    %c0_29 = arith.constant 0 : index
    %37 = vector.load %arg8[%c0_28, %c0_29] : memref<128x128xf32, #tpu.memory_space<vmem>>, vector<128x128xf32>
    %38 = vector.extract_strided_slice %31 {offsets = [0, 0], sizes = [16, 128], strides = [1, 1]} : vector<32x128xf32> to vector<16x128xf32>
    %cst_30 = arith.constant dense<0xFF800000> : vector<128xf32>
    %39 = vector.multi_reduction <maximumf>, %38, %cst_30 [0] : vector<16x128xf32> to vector<128xf32>
    %40 = vector.shape_cast %39 : vector<128xf32> to vector<1x128xf32>
    %41 = vector.broadcast %40 : vector<1x128xf32> to vector<16x128xf32>
    %42 = arith.subf %38, %41 : vector<16x128xf32>
    %43 = math.exp %42 : vector<16x128xf32>
    %cst_31 = arith.constant dense<0.000000e+00> : vector<128xf32>
    %44 = vector.multi_reduction <add>, %43, %cst_31 [0] : vector<16x128xf32> to vector<128xf32>
    %45 = vector.shape_cast %44 : vector<128xf32> to vector<1x128xf32>
    %46 = vector.broadcast %45 : vector<1x128xf32> to vector<16x128xf32>
    %47 = arith.divf %43, %46 : vector<16x128xf32>
    %cst_32 = arith.constant dense<0.000000e+00> : vector<16x128xf32>
    %48 = tpu.matmul %47, %37, %cst_32 {dimension_numbers = #tpu.dot_dimension_numbers<[1], [0], [0], [1], [0, 0, 1, 1], [], []>} : vector<16x128xf32>, vector<128x128xf32>, vector<16x128xf32> -> vector<16x128xf32>
    %cst_33 = arith.constant 9.99999971E-10 : f32
    %49 = vector.broadcast %cst_33 : f32 to vector<16x128xf32>
    %50 = arith.addf %49, %48 : vector<16x128xf32>
    %51 = arith.divf %47, %50 : vector<16x128xf32>
    %52 = vector.extract_strided_slice %33 {offsets = [0, 0], sizes = [16, 64], strides = [1, 1]} : vector<32x64xf32> to vector<16x64xf32>
    %53 = tpu.concatenate %52, %52, %52, %52, %52, %52, %52, %52 in 0 : vector<16x64xf32>, vector<16x64xf32>, vector<16x64xf32>, vector<16x64xf32>, vector<16x64xf32>, vector<16x64xf32>, vector<16x64xf32>, vector<16x64xf32> -> vector<128x64xf32>
    %54 = arith.mulf %35, %53 : vector<128x64xf32>
    %55 = vector.extract_strided_slice %34 {offsets = [0, 0], sizes = [16, 64], strides = [1, 1]} : vector<32x64xf32> to vector<16x64xf32>
    %56 = tpu.concatenate %55, %55, %55, %55, %55, %55, %55, %55 in 0 : vector<16x64xf32>, vector<16x64xf32>, vector<16x64xf32>, vector<16x64xf32>, vector<16x64xf32>, vector<16x64xf32>, vector<16x64xf32>, vector<16x64xf32> -> vector<128x64xf32>
    %57 = arith.mulf %35, %56 : vector<128x64xf32>
    %58 = vector.extract_strided_slice %32 {offsets = [0, 0], sizes = [16, 64], strides = [1, 1]} : vector<32x64xf32> to vector<16x64xf32>
    %cst_34 = arith.constant dense<0.000000e+00> : vector<16x128xf32>
    %59 = tpu.matmul %58, %54, %cst_34 {dimension_numbers = #tpu.dot_dimension_numbers<[1], [1], [0], [0], [0, 0, 1, 0], [], []>} : vector<16x64xf32>, vector<128x64xf32>, vector<16x128xf32> -> vector<16x128xf32>
    %cst_35 = arith.constant dense<0xFF800000> : vector<128xf32>
    %60 = vector.multi_reduction <maximumf>, %59, %cst_35 [0] : vector<16x128xf32> to vector<128xf32>
    %61 = vector.shape_cast %60 : vector<128xf32> to vector<1x128xf32>
    %62 = vector.broadcast %61 : vector<1x128xf32> to vector<16x128xf32>
    %63 = arith.subf %59, %62 : vector<16x128xf32>
    %64 = math.exp %63 : vector<16x128xf32>
    %cst_36 = arith.constant dense<0.000000e+00> : vector<128xf32>
    %65 = vector.multi_reduction <add>, %64, %cst_36 [0] : vector<16x128xf32> to vector<128xf32>
    %66 = vector.shape_cast %65 : vector<128xf32> to vector<1x128xf32>
    %67 = vector.broadcast %66 : vector<1x128xf32> to vector<16x128xf32>
    %68 = arith.divf %64, %67 : vector<16x128xf32>
    %cst_37 = arith.constant dense<0.000000e+00> : vector<16x128xf32>
    %69 = tpu.matmul %68, %37, %cst_37 {dimension_numbers = #tpu.dot_dimension_numbers<[1], [0], [0], [1], [0, 0, 1, 1], [], []>} : vector<16x128xf32>, vector<128x128xf32>, vector<16x128xf32> -> vector<16x128xf32>
    %cst_38 = arith.constant 9.99999971E-10 : f32
    %70 = vector.broadcast %cst_38 : f32 to vector<16x128xf32>
    %71 = arith.addf %70, %69 : vector<16x128xf32>
    %72 = arith.divf %68, %71 : vector<16x128xf32>
    %73 = tpu.concatenate %51, %72 in 1 : vector<16x128xf32>, vector<16x128xf32> -> vector<16x256xf32>
    %74 = arith.addf %36, %57 : vector<128x64xf32>
    %75 = tpu.concatenate %74, %36 in 0 : vector<128x64xf32>, vector<128x64xf32> -> vector<256x64xf32>
    %cst_39 = arith.constant dense<0.000000e+00> : vector<16x64xf32>
    %76 = tpu.matmul %73, %75, %cst_39 {dimension_numbers = #tpu.dot_dimension_numbers<[1], [0], [0], [1], [0, 0, 1, 1], [], []>} : vector<16x256xf32>, vector<256x64xf32>, vector<16x64xf32> -> vector<16x64xf32>
    %77 = vector.extract_strided_slice %31 {offsets = [16, 0], sizes = [16, 128], strides = [1, 1]} : vector<32x128xf32> to vector<16x128xf32>
    %cst_40 = arith.constant dense<0xFF800000> : vector<128xf32>
    %78 = vector.multi_reduction <maximumf>, %77, %cst_40 [0] : vector<16x128xf32> to vector<128xf32>
    %79 = vector.shape_cast %78 : vector<128xf32> to vector<1x128xf32>
    %80 = vector.broadcast %79 : vector<1x128xf32> to vector<16x128xf32>
    %81 = arith.subf %77, %80 : vector<16x128xf32>
    %82 = math.exp %81 : vector<16x128xf32>
    %cst_41 = arith.constant dense<0.000000e+00> : vector<128xf32>
    %83 = vector.multi_reduction <add>, %82, %cst_41 [0] : vector<16x128xf32> to vector<128xf32>
    %84 = vector.shape_cast %83 : vector<128xf32> to vector<1x128xf32>
    %85 = vector.broadcast %84 : vector<1x128xf32> to vector<16x128xf32>
    %86 = arith.divf %82, %85 : vector<16x128xf32>
    %cst_42 = arith.constant dense<0.000000e+00> : vector<16x128xf32>
    %87 = tpu.matmul %86, %37, %cst_42 {dimension_numbers = #tpu.dot_dimension_numbers<[1], [0], [0], [1], [0, 0, 1, 1], [], []>} : vector<16x128xf32>, vector<128x128xf32>, vector<16x128xf32> -> vector<16x128xf32>
    %cst_43 = arith.constant 9.99999971E-10 : f32
    %88 = vector.broadcast %cst_43 : f32 to vector<16x128xf32>
    %89 = arith.addf %88, %87 : vector<16x128xf32>
    %90 = arith.divf %86, %89 : vector<16x128xf32>
    %91 = vector.extract_strided_slice %33 {offsets = [16, 0], sizes = [16, 64], strides = [1, 1]} : vector<32x64xf32> to vector<16x64xf32>
    %92 = tpu.concatenate %91, %91, %91, %91, %91, %91, %91, %91 in 0 : vector<16x64xf32>, vector<16x64xf32>, vector<16x64xf32>, vector<16x64xf32>, vector<16x64xf32>, vector<16x64xf32>, vector<16x64xf32>, vector<16x64xf32> -> vector<128x64xf32>
    %93 = arith.mulf %35, %92 : vector<128x64xf32>
    %94 = vector.extract_strided_slice %34 {offsets = [16, 0], sizes = [16, 64], strides = [1, 1]} : vector<32x64xf32> to vector<16x64xf32>
    %95 = tpu.concatenate %94, %94, %94, %94, %94, %94, %94, %94 in 0 : vector<16x64xf32>, vector<16x64xf32>, vector<16x64xf32>, vector<16x64xf32>, vector<16x64xf32>, vector<16x64xf32>, vector<16x64xf32>, vector<16x64xf32> -> vector<128x64xf32>
    %96 = arith.mulf %35, %95 : vector<128x64xf32>
    %97 = vector.extract_strided_slice %32 {offsets = [16, 0], sizes = [16, 64], strides = [1, 1]} : vector<32x64xf32> to vector<16x64xf32>
    %cst_44 = arith.constant dense<0.000000e+00> : vector<16x128xf32>
    %98 = tpu.matmul %97, %93, %cst_44 {dimension_numbers = #tpu.dot_dimension_numbers<[1], [1], [0], [0], [0, 0, 1, 0], [], []>} : vector<16x64xf32>, vector<128x64xf32>, vector<16x128xf32> -> vector<16x128xf32>
    %cst_45 = arith.constant dense<0xFF800000> : vector<128xf32>
    %99 = vector.multi_reduction <maximumf>, %98, %cst_45 [0] : vector<16x128xf32> to vector<128xf32>
    %100 = vector.shape_cast %99 : vector<128xf32> to vector<1x128xf32>
    %101 = vector.broadcast %100 : vector<1x128xf32> to vector<16x128xf32>
    %102 = arith.subf %98, %101 : vector<16x128xf32>
    %103 = math.exp %102 : vector<16x128xf32>
    %cst_46 = arith.constant dense<0.000000e+00> : vector<128xf32>
    %104 = vector.multi_reduction <add>, %103, %cst_46 [0] : vector<16x128xf32> to vector<128xf32>
    %105 = vector.shape_cast %104 : vector<128xf32> to vector<1x128xf32>
    %106 = vector.broadcast %105 : vector<1x128xf32> to vector<16x128xf32>
    %107 = arith.divf %103, %106 : vector<16x128xf32>
    %cst_47 = arith.constant dense<0.000000e+00> : vector<16x128xf32>
    %108 = tpu.matmul %107, %37, %cst_47 {dimension_numbers = #tpu.dot_dimension_numbers<[1], [0], [0], [1], [0, 0, 1, 1], [], []>} : vector<16x128xf32>, vector<128x128xf32>, vector<16x128xf32> -> vector<16x128xf32>
    %cst_48 = arith.constant 9.99999971E-10 : f32
    %109 = vector.broadcast %cst_48 : f32 to vector<16x128xf32>
    %110 = arith.addf %109, %108 : vector<16x128xf32>
    %111 = arith.divf %107, %110 : vector<16x128xf32>
    %112 = tpu.concatenate %90, %111 in 1 : vector<16x128xf32>, vector<16x128xf32> -> vector<16x256xf32>
    %113 = arith.addf %36, %96 : vector<128x64xf32>
    %114 = tpu.concatenate %113, %36 in 0 : vector<128x64xf32>, vector<128x64xf32> -> vector<256x64xf32>
    %cst_49 = arith.constant dense<0.000000e+00> : vector<16x64xf32>
    %115 = tpu.matmul %112, %114, %cst_49 {dimension_numbers = #tpu.dot_dimension_numbers<[1], [0], [0], [1], [0, 0, 1, 1], [], []>} : vector<16x256xf32>, vector<256x64xf32>, vector<16x64xf32> -> vector<16x64xf32>
    %116 = tpu.concatenate %76, %115 in 0 : vector<16x64xf32>, vector<16x64xf32> -> vector<32x64xf32>
    %c0_50 = arith.constant 0 : index
    %c0_51 = arith.constant 0 : index
    %117 = vector.load %arg9[%c0_50, %c0_51] : memref<64x32xf32, #tpu.memory_space<vmem>>, vector<64x32xf32>
    %cst_52 = arith.constant dense<0.000000e+00> : vector<32x32xf32>
    %118 = tpu.matmul %116, %117, %cst_52 {dimension_numbers = #tpu.dot_dimension_numbers<[1], [0], [0], [1], [0, 0, 1, 1], [], []>} : vector<32x64xf32>, vector<64x32xf32>, vector<32x32xf32> -> vector<32x32xf32>
    %c3 = arith.constant 3 : index
    %c0_53 = arith.constant 0 : index
    %119 = vector.load %arg2[%c3, %c0_53] : memref<8x512xf32, #tpu.memory_space<vmem>>, vector<1x32xf32>
    %120 = vector.broadcast %119 : vector<1x32xf32> to vector<32x32xf32>
    %121 = arith.addf %118, %120 : vector<32x32xf32>
    %122 = arith.addf %25, %121 : vector<32x32xf32>
    %cst_54 = arith.constant 0.000000e+00 : f32
    %123 = vector.broadcast %cst_54 : f32 to vector<32x32xf32>
    %124 = arith.maximumf %122, %123 : vector<32x32xf32>
    %c0_55 = arith.constant 0 : index
    %c0_56 = arith.constant 0 : index
    %125 = vector.load %arg10[%c0_55, %c0_56] : memref<32x1024xf32, #tpu.memory_space<vmem>>, vector<32x1024xf32>
    %cst_57 = arith.constant dense<0.000000e+00> : vector<32x1024xf32>
    %126 = tpu.matmul %124, %125, %cst_57 {dimension_numbers = #tpu.dot_dimension_numbers<[1], [0], [0], [1], [0, 0, 1, 1], [], []>} : vector<32x32xf32>, vector<32x1024xf32>, vector<32x1024xf32> -> vector<32x1024xf32>
    %c0_58 = arith.constant 0 : index
    %c0_59 = arith.constant 0 : index
    %127 = vector.load %arg11[%c0_58, %c0_59] : memref<32x1024xf32, #tpu.memory_space<vmem>>, vector<32x1024xf32>
    %128 = arith.mulf %126, %127 : vector<32x1024xf32>
    %c0_60 = arith.constant 0 : index
    %c0_61 = arith.constant 0 : index
    %129 = vector.load %arg12[%c0_60, %c0_61] : memref<2x32xf32, #tpu.memory_space<vmem>>, vector<2x32xf32>
    %cst_62 = arith.constant dense<0.000000e+00> : vector<2x1024xf32>
    %130 = tpu.matmul %129, %128, %cst_62 {dimension_numbers = #tpu.dot_dimension_numbers<[1], [0], [0], [1], [0, 0, 1, 1], [], []>} : vector<2x32xf32>, vector<32x1024xf32>, vector<2x1024xf32> -> vector<2x1024xf32>
    %c0_63 = arith.constant 0 : index
    %c0_64 = arith.constant 0 : index
    %131 = vector.load %arg13[%c0_63, %c0_64] : memref<1024x64xf32, #tpu.memory_space<vmem>>, vector<1024x64xf32>
    %cst_65 = arith.constant dense<0.000000e+00> : vector<2x64xf32>
    %132 = tpu.matmul %130, %131, %cst_65 {dimension_numbers = #tpu.dot_dimension_numbers<[1], [0], [0], [1], [0, 0, 1, 1], [], []>} : vector<2x1024xf32>, vector<1024x64xf32>, vector<2x64xf32> -> vector<2x64xf32>
    %c4 = arith.constant 4 : index
    %c0_66 = arith.constant 0 : index
    %133 = vector.load %arg2[%c4, %c0_66] : memref<8x512xf32, #tpu.memory_space<vmem>>, vector<1x64xf32>
    %134 = vector.broadcast %133 : vector<1x64xf32> to vector<2x64xf32>
    %135 = arith.addf %132, %134 : vector<2x64xf32>
    %cst_67 = arith.constant 0.000000e+00 : f32
    %136 = vector.broadcast %cst_67 : f32 to vector<2x64xf32>
    %137 = arith.maximumf %135, %136 : vector<2x64xf32>
    %c0_68 = arith.constant 0 : index
    %c0_69 = arith.constant 0 : index
    %138 = vector.load %arg14[%c0_68, %c0_69] : memref<64x128xf32, #tpu.memory_space<vmem>>, vector<64x128xf32>
    %cst_70 = arith.constant dense<0.000000e+00> : vector<2x128xf32>
    %139 = tpu.matmul %137, %138, %cst_70 {dimension_numbers = #tpu.dot_dimension_numbers<[1], [0], [0], [1], [0, 0, 1, 1], [], []>} : vector<2x64xf32>, vector<64x128xf32>, vector<2x128xf32> -> vector<2x128xf32>
    %c5 = arith.constant 5 : index
    %c0_71 = arith.constant 0 : index
    %140 = vector.load %arg2[%c5, %c0_71] : memref<8x512xf32, #tpu.memory_space<vmem>>, vector<1x128xf32>
    %141 = vector.broadcast %140 : vector<1x128xf32> to vector<2x128xf32>
    %142 = arith.addf %139, %141 : vector<2x128xf32>
    %c0_72 = arith.constant 0 : index
    %c0_73 = arith.constant 0 : index
    %c0_74 = arith.constant 0 : index
    %143 = vector.load %arg15[%c0_72, %c0_73, %c0_74] : memref<1x2x128xf32, #tpu.memory_space<vmem>>, vector<1x2x128xf32>
    %144 = vector.shape_cast %143 : vector<1x2x128xf32> to vector<2x128xf32>
    %145 = vector.shape_cast %142 : vector<2x128xf32> to vector<1x2x128xf32>
    tpu.vector_store %arg15[%c0_72, %c0_73, %c0_74], %145 {strides = array<i32>} : memref<1x2x128xf32, #tpu.memory_space<vmem>>, vector<1x2x128xf32>,
    return
  }
  func.func @transform_0(%arg0: i32) -> (i32, i32, i32) {
    %c0_i32 = arith.constant 0 : i32
    %c0_i32_0 = arith.constant 0 : i32
    %c0_i32_1 = arith.constant 0 : i32
    return %arg0, %c0_i32, %c0_i32_0 : i32, i32, i32
  }
  func.func @transform_1(%arg0: i32) -> (i32, i32) {
    %c0_i32 = arith.constant 0 : i32
    %c0_i32_0 = arith.constant 0 : i32
    %c0_i32_1 = arith.constant 0 : i32
    return %c0_i32, %c0_i32_0 : i32, i32
  }
  func.func @transform_2(%arg0: i32) -> (i32, i32) {
    %c0_i32 = arith.constant 0 : i32
    %c0_i32_0 = arith.constant 0 : i32
    %c0_i32_1 = arith.constant 0 : i32
    return %c0_i32, %c0_i32_0 : i32, i32
  }
  func.func @transform_3(%arg0: i32) -> (i32, i32, i32) {
    %c0_i32 = arith.constant 0 : i32
    %c0_i32_0 = arith.constant 0 : i32
    %c0_i32_1 = arith.constant 0 : i32
    %c0_i32_2 = arith.constant 0 : i32
    return %c0_i32, %c0_i32_0, %c0_i32_1 : i32, i32, i32
  }
  func.func @transform_4(%arg0: i32) -> (i32, i32) {
    %c0_i32 = arith.constant 0 : i32
    %c0_i32_0 = arith.constant 0 : i32
    %c0_i32_1 = arith.constant 0 : i32
    return %c0_i32, %c0_i32_0 : i32, i32
  }
  func.func @transform_5(%arg0: i32) -> (i32, i32) {
    %c0_i32 = arith.constant 0 : i32
    %c0_i32_0 = arith.constant 0 : i32
    %c0_i32_1 = arith.constant 0 : i32
    return %c0_i32, %c0_i32_0 : i32, i32
  }
  func.func @transform_6(%arg0: i32) -> (i32, i32) {
    %c0_i32 = arith.constant 0 : i32
    %c0_i32_0 = arith.constant 0 : i32
    %c0_i32_1 = arith.constant 0 : i32
    return %c0_i32, %c0_i32_0 : i32, i32
  }
  func.func @transform_7(%arg0: i32) -> (i32, i32) {
    %c0_i32 = arith.constant 0 : i32
    %c0_i32_0 = arith.constant 0 : i32
    %c0_i32_1 = arith.constant 0 : i32
    return %c0_i32, %c0_i32_0 : i32, i32
  }
  func.func @transform_8(%arg0: i32) -> (i32, i32) {
    %c0_i32 = arith.constant 0 : i32
    %c0_i32_0 = arith.constant 0 : i32
    %c0_i32_1 = arith.constant 0 : i32
    return %c0_i32, %c0_i32_0 : i32, i32
  }
  func.func @transform_9(%arg0: i32) -> (i32, i32) {
    %c0_i32 = arith.constant 0 : i32
    %c0_i32_0 = arith.constant 0 : i32
    %c0_i32_1 = arith.constant 0 : i32
    return %c0_i32, %c0_i32_0 : i32, i32
  }
  func.func @transform_10(%arg0: i32) -> (i32, i32) {
    %c0_i32 = arith.constant 0 : i32
    %c0_i32_0 = arith.constant 0 : i32
    %c0_i32_1 = arith.constant 0 : i32
    return %c0_i32, %c0_i32_0 : i32, i32
  }
  func.func @transform_11(%arg0: i32) -> (i32, i32) {
    %c0_i32 = arith.constant 0 : i32
    %c0_i32_0 = arith.constant 0 : i32
    %c0_i32_1 = arith.constant 0 : i32
    return %c0_i32, %c0_i32_0 : i32, i32
  }
  func.func @transform_12(%arg0: i32) -> (i32, i32) {
    %c0_i32 = arith.constant 0 : i32
    %c0_i32_0 = arith.constant 0 : i32
    %c0_i32_1 = arith.constant 0 : i32
    return %c0_i32, %c0_i32_0 : i32, i32
  }
  func.func @transform_13(%arg0: i32) -> (i32, i32) {
    %c0_i32 = arith.constant 0 : i32
    %c0_i32_0 = arith.constant 0 : i32
    %c0_i32_1 = arith.constant 0 : i32
    return %c0_i32, %c0_i32_0 : i32, i32
  }
  func.func @transform_14(%arg0: i32) -> (i32, i32, i32) {
    %c0_i32 = arith.constant 0 : i32
    %c0_i32_0 = arith.constant 0 : i32
    %c0_i32_1 = arith.constant 0 : i32
    return %arg0, %c0_i32, %c0_i32_0 : i32, i32, i32
  }
}

</mosaic_0001>

<llo_original>
// kernel: mul.134
$region0: #{mul.134}
  #allocation0 [shape = 's32[1]{0}', space=sflag, size = 0x4, scoped, tag = 'scoped memory for mul.134']
  %s0 = inlined_call_operand.vmem [shape: f32[128,64], index: 0, kind: input, shape index: {}]
  %s1 = inlined_call_operand.vmem [shape: f32[128,64], index: 1, kind: input, shape index: {}]
  %s2 = inlined_call_operand.vmem [shape: f32[128,64], index: 2, kind: output, shape index: {}]
  %v3 = vld [vmem:[%s0] sm:$0xff]
  %v4 = vld [vmem:[%s1] sm:$0xff]
  %5 = xla_tuple %v3, %v4
  %6 = xla_tuple %5
  %v7 = vmul.f32 %v3, %v4
  %8 = xla_tuple %v7
  %9 = vst [vmem:[%s2] sm:$0xff] %v7
  %s10 = scalar_lea.vmem %s0, 8
  %v11 = vld [vmem:[%s10] sm:$0xff]
  %s12 = scalar_lea.vmem %s1, 8
  %v13 = vld [vmem:[%s12] sm:$0xff]
  %14 = xla_tuple %v11, %v13
  %15 = xla_tuple %14
  %v16 = vmul.f32 %v11, %v13
  %17 = xla_tuple %v16
  %s18 = scalar_lea.vmem %s2, 8
  %19 = vst [vmem:[%s18] sm:$0xff] %v16
  %s20 = scalar_lea.vmem %s0, 16
  %v21 = vld [vmem:[%s20] sm:$0xff]
  %s22 = scalar_lea.vmem %s1, 16
  %v23 = vld [vmem:[%s22] sm:$0xff]
  %24 = xla_tuple %v21, %v23
  %25 = xla_tuple %24
  %v26 = vmul.f32 %v21, %v23
  %27 = xla_tuple %v26
  %s28 = scalar_lea.vmem %s2, 16
  %29 = vst [vmem:[%s28] sm:$0xff] %v26
  %s30 = scalar_lea.vmem %s0, 24
  %v31 = vld [vmem:[%s30] sm:$0xff]
  %s32 = scalar_lea.vmem %s1, 24
  %v33 = vld [vmem:[%s32] sm:$0xff]
  %34 = xla_tuple %v31, %v33
  %35 = xla_tuple %34
  %v36 = vmul.f32 %v31, %v33
  %37 = xla_tuple %v36
  %s38 = scalar_lea.vmem %s2, 24
  %39 = vst [vmem:[%s38] sm:$0xff] %v36
  %s40 = scalar_lea.vmem %s0, 32
  %v41 = vld [vmem:[%s40] sm:$0xff]
  %s42 = scalar_lea.vmem %s1, 32
  %v43 = vld [vmem:[%s42] sm:$0xff]
  %44 = xla_tuple %v41, %v43
  %45 = xla_tuple %44
  %v46 = vmul.f32 %v41, %v43
  %47 = xla_tuple %v46
  %s48 = scalar_lea.vmem %s2, 32
  %49 = vst [vmem:[%s48] sm:$0xff] %v46
  %s50 = scalar_lea.vmem %s0, 40
  %v51 = vld [vmem:[%s50] sm:$0xff]
  %s52 = scalar_lea.vmem %s1, 40
  %v53 = vld [vmem:[%s52] sm:$0xff]
  %54 = xla_tuple %v51, %v53
  %55 = xla_tuple %54
  %v56 = vmul.f32 %v51, %v53
  %57 = xla_tuple %v56
  %s58 = scalar_lea.vmem %s2, 40
  %59 = vst [vmem:[%s58] sm:$0xff] %v56
  %s60 = scalar_lea.vmem %s0, 48
  %v61 = vld [vmem:[%s60] sm:$0xff]
  %s62 = scalar_lea.vmem %s1, 48
  %v63 = vld [vmem:[%s62] sm:$0xff]
  %64 = xla_tuple %v61, %v63
  %65 = xla_tuple %64
  %v66 = vmul.f32 %v61, %v63
  %67 = xla_tuple %v66
  %s68 = scalar_lea.vmem %s2, 48
  %69 = vst [vmem:[%s68] sm:$0xff] %v66
  %s70 = scalar_lea.vmem %s0, 56
  %v71 = vld [vmem:[%s70] sm:$0xff]
  %s72 = scalar_lea.vmem %s1, 56
  %v73 = vld [vmem:[%s72] sm:$0xff]
  %74 = xla_tuple %v71, %v73
  %75 = xla_tuple %74
  %v76 = vmul.f32 %v71, %v73
  %77 = xla_tuple %v76
  %s78 = scalar_lea.vmem %s2, 56
  %79 = vst [vmem:[%s78] sm:$0xff] %v76

// kernel: gcn_hyper_attention_forward.1
$region0: #{gcn_hyper_attention_forward.1}
  #allocation0 [shape = 'u32[]', space=smem, size = 0x4, offset = 0x4, fixed_abs, tag = 'smem constant byte address 0x4 - core index']
  #allocation1 [shape = 'u32[144,128]{1,0:T(1,128)}', space=vmem, size = 0x12000, scoped, tag = 'internal scratch']
  %s0 = inlined_call_operand.vmem [shape: f32[1,32,8], index: 0, kind: input, shape index: {}]
  %s1 = inlined_call_operand.vmem [shape: f32[8,512], index: 1, kind: input, shape index: {}]
  %s2 = inlined_call_operand.vmem [shape: f32[96,32], index: 2, kind: input, shape index: {}]
  %s3 = inlined_call_operand.vmem [shape: f32[3,8,32], index: 3, kind: input, shape index: {}]
  %s4 = inlined_call_operand.vmem [shape: f32[32,512], index: 4, kind: input, shape index: {}]
  %s5 = inlined_call_operand.vmem [shape: f32[128,64], index: 5, kind: input, shape index: {}]
  %s6 = inlined_call_operand.vmem [shape: f32[128,64], index: 6, kind: input, shape index: {}]
  %s7 = inlined_call_operand.vmem [shape: f32[128,128], index: 7, kind: input, shape index: {}]
  %s8 = inlined_call_operand.vmem [shape: f32[64,32], index: 8, kind: input, shape index: {}]
  %s9 = inlined_call_operand.vmem [shape: f32[32,1024], index: 9, kind: input, shape index: {}]
  %s10 = inlined_call_operand.vmem [shape: f32[32,1024], index: 10, kind: input, shape index: {}]
  %s11 = inlined_call_operand.vmem [shape: f32[2,32], index: 11, kind: input, shape index: {}]
  %s12 = inlined_call_operand.vmem [shape: f32[1024,64], index: 12, kind: input, shape index: {}]
  %s13 = inlined_call_operand.vmem [shape: f32[64,128], index: 13, kind: input, shape index: {}]
  %s14 = inlined_call_operand.hbm [shape: f32[1,2,128], index: 14, kind: output, shape index: {}]
  %s15 = sld [smem:[#allocation0]]
  $region66: #{gcn_hyper_attention_forward.1} parent=0
    _
  %s17 = ssub.s32 1, %s15
  %s18 = scalar_select 0, %s17, %s15
  $region1: #{gcn_hyper_attention_forward.1} parent=0
    #allocation2 [shape = 'u8[1024]{0}', space=vmem, size = 0x400, scoped, tag = 'output window, operand 0, single buffered']
    #allocation3 [shape = 's32[1]{0}', space=sflag, size = 0x4, scoped, tag = 'scoped memory for gcn_hyper_attention_forward.1']
    %19 = vsyncpa [#allocation3], 0
    // Predicated region
    $region2: #{gcn_hyper_attention_forward.1} parent=1 // pred_check
      _
    $region3: #{gcn_hyper_attention_forward.1} parent=1 // pred_check_branch
      %21 = sbr.rel (0) target = $region5
    $region4: #{gcn_hyper_attention_forward.1} parent=1 // pred_region
      _
    $region5: #{gcn_hyper_attention_forward.1} parent=1 // pred_fallthru
      _
    // Predicated region
    $region6: #{gcn_hyper_attention_forward.1} parent=1 // pred_check
      _
    $region7: #{gcn_hyper_attention_forward.1} parent=1 // pred_check_branch
      %23 = sbr.rel (0) target = $region9
    $region8: #{gcn_hyper_attention_forward.1} parent=1 // pred_region
      _
    $region9: #{gcn_hyper_attention_forward.1} parent=1 // pred_fallthru
      _
    // Predicated region
    $region10: #{gcn_hyper_attention_forward.1} parent=1 // pred_check
      _
    $region11: #{gcn_hyper_attention_forward.1} parent=1 // pred_check_branch
      %25 = sbr.rel (0) target = $region13
    $region12: #{gcn_hyper_attention_forward.1} parent=1 // pred_region
      _
    $region13: #{gcn_hyper_attention_forward.1} parent=1 // pred_fallthru
      _
    // Predicated region
    $region14: #{gcn_hyper_attention_forward.1} parent=1 // pred_check
      _
    $region15: #{gcn_hyper_attention_forward.1} parent=1 // pred_check_branch
      %27 = sbr.rel (0) target = $region17
    $region16: #{gcn_hyper_attention_forward.1} parent=1 // pred_region
      _
    $region17: #{gcn_hyper_attention_forward.1} parent=1 // pred_fallthru
      _
    // Predicated region
    $region18: #{gcn_hyper_attention_forward.1} parent=1 // pred_check
      _
    $region19: #{gcn_hyper_attention_forward.1} parent=1 // pred_check_branch
      %29 = sbr.rel (0) target = $region21
    $region20: #{gcn_hyper_attention_forward.1} parent=1 // pred_region
      _
    $region21: #{gcn_hyper_attention_forward.1} parent=1 // pred_fallthru
      _
    // Predicated region
    $region22: #{gcn_hyper_attention_forward.1} parent=1 // pred_check
      _
    $region23: #{gcn_hyper_attention_forward.1} parent=1 // pred_check_branch
      %31 = sbr.rel (0) target = $region25
    $region24: #{gcn_hyper_attention_forward.1} parent=1 // pred_region
      _
    $region25: #{gcn_hyper_attention_forward.1} parent=1 // pred_fallthru
      _
    // Predicated region
    $region26: #{gcn_hyper_attention_forward.1} parent=1 // pred_check
      _
    $region27: #{gcn_hyper_attention_forward.1} parent=1 // pred_check_branch
      %33 = sbr.rel (0) target = $region29
    $region28: #{gcn_hyper_attention_forward.1} parent=1 // pred_region
      _
    $region29: #{gcn_hyper_attention_forward.1} parent=1 // pred_fallthru
      _
    // Predicated region
    $region30: #{gcn_hyper_attention_forward.1} parent=1 // pred_check
      _
    $region31: #{gcn_hyper_attention_forward.1} parent=1 // pred_check_branch
      %35 = sbr.rel (0) target = $region33
    $region32: #{gcn_hyper_attention_forward.1} parent=1 // pred_region
      _
    $region33: #{gcn_hyper_attention_forward.1} parent=1 // pred_fallthru
      _
    // Predicated region
    $region34: #{gcn_hyper_attention_forward.1} parent=1 // pred_check
      _
    $region35: #{gcn_hyper_attention_forward.1} parent=1 // pred_check_branch
      %37 = sbr.rel (0) target = $region37
    $region36: #{gcn_hyper_attention_forward.1} parent=1 // pred_region
      _
    $region37: #{gcn_hyper_attention_forward.1} parent=1 // pred_fallthru
      _
    // Predicated region
    $region38: #{gcn_hyper_attention_forward.1} parent=1 // pred_check
      _
    $region39: #{gcn_hyper_attention_forward.1} parent=1 // pred_check_branch
      %39 = sbr.rel (0) target = $region41
    $region40: #{gcn_hyper_attention_forward.1} parent=1 // pred_region
      _
    $region41: #{gcn_hyper_attention_forward.1} parent=1 // pred_fallthru
      _
    // Predicated region
    $region42: #{gcn_hyper_attention_forward.1} parent=1 // pred_check
      _
    $region43: #{gcn_hyper_attention_forward.1} parent=1 // pred_check_branch
      %41 = sbr.rel (0) target = $region45
    $region44: #{gcn_hyper_attention_forward.1} parent=1 // pred_region
      _
    $region45: #{gcn_hyper_attention_forward.1} parent=1 // pred_fallthru
      _
    // Predicated region
    $region46: #{gcn_hyper_attention_forward.1} parent=1 // pred_check
      _
    $region47: #{gcn_hyper_attention_forward.1} parent=1 // pred_check_branch
      %43 = sbr.rel (0) target = $region49
    $region48: #{gcn_hyper_attention_forward.1} parent=1 // pred_region
      _
    $region49: #{gcn_hyper_attention_forward.1} parent=1 // pred_fallthru
      _
    // Predicated region
    $region50: #{gcn_hyper_attention_forward.1} parent=1 // pred_check
      _
    $region51: #{gcn_hyper_attention_forward.1} parent=1 // pred_check_branch
      %45 = sbr.rel (0) target = $region53
    $region52: #{gcn_hyper_attention_forward.1} parent=1 // pred_region
      _
    $region53: #{gcn_hyper_attention_forward.1} parent=1 // pred_fallthru
      _
    // Predicated region
    $region54: #{gcn_hyper_attention_forward.1} parent=1 // pred_check
      _
    $region55: #{gcn_hyper_attention_forward.1} parent=1 // pred_check_branch
      %47 = sbr.rel (0) target = $region57
    $region56: #{gcn_hyper_attention_forward.1} parent=1 // pred_region
      _
    $region57: #{gcn_hyper_attention_forward.1} parent=1 // pred_fallthru
      _
    %v48 = vld [vmem:[%s0] sm:$0xff]
    %v49 = vld [vmem:[%s0 + $0x8] sm:$0xff]
    %v50 = vld [vmem:[%s0 + $0x10] sm:$0xff]
    %v51 = vld [vmem:[%s0 + $0x18] sm:$0xff]
    %v52 = vld [vmem:[%s1] ss:$0 sm:$0xff]
    %v53 = vmul.f32 %v48, %v52
    %v54 = vmul.f32 %v49, %v52
    %v55 = vmul.f32 %v50, %v52
    %v56 = vmul.f32 %v51, %v52
    %v57 = vld [vmem:[%s1 + $0x1] ss:$0 sm:$0xff]
    %v58 = vadd.f32 %v53, %v57
    %v59 = vadd.f32 %v54, %v57
    %v60 = vadd.f32 %v55, %v57
    %v61 = vadd.f32 %v56, %v57
    %v62 = vld [vmem:[%s2] sm:$0xff]
    %v63 = vld [vmem:[%s2 + $0x8] sm:$0xff]
    %v64 = vld [vmem:[%s2 + $0x10] sm:$0xff]
    %v65 = vld [vmem:[%s2 + $0x18] sm:$0xff]
    %v66 = vld [vmem:[%s2 + $0x20] sm:$0xff]
    %v67 = vld [vmem:[%s2 + $0x28] sm:$0xff]
    %v68 = vld [vmem:[%s2 + $0x30] sm:$0xff]
    %v69 = vld [vmem:[%s2 + $0x38] sm:$0xff]
    %v70 = vld [vmem:[%s2 + $0x40] sm:$0xff]
    %v71 = vld [vmem:[%s2 + $0x48] sm:$0xff]
    %v72 = vld [vmem:[%s2 + $0x50] sm:$0xff]
    %v73 = vld [vmem:[%s2 + $0x58] sm:$0xff]
    %vm74 = vcmask 261120
    %v76 = vsel %vm74, %v62, 0
    %v79 = vsel %vm74, %v63, 0
    %v82 = vsel %vm74, %v64, 0
    %v85 = vsel %vm74, %v65, 0
    %v88 = vsel %vm74, %v66, 0
    %v91 = vsel %vm74, %v67, 0
    %v94 = vsel %vm74, %v68, 0
    %v97 = vsel %vm74, %v69, 0
    %v100 = vsel %vm74, %v70, 0
    %v103 = vsel %vm74, %v71, 0
    %v106 = vsel %vm74, %v72, 0
    %v109 = vsel %vm74, %v73, 0
    %111 = vmatprep.subr.mxu0 0.0
    %112 = vmatpush1.msra.mxu0 0.0
    %113 = vmatprep.subr.mxu0 0.0
    %114 = vmatpush1.msra.mxu0 0.0
    %115 = vmatprep.subr.mxu0 0.0
    %116 = vmatpush1.msra.mxu0 0.0
    %117 = vmatprep.subr.mxu0 0.0
    %118 = vmatpush1.msra.mxu0 0.0
    %119 = vmatprep.subr.mxu0 0.0
    %120 = vmatpush1.msra.mxu0 0.0
    %121 = vmatprep.subr.mxu0 0.0
    %122 = vmatpush1.msra.mxu0 0.0
    %123 = vmatprep.subr.mxu0 0.0
    %124 = vmatpush1.msra.mxu0 0.0
    %125 = vmatprep.subr.mxu0 0.0
    %126 = vmatpush1.msra.mxu0 0.0
    %127 = vmatprep.subr.mxu0 0.0
    %128 = vmatpush1.msra.mxu0 0.0
    %129 = vmatprep.subr.mxu0 0.0
    %130 = vmatpush1.msra.mxu0 0.0
    %131 = vmatprep.subr.mxu0 0.0
    %132 = vmatpush1.msra.mxu0 0.0
    %133 = vmatprep.subr.mxu0 0.0
    %134 = vmatpush1.msra.mxu0 0.0
    %135 = vmatprep.subr.mxu0 0.0
    %136 = vmatpush1.msra.mxu0 %v61
    %137 = vmatprep.subr.mxu0 0.0
    %138 = vmatpush1.msra.mxu0 %v60
    %139 = vmatprep.subr.mxu0 0.0
    %140 = vmatpush1.msra.mxu0 %v59
    %141 = vmatprep.subr.mxu0 0.0
    %142 = vmatpush1.msra.mxu0 %v58
    %143 = vmatprep.subr.mxu0 0.0
    %144 = vmatpush2.msra.mxu0 0.0
    %145 = vmatprep.subr.mxu0 0.0
    %146 = vmatpush2.msra.mxu0 0.0
    %147 = vmatprep.subr.mxu0 0.0
    %148 = vmatpush2.msra.mxu0 0.0
    %149 = vmatprep.subr.mxu0 0.0
    %150 = vmatpush2.msra.mxu0 0.0
    %151 = vmatprep.subr.mxu0 0.0
    %152 = vmatpush2.msra.mxu0 0.0
    %153 = vmatprep.subr.mxu0 0.0
    %154 = vmatpush2.msra.mxu0 0.0
    %155 = vmatprep.subr.mxu0 0.0
    %156 = vmatpush2.msra.mxu0 0.0
    %157 = vmatprep.subr.mxu0 0.0
    %158 = vmatpush2.msra.mxu0 0.0
    %159 = vmatprep.subr.mxu0 0.0
    %160 = vmatpush2.msra.mxu0 0.0
    %161 = vmatprep.subr.mxu0 0.0
    %162 = vmatpush2.msra.mxu0 0.0
    %163 = vmatprep.subr.mxu0 0.0
    %164 = vmatpush2.msra.mxu0 0.0
    %165 = vmatprep.subr.mxu0 0.0
    %166 = vmatpush2.msra.mxu0 0.0
    %167 = vmatprep.subr.mxu0 0.0
    %168 = vmatpush2.msra.mxu0 0.0
    %169 = vmatprep.subr.mxu0 0.0
    %170 = vmatpush2.msra.mxu0 0.0
    %171 = vmatprep.subr.mxu0 0.0
    %172 = vmatpush2.msra.mxu0 0.0
    %173 = vmatprep.subr.mxu0 0.0
    %174 = vmatpush2.msra.mxu0 0.0
    %175 = vmatprep.mubr.f32.mxu0 0.0
    %176 = vmatmul.mubr.f32.gmra.mxu0 %v76
    %v177 = vpop.f32.mrf.mxu0
    %v178 = vadd.f32 0.0, %v177
    %v179 = vpop.f32.mrf.mxu0
    %180 = vmatprep.mubr.f32.mxu0 0.0
    %181 = vmatmul.mubr.f32.gmra.mxu0 %v79
    %v182 = vpop.f32.mrf.mxu0
    %v183 = vadd.f32 0.0, %v182
    %v184 = vpop.f32.mrf.mxu0
    %185 = vmatprep.mubr.f32.mxu0 0.0
    %186 = vmatmul.mubr.f32.gmra.mxu0 %v82
    %v187 = vpop.f32.mrf.mxu0
    %v188 = vadd.f32 0.0, %v187
    %v189 = vpop.f32.mrf.mxu0
    %190 = vmatprep.mubr.f32.mxu0 0.0
    %191 = vmatmul.mubr.f32.gmra.mxu0 %v85
    %v192 = vpop.f32.mrf.mxu0
    %v193 = vadd.f32 0.0, %v192
    %v194 = vpop.f32.mrf.mxu0
    %195 = vmatprep.mubr.f32.mxu0 0.0
    %196 = vmatmul.mubr.f32.gmra.mxu0 %v88
    %v197 = vpop.f32.mrf.mxu0
    %v198 = vadd.f32 0.0, %v197
    %v199 = vpop.f32.mrf.mxu0
    %200 = vmatprep.mubr.f32.mxu0 0.0
    %201 = vmatmul.mubr.f32.gmra.mxu0 %v91
    %v202 = vpop.f32.mrf.mxu0
    %v203 = vadd.f32 0.0, %v202
    %v204 = vpop.f32.mrf.mxu0
    %205 = vmatprep.mubr.f32.mxu0 0.0
    %206 = vmatmul.mubr.f32.gmra.mxu0 %v94
    %v207 = vpop.f32.mrf.mxu0
    %v208 = vadd.f32 0.0, %v207
    %v209 = vpop.f32.mrf.mxu0
    %210 = vmatprep.mubr.f32.mxu0 0.0
    %211 = vmatmul.mubr.f32.gmra.mxu0 %v97
    %v212 = vpop.f32.mrf.mxu0
    %v213 = vadd.f32 0.0, %v212
    %v214 = vpop.f32.mrf.mxu0
    %215 = vmatprep.mubr.f32.mxu0 0.0
    %216 = vmatmul.mubr.f32.gmra.mxu0 %v100
    %v217 = vpop.f32.mrf.mxu0
    %v218 = vadd.f32 0.0, %v217
    %v219 = vpop.f32.mrf.mxu0
    %220 = vmatprep.mubr.f32.mxu0 0.0
    %221 = vmatmul.mubr.f32.gmra.mxu0 %v103
    %v222 = vpop.f32.mrf.mxu0
    %v223 = vadd.f32 0.0, %v222
    %v224 = vpop.f32.mrf.mxu0
    %225 = vmatprep.mubr.f32.mxu0 0.0
    %226 = vmatmul.mubr.f32.gmra.mxu0 %v106
    %v227 = vpop.f32.mrf.mxu0
    %v228 = vadd.f32 0.0, %v227
    %v229 = vpop.f32.mrf.mxu0
    %230 = vmatprep.mubr.f32.mxu0 0.0
    %231 = vmatmul.mubr.f32.gmra.mxu0 %v109
    %v232 = vpop.f32.mrf.mxu0
    %v233 = vadd.f32 0.0, %v232
    %v234 = vpop.f32.mrf.mxu0
    %235 = vdwg.mxu0
    %v236 = vld [vmem:[%s3] sm:$0xff]
    %s237 = scalar_lea.vmem %s3, 8
    %v238 = vld [vmem:[%s237] sm:$0xff]
    %vm239 = vcmask 64512
    %v241 = vsel %vm239, %v198, 0
    %v244 = vsel %vm239, %v203, 0
    %v247 = vsel %vm239, %v208, 0
    %v250 = vsel %vm239, %v213, 0
    %252 = vmatprep.subr.mxu0 0.0
    %253 = vmatpush1.msra.mxu0 0.0
    %254 = vmatprep.subr.mxu0 0.0
    %255 = vmatpush1.msra.mxu0 0.0
    %256 = vmatprep.subr.mxu0 0.0
    %257 = vmatpush1.msra.mxu0 0.0
    %258 = vmatprep.subr.mxu0 0.0
    %259 = vmatpush1.msra.mxu0 0.0
    %260 = vmatprep.subr.mxu0 0.0
    %261 = vmatpush1.msra.mxu0 0.0
    %262 = vmatprep.subr.mxu0 0.0
    %263 = vmatpush1.msra.mxu0 0.0
    %264 = vmatprep.subr.mxu0 0.0
    %265 = vmatpush1.msra.mxu0 0.0
    %266 = vmatprep.subr.mxu0 0.0
    %267 = vmatpush1.msra.mxu0 0.0
    %268 = vmatprep.subr.mxu0 0.0
    %269 = vmatpush1.msra.mxu0 0.0
    %270 = vmatprep.subr.mxu0 0.0
    %271 = vmatpush1.msra.mxu0 0.0
    %272 = vmatprep.subr.mxu0 0.0
    %273 = vmatpush1.msra.mxu0 0.0
    %274 = vmatprep.subr.mxu0 0.0
    %275 = vmatpush1.msra.mxu0 0.0
    %276 = vmatprep.subr.mxu0 0.0
    %277 = vmatpush1.msra.mxu0 0.0
    %278 = vmatprep.subr.mxu0 0.0
    %279 = vmatpush1.msra.mxu0 0.0
    %280 = vmatprep.subr.mxu0 0.0
    %281 = vmatpush1.msra.mxu0 0.0
    %282 = vmatprep.subr.mxu0 0.0
    %283 = vmatpush1.msra.mxu0 %v238
    %284 = vmatprep.subr.mxu0 0.0
    %285 = vmatpush2.msra.mxu0 0.0
    %286 = vmatprep.subr.mxu0 0.0
    %287 = vmatpush2.msra.mxu0 0.0
    %288 = vmatprep.subr.mxu0 0.0
    %289 = vmatpush2.msra.mxu0 0.0
    %290 = vmatprep.subr.mxu0 0.0
    %291 = vmatpush2.msra.mxu0 0.0
    %292 = vmatprep.subr.mxu0 0.0
    %293 = vmatpush2.msra.mxu0 0.0
    %294 = vmatprep.subr.mxu0 0.0
    %295 = vmatpush2.msra.mxu0 0.0
    %296 = vmatprep.subr.mxu0 0.0
    %297 = vmatpush2.msra.mxu0 0.0
    %298 = vmatprep.subr.mxu0 0.0
    %299 = vmatpush2.msra.mxu0 0.0
    %300 = vmatprep.subr.mxu0 0.0
    %301 = vmatpush2.msra.mxu0 0.0
    %302 = vmatprep.subr.mxu0 0.0
    %303 = vmatpush2.msra.mxu0 0.0
    %304 = vmatprep.subr.mxu0 0.0
    %305 = vmatpush2.msra.mxu0 0.0
    %306 = vmatprep.subr.mxu0 0.0
    %307 = vmatpush2.msra.mxu0 0.0
    %308 = vmatprep.subr.mxu0 0.0
    %309 = vmatpush2.msra.mxu0 0.0
    %310 = vmatprep.subr.mxu0 0.0
    %311 = vmatpush2.msra.mxu0 0.0
    %312 = vmatprep.subr.mxu0 0.0
    %313 = vmatpush2.msra.mxu0 0.0
    %314 = vmatprep.subr.mxu0 0.0
    %315 = vmatpush2.msra.mxu0 0.0
    %316 = vmatprep.mubr.f32.mxu0 0.0
    %317 = vmatmul.mubr.f32.gmra.mxu0 %v241
    %v318 = vpop.f32.mrf.mxu0
    %v319 = vadd.f32 0.0, %v318
    %v320 = vpop.f32.mrf.mxu0
    %321 = vmatprep.mubr.f32.mxu0 0.0
    %322 = vmatmul.mubr.f32.gmra.mxu0 %v244
    %v323 = vpop.f32.mrf.mxu0
    %v324 = vadd.f32 0.0, %v323
    %v325 = vpop.f32.mrf.mxu0
    %326 = vmatprep.mubr.f32.mxu0 0.0
    %327 = vmatmul.mubr.f32.gmra.mxu0 %v247
    %v328 = vpop.f32.mrf.mxu0
    %v329 = vadd.f32 0.0, %v328
    %v330 = vpop.f32.mrf.mxu0
    %331 = vmatprep.mubr.f32.mxu0 0.0
    %332 = vmatmul.mubr.f32.gmra.mxu0 %v250
    %v333 = vpop.f32.mrf.mxu0
    %v334 = vadd.f32 0.0, %v333
    %v335 = vpop.f32.mrf.mxu0
    %336 = vdwg.mxu0
    %v338 = vsel %vm239, %v178, 0
    %v341 = vsel %vm239, %v183, 0
    %v344 = vsel %vm239, %v188, 0
    %v347 = vsel %vm239, %v193, 0
    %349 = vmatprep.subr.mxu0 0.0
    %350 = vmatpush1.msra.mxu0 0.0
    %351 = vmatprep.subr.mxu0 0.0
    %352 = vmatpush1.msra.mxu0 0.0
    %353 = vmatprep.subr.mxu0 0.0
    %354 = vmatpush1.msra.mxu0 0.0
    %355 = vmatprep.subr.mxu0 0.0
    %356 = vmatpush1.msra.mxu0 0.0
    %357 = vmatprep.subr.mxu0 0.0
    %358 = vmatpush1.msra.mxu0 0.0
    %359 = vmatprep.subr.mxu0 0.0
    %360 = vmatpush1.msra.mxu0 0.0
    %361 = vmatprep.subr.mxu0 0.0
    %362 = vmatpush1.msra.mxu0 0.0
    %363 = vmatprep.subr.mxu0 0.0
    %364 = vmatpush1.msra.mxu0 0.0
    %365 = vmatprep.subr.mxu0 0.0
    %366 = vmatpush1.msra.mxu0 0.0
    %367 = vmatprep.subr.mxu0 0.0
    %368 = vmatpush1.msra.mxu0 0.0
    %369 = vmatprep.subr.mxu0 0.0
    %370 = vmatpush1.msra.mxu0 0.0
    %371 = vmatprep.subr.mxu0 0.0
    %372 = vmatpush1.msra.mxu0 0.0
    %373 = vmatprep.subr.mxu0 0.0
    %374 = vmatpush1.msra.mxu0 0.0
    %375 = vmatprep.subr.mxu0 0.0
    %376 = vmatpush1.msra.mxu0 0.0
    %377 = vmatprep.subr.mxu0 0.0
    %378 = vmatpush1.msra.mxu0 0.0
    %379 = vmatprep.subr.mxu0 0.0
    %380 = vmatpush1.msra.mxu0 %v236
    %381 = vmatprep.subr.mxu0 0.0
    %382 = vmatpush2.msra.mxu0 0.0
    %383 = vmatprep.subr.mxu0 0.0
    %384 = vmatpush2.msra.mxu0 0.0
    %385 = vmatprep.subr.mxu0 0.0
    %386 = vmatpush2.msra.mxu0 0.0
    %387 = vmatprep.subr.mxu0 0.0
    %388 = vmatpush2.msra.mxu0 0.0
    %389 = vmatprep.subr.mxu0 0.0
    %390 = vmatpush2.msra.mxu0 0.0
    %391 = vmatprep.subr.mxu0 0.0
    %392 = vmatpush2.msra.mxu0 0.0
    %393 = vmatprep.subr.mxu0 0.0
    %394 = vmatpush2.msra.mxu0 0.0
    %395 = vmatprep.subr.mxu0 0.0
    %396 = vmatpush2.msra.mxu0 0.0
    %397 = vmatprep.subr.mxu0 0.0
    %398 = vmatpush2.msra.mxu0 0.0
    %399 = vmatprep.subr.mxu0 0.0
    %400 = vmatpush2.msra.mxu0 0.0
    %401 = vmatprep.subr.mxu0 0.0
    %402 = vmatpush2.msra.mxu0 0.0
    %403 = vmatprep.subr.mxu0 0.0
    %404 = vmatpush2.msra.mxu0 0.0
    %405 = vmatprep.subr.mxu0 0.0
    %406 = vmatpush2.msra.mxu0 0.0
    %407 = vmatprep.subr.mxu0 0.0
    %408 = vmatpush2.msra.mxu0 0.0
    %409 = vmatprep.subr.mxu0 0.0
    %410 = vmatpush2.msra.mxu0 0.0
    %411 = vmatprep.subr.mxu0 0.0
    %412 = vmatpush2.msra.mxu0 0.0
    %413 = vmatprep.mubr.f32.mxu0 0.0
    %414 = vmatmul.mubr.f32.gmra.mxu0 %v338
    %v415 = vpop.f32.mrf.mxu0
    %v416 = vadd.f32 %v319, %v415
    %v417 = vpop.f32.mrf.mxu0
    %418 = vmatprep.mubr.f32.mxu0 0.0
    %419 = vmatmul.mubr.f32.gmra.mxu0 %v341
    %v420 = vpop.f32.mrf.mxu0
    %v421 = vadd.f32 %v324, %v420
    %v422 = vpop.f32.mrf.mxu0
    %423 = vmatprep.mubr.f32.mxu0 0.0
    %424 = vmatmul.mubr.f32.gmra.mxu0 %v344
    %v425 = vpop.f32.mrf.mxu0
    %v426 = vadd.f32 %v329, %v425
    %v427 = vpop.f32.mrf.mxu0
    %428 = vmatprep.mubr.f32.mxu0 0.0
    %429 = vmatmul.mubr.f32.gmra.mxu0 %v347
    %v430 = vpop.f32.mrf.mxu0
    %v431 = vadd.f32 %v334, %v430
    %v432 = vpop.f32.mrf.mxu0
    %433 = vdwg.mxu0
    %s434 = scalar_lea.vmem %s3, 16
    %v435 = vld [vmem:[%s434] sm:$0xff]
    %v437 = vsel %vm239, %v218, 0
    %v440 = vsel %vm239, %v223, 0
    %v443 = vsel %vm239, %v228, 0
    %v446 = vsel %vm239, %v233, 0
    %448 = vmatprep.subr.mxu0 0.0
    %449 = vmatpush1.msra.mxu0 0.0
    %450 = vmatprep.subr.mxu0 0.0
    %451 = vmatpush1.msra.mxu0 0.0
    %452 = vmatprep.subr.mxu0 0.0
    %453 = vmatpush1.msra.mxu0 0.0
    %454 = vmatprep.subr.mxu0 0.0
    %455 = vmatpush1.msra.mxu0 0.0
    %456 = vmatprep.subr.mxu0 0.0
    %457 = vmatpush1.msra.mxu0 0.0
    %458 = vmatprep.subr.mxu0 0.0
    %459 = vmatpush1.msra.mxu0 0.0
    %460 = vmatprep.subr.mxu0 0.0
    %461 = vmatpush1.msra.mxu0 0.0
    %462 = vmatprep.subr.mxu0 0.0
    %463 = vmatpush1.msra.mxu0 0.0
    %464 = vmatprep.subr.mxu0 0.0
    %465 = vmatpush1.msra.mxu0 0.0
    %466 = vmatprep.subr.mxu0 0.0
    %467 = vmatpush1.msra.mxu0 0.0
    %468 = vmatprep.subr.mxu0 0.0
    %469 = vmatpush1.msra.mxu0 0.0
    %470 = vmatprep.subr.mxu0 0.0
    %471 = vmatpush1.msra.mxu0 0.0
    %472 = vmatprep.subr.mxu0 0.0
    %473 = vmatpush1.msra.mxu0 0.0
    %474 = vmatprep.subr.mxu0 0.0
    %475 = vmatpush1.msra.mxu0 0.0
    %476 = vmatprep.subr.mxu0 0.0
    %477 = vmatpush1.msra.mxu0 0.0
    %478 = vmatprep.subr.mxu0 0.0
    %479 = vmatpush1.msra.mxu0 %v435
    %480 = vmatprep.subr.mxu0 0.0
    %481 = vmatpush2.msra.mxu0 0.0
    %482 = vmatprep.subr.mxu0 0.0
    %483 = vmatpush2.msra.mxu0 0.0
    %484 = vmatprep.subr.mxu0 0.0
    %485 = vmatpush2.msra.mxu0 0.0
    %486 = vmatprep.subr.mxu0 0.0
    %487 = vmatpush2.msra.mxu0 0.0
    %488 = vmatprep.subr.mxu0 0.0
    %489 = vmatpush2.msra.mxu0 0.0
    %490 = vmatprep.subr.mxu0 0.0
    %491 = vmatpush2.msra.mxu0 0.0
    %492 = vmatprep.subr.mxu0 0.0
    %493 = vmatpush2.msra.mxu0 0.0
    %494 = vmatprep.subr.mxu0 0.0
    %495 = vmatpush2.msra.mxu0 0.0
    %496 = vmatprep.subr.mxu0 0.0
    %497 = vmatpush2.msra.mxu0 0.0
    %498 = vmatprep.subr.mxu0 0.0
    %499 = vmatpush2.msra.mxu0 0.0
    %500 = vmatprep.subr.mxu0 0.0
    %501 = vmatpush2.msra.mxu0 0.0
    %502 = vmatprep.subr.mxu0 0.0
    %503 = vmatpush2.msra.mxu0 0.0
    %504 = vmatprep.subr.mxu0 0.0
    %505 = vmatpush2.msra.mxu0 0.0
    %506 = vmatprep.subr.mxu0 0.0
    %507 = vmatpush2.msra.mxu0 0.0
    %508 = vmatprep.subr.mxu0 0.0
    %509 = vmatpush2.msra.mxu0 0.0
    %510 = vmatprep.subr.mxu0 0.0
    %511 = vmatpush2.msra.mxu0 0.0
    %512 = vmatprep.mubr.f32.mxu0 0.0
    %513 = vmatmul.mubr.f32.gmra.mxu0 %v437
    %v514 = vpop.f32.mrf.mxu0
    %v515 = vadd.f32 0.0, %v514
    %v516 = vpop.f32.mrf.mxu0
    %517 = vmatprep.mubr.f32.mxu0 0.0
    %518 = vmatmul.mubr.f32.gmra.mxu0 %v440
    %v519 = vpop.f32.mrf.mxu0
    %v520 = vadd.f32 0.0, %v519
    %v521 = vpop.f32.mrf.mxu0
    %522 = vmatprep.mubr.f32.mxu0 0.0
    %523 = vmatmul.mubr.f32.gmra.mxu0 %v443
    %v524 = vpop.f32.mrf.mxu0
    %v525 = vadd.f32 0.0, %v524
    %v526 = vpop.f32.mrf.mxu0
    %527 = vmatprep.mubr.f32.mxu0 0.0
    %528 = vmatmul.mubr.f32.gmra.mxu0 %v446
    %v529 = vpop.f32.mrf.mxu0
    %v530 = vadd.f32 0.0, %v529
    %v531 = vpop.f32.mrf.mxu0
    %532 = vdwg.mxu0
    %v533 = vadd.f32 %v416, %v515
    %v534 = vadd.f32 %v421, %v520
    %v535 = vadd.f32 %v426, %v525
    %v536 = vadd.f32 %v431, %v530
    %v537 = vmax.f32 %v533, 0.0
    %v538 = vmax.f32 %v534, 0.0
    %v539 = vmax.f32 %v535, 0.0
    %v540 = vmax.f32 %v536, 0.0
    %v541 = vld [vmem:[%s4] sm:$0xff]
    %v542 = vld [vmem:[%s4 + $0x8] sm:$0xff]
    %v543 = vld [vmem:[%s4 + $0x10] sm:$0xff]
    %v544 = vld [vmem:[%s4 + $0x18] sm:$0xff]
    %v545 = vld [vmem:[%s4 + $0x20] sm:$0xff]
    %v546 = vld [vmem:[%s4 + $0x28] sm:$0xff]
    %v547 = vld [vmem:[%s4 + $0x30] sm:$0xff]
    %v548 = vld [vmem:[%s4 + $0x38] sm:$0xff]
    %v549 = vld [vmem:[%s4 + $0x40] sm:$0xff]
    %v550 = vld [vmem:[%s4 + $0x48] sm:$0xff]
    %v551 = vld [vmem:[%s4 + $0x50] sm:$0xff]
    %v552 = vld [vmem:[%s4 + $0x58] sm:$0xff]
    %v553 = vld [vmem:[%s4 + $0x60] sm:$0xff]
    %v554 = vld [vmem:[%s4 + $0x68] sm:$0xff]
    %v555 = vld [vmem:[%s4 + $0x70] sm:$0xff]
    %v556 = vld [vmem:[%s4 + $0x78] sm:$0xff]
    %s557 = scalar_lea.vmem %s1, 2
    %v558 = vld [vmem:[%s557] ss:$8 sm:$0xf]
    %v560 = vlaneseq
    %v561 = vshrl.u32 %v560, 7
    %v562 = vsub.s32 0, %v561
    %v563 = vrot.slane %v558, %v562
    %v564 = vlaneseq
    %v565 = vshrl.u32 %v564, 7
    %v566 = vsub.s32 1, %v565
    %v567 = vrot.slane %v558, %v566
    %v568 = vlaneseq
    %v569 = vshrl.u32 %v568, 7
    %v570 = vsub.s32 2, %v569
    %v571 = vrot.slane %v558, %v570
    %v572 = vlaneseq
    %v573 = vshrl.u32 %v572, 7
    %v574 = vsub.s32 3, %v573
    %v575 = vrot.slane %v558, %v574
    %v581 = vsel %vm74, %v537, 0
    %v584 = vsel %vm74, %v538, 0
    %v587 = vsel %vm74, %v539, 0
    %v590 = vsel %vm74, %v540, 0
    %592 = vmatprep.subr.mxu0 0.0
    %593 = vmatpush1.msra.mxu0 0.0
    %594 = vmatprep.subr.mxu0 0.0
    %595 = vmatpush1.msra.mxu0 0.0
    %596 = vmatprep.subr.mxu0 0.0
    %597 = vmatpush1.msra.mxu0 0.0
    %598 = vmatprep.subr.mxu0 0.0
    %599 = vmatpush1.msra.mxu0 0.0
    %600 = vmatprep.subr.mxu0 0.0
    %601 = vmatpush1.msra.mxu0 0.0
    %602 = vmatprep.subr.mxu0 0.0
    %603 = vmatpush1.msra.mxu0 0.0
    %604 = vmatprep.subr.mxu0 0.0
    %605 = vmatpush1.msra.mxu0 0.0
    %606 = vmatprep.subr.mxu0 0.0
    %607 = vmatpush1.msra.mxu0 0.0
    %608 = vmatprep.subr.mxu0 0.0
    %609 = vmatpush1.msra.mxu0 0.0
    %610 = vmatprep.subr.mxu0 0.0
    %611 = vmatpush1.msra.mxu0 0.0
    %612 = vmatprep.subr.mxu0 0.0
    %613 = vmatpush1.msra.mxu0 0.0
    %614 = vmatprep.subr.mxu0 0.0
    %615 = vmatpush1.msra.mxu0 0.0
    %616 = vmatprep.subr.mxu0 %v554
    %617 = vmatpush1.msra.mxu0 %v553
    %618 = vmatprep.subr.mxu0 %v550
    %619 = vmatpush1.msra.mxu0 %v549
    %620 = vmatprep.subr.mxu0 %v546
    %621 = vmatpush1.msra.mxu0 %v545
    %622 = vmatprep.subr.mxu0 %v542
    %623 = vmatpush1.msra.mxu0 %v541
    %624 = vmatprep.subr.mxu0 0.0
    %625 = vmatpush2.msra.mxu0 0.0
    %626 = vmatprep.subr.mxu0 0.0
    %627 = vmatpush2.msra.mxu0 0.0
    %628 = vmatprep.subr.mxu0 0.0
    %629 = vmatpush2.msra.mxu0 0.0
    %630 = vmatprep.subr.mxu0 0.0
    %631 = vmatpush2.msra.mxu0 0.0
    %632 = vmatprep.subr.mxu0 0.0
    %633 = vmatpush2.msra.mxu0 0.0
    %634 = vmatprep.subr.mxu0 0.0
    %635 = vmatpush2.msra.mxu0 0.0
    %636 = vmatprep.subr.mxu0 0.0
    %637 = vmatpush2.msra.mxu0 0.0
    %638 = vmatprep.subr.mxu0 0.0
    %639 = vmatpush2.msra.mxu0 0.0
    %640 = vmatprep.subr.mxu0 0.0
    %641 = vmatpush2.msra.mxu0 0.0
    %642 = vmatprep.subr.mxu0 0.0
    %643 = vmatpush2.msra.mxu0 0.0
    %644 = vmatprep.subr.mxu0 0.0
    %645 = vmatpush2.msra.mxu0 0.0
    %646 = vmatprep.subr.mxu0 0.0
    %647 = vmatpush2.msra.mxu0 0.0
    %648 = vmatprep.subr.mxu0 0.0
    %649 = vmatpush2.msra.mxu0 0.0
    %650 = vmatprep.subr.mxu0 0.0
    %651 = vmatpush2.msra.mxu0 0.0
    %652 = vmatprep.subr.mxu0 0.0
    %653 = vmatpush2.msra.mxu0 0.0
    %654 = vmatprep.subr.mxu0 0.0
    %655 = vmatpush2.msra.mxu0 0.0
    %656 = vmatprep.mubr.f32.mxu0 0.0
    %657 = vmatmul.mubr.f32.gmra.mxu0 %v581
    %v658 = vpop.f32.mrf.mxu0
    %v659 = vadd.f32 %v563, %v658
    %v660 = vpop.f32.mrf.mxu0
    %v661 = vadd.f32 %v567, %v660
    %662 = vmatprep.mubr.f32.mxu0 0.0
    %663 = vmatmul.mubr.f32.gmra.mxu0 %v584
    %v664 = vpop.f32.mrf.mxu0
    %v665 = vadd.f32 %v563, %v664
    %v666 = vpop.f32.mrf.mxu0
    %v667 = vadd.f32 %v567, %v666
    %668 = vmatprep.mubr.f32.mxu0 0.0
    %669 = vmatmul.mubr.f32.gmra.mxu0 %v587
    %v670 = vpop.f32.mrf.mxu0
    %v671 = vadd.f32 %v563, %v670
    %v672 = vpop.f32.mrf.mxu0
    %v673 = vadd.f32 %v567, %v672
    %674 = vmatprep.mubr.f32.mxu0 0.0
    %675 = vmatmul.mubr.f32.gmra.mxu0 %v590
    %v676 = vpop.f32.mrf.mxu0
    %v677 = vadd.f32 %v563, %v676
    %v678 = vpop.f32.mrf.mxu0
    %v679 = vadd.f32 %v567, %v678
    %680 = vdwg.mxu0
    %681 = vmatprep.subr.mxu0 0.0
    %682 = vmatpush1.msra.mxu0 0.0
    %683 = vmatprep.subr.mxu0 0.0
    %684 = vmatpush1.msra.mxu0 0.0
    %685 = vmatprep.subr.mxu0 0.0
    %686 = vmatpush1.msra.mxu0 0.0
    %687 = vmatprep.subr.mxu0 0.0
    %688 = vmatpush1.msra.mxu0 0.0
    %689 = vmatprep.subr.mxu0 0.0
    %690 = vmatpush1.msra.mxu0 0.0
    %691 = vmatprep.subr.mxu0 0.0
    %692 = vmatpush1.msra.mxu0 0.0
    %693 = vmatprep.subr.mxu0 0.0
    %694 = vmatpush1.msra.mxu0 0.0
    %695 = vmatprep.subr.mxu0 0.0
    %696 = vmatpush1.msra.mxu0 0.0
    %697 = vmatprep.subr.mxu0 0.0
    %698 = vmatpush1.msra.mxu0 0.0
    %699 = vmatprep.subr.mxu0 0.0
    %700 = vmatpush1.msra.mxu0 0.0
    %701 = vmatprep.subr.mxu0 0.0
    %702 = vmatpush1.msra.mxu0 0.0
    %703 = vmatprep.subr.mxu0 0.0
    %704 = vmatpush1.msra.mxu0 0.0
    %705 = vmatprep.subr.mxu0 %v556
    %706 = vmatpush1.msra.mxu0 %v555
    %707 = vmatprep.subr.mxu0 %v552
    %708 = vmatpush1.msra.mxu0 %v551
    %709 = vmatprep.subr.mxu0 %v548
    %710 = vmatpush1.msra.mxu0 %v547
    %711 = vmatprep.subr.mxu0 %v544
    %712 = vmatpush1.msra.mxu0 %v543
    %713 = vmatprep.subr.mxu0 0.0
    %714 = vmatpush2.msra.mxu0 0.0
    %715 = vmatprep.subr.mxu0 0.0
    %716 = vmatpush2.msra.mxu0 0.0
    %717 = vmatprep.subr.mxu0 0.0
    %718 = vmatpush2.msra.mxu0 0.0
    %719 = vmatprep.subr.mxu0 0.0
    %720 = vmatpush2.msra.mxu0 0.0
    %721 = vmatprep.subr.mxu0 0.0
    %722 = vmatpush2.msra.mxu0 0.0
    %723 = vmatprep.subr.mxu0 0.0
    %724 = vmatpush2.msra.mxu0 0.0
    %725 = vmatprep.subr.mxu0 0.0
    %726 = vmatpush2.msra.mxu0 0.0
    %727 = vmatprep.subr.mxu0 0.0
    %728 = vmatpush2.msra.mxu0 0.0
    %729 = vmatprep.subr.mxu0 0.0
    %730 = vmatpush2.msra.mxu0 0.0
    %731 = vmatprep.subr.mxu0 0.0
    %732 = vmatpush2.msra.mxu0 0.0
    %733 = vmatprep.subr.mxu0 0.0
    %734 = vmatpush2.msra.mxu0 0.0
    %735 = vmatprep.subr.mxu0 0.0
    %736 = vmatpush2.msra.mxu0 0.0
    %737 = vmatprep.subr.mxu0 0.0
    %738 = vmatpush2.msra.mxu0 0.0
    %739 = vmatprep.subr.mxu0 0.0
    %740 = vmatpush2.msra.mxu0 0.0
    %741 = vmatprep.subr.mxu0 0.0
    %742 = vmatpush2.msra.mxu0 0.0
    %743 = vmatprep.subr.mxu0 0.0
    %744 = vmatpush2.msra.mxu0 0.0
    %745 = vmatprep.mubr.f32.mxu0 0.0
    %746 = vmatmul.mubr.f32.gmra.mxu0 %v581
    %v747 = vpop.f32.mrf.mxu0
    %v748 = vadd.f32 %v571, %v747
    %v749 = vpop.f32.mrf.mxu0
    %v750 = vadd.f32 %v575, %v749
    %751 = vmatprep.mubr.f32.mxu0 0.0
    %752 = vmatmul.mubr.f32.gmra.mxu0 %v584
    %v753 = vpop.f32.mrf.mxu0
    %v754 = vadd.f32 %v571, %v753
    %v755 = vpop.f32.mrf.mxu0
    %v756 = vadd.f32 %v575, %v755
    %757 = vmatprep.mubr.f32.mxu0 0.0
    %758 = vmatmul.mubr.f32.gmra.mxu0 %v587
    %v759 = vpop.f32.mrf.mxu0
    %v760 = vadd.f32 %v571, %v759
    %v761 = vpop.f32.mrf.mxu0
    %v762 = vadd.f32 %v575, %v761
    %763 = vmatprep.mubr.f32.mxu0 0.0
    %764 = vmatmul.mubr.f32.gmra.mxu0 %v590
    %v765 = vpop.f32.mrf.mxu0
    %v766 = vadd.f32 %v571, %v765
    %v767 = vpop.f32.mrf.mxu0
    %v768 = vadd.f32 %v575, %v767
    %769 = vdwg.mxu0
    %v770 = vld [vmem:[%s6] sm:$0xff]
    %v771 = vld [vmem:[%s6 + $0x8] sm:$0xff]
    %v772 = vld [vmem:[%s6 + $0x10] sm:$0xff]
    %v773 = vld [vmem:[%s6 + $0x18] sm:$0xff]
    %v774 = vld [vmem:[%s6 + $0x20] sm:$0xff]
    %v775 = vld [vmem:[%s6 + $0x28] sm:$0xff]
    %v776 = vld [vmem:[%s6 + $0x30] sm:$0xff]
    %v777 = vld [vmem:[%s6 + $0x38] sm:$0xff]
    %v778 = vld [vmem:[%s6 + $0x40] sm:$0xff]
    %v779 = vld [vmem:[%s6 + $0x48] sm:$0xff]
    %v780 = vld [vmem:[%s6 + $0x50] sm:$0xff]
    %v781 = vld [vmem:[%s6 + $0x58] sm:$0xff]
    %v782 = vld [vmem:[%s6 + $0x60] sm:$0xff]
    %v783 = vld [vmem:[%s6 + $0x68] sm:$0xff]
    %v784 = vld [vmem:[%s6 + $0x70] sm:$0xff]
    %v785 = vld [vmem:[%s6 + $0x78] sm:$0xff]
    %v786 = vld [vmem:[%s5] sm:$0xff]
    %v787 = vld [vmem:[%s5 + $0x8] sm:$0xff]
    %v788 = vld [vmem:[%s5 + $0x10] sm:$0xff]
    %v789 = vld [vmem:[%s5 + $0x18] sm:$0xff]
    %v790 = vld [vmem:[%s5 + $0x20] sm:$0xff]
    %v791 = vld [vmem:[%s5 + $0x28] sm:$0xff]
    %v792 = vld [vmem:[%s5 + $0x30] sm:$0xff]
    %v793 = vld [vmem:[%s5 + $0x38] sm:$0xff]
    %v794 = vld [vmem:[%s5 + $0x40] sm:$0xff]
    %v795 = vld [vmem:[%s5 + $0x48] sm:$0xff]
    %v796 = vld [vmem:[%s5 + $0x50] sm:$0xff]
    %v797 = vld [vmem:[%s5 + $0x58] sm:$0xff]
    %v798 = vld [vmem:[%s5 + $0x60] sm:$0xff]
    %v799 = vld [vmem:[%s5 + $0x68] sm:$0xff]
    %v800 = vld [vmem:[%s5 + $0x70] sm:$0xff]
    %v801 = vld [vmem:[%s5 + $0x78] sm:$0xff]
    %v802 = vld [vmem:[%s7] sm:$0xff]
    %v803 = vld [vmem:[%s7 + $0x8] sm:$0xff]
    %v804 = vld [vmem:[%s7 + $0x10] sm:$0xff]
    %v805 = vld [vmem:[%s7 + $0x18] sm:$0xff]
    %v806 = vld [vmem:[%s7 + $0x20] sm:$0xff]
    %v807 = vld [vmem:[%s7 + $0x28] sm:$0xff]
    %v808 = vld [vmem:[%s7 + $0x30] sm:$0xff]
    %v809 = vld [vmem:[%s7 + $0x38] sm:$0xff]
    %v810 = vld [vmem:[%s7 + $0x40] sm:$0xff]
    %v811 = vld [vmem:[%s7 + $0x48] sm:$0xff]
    %v812 = vld [vmem:[%s7 + $0x50] sm:$0xff]
    %v813 = vld [vmem:[%s7 + $0x58] sm:$0xff]
    %v814 = vld [vmem:[%s7 + $0x60] sm:$0xff]
    %v815 = vld [vmem:[%s7 + $0x68] sm:$0xff]
    %v816 = vld [vmem:[%s7 + $0x70] sm:$0xff]
    %v817 = vld [vmem:[%s7 + $0x78] sm:$0xff]
    %v818 = vmax.f32 %v659, %v665
    %v819 = vrot.slane %v818, 4
    %v820 = vmax.f32 %v818, %v819
    %v821 = vrot.slane %v820, 2
    %v822 = vmax.f32 %v820, %v821
    %v823 = vrot.slane %v822, 1
    %v824 = vmax.f32 %v822, %v823
    %v825 = vsub.f32 %v659, %v824
    %v826 = vsub.f32 %v665, %v824
    %v827 = vmul.f32 %v825, 1.442695
    %v828 = vpow.pop %v827
    %v829 = vmul.f32 %v826, 1.442695
    %v830 = vpow.pop %v829
    %v831 = vadd.f32 %v828, %v830
    %v832 = vrot.slane %v831, 4
    %v833 = vadd.f32 %v831, %v832
    %v834 = vrot.slane %v833, 2
    %v835 = vadd.f32 %v833, %v834
    %v836 = vrot.slane %v835, 1
    %v837 = vadd.f32 %v835, %v836
    %v838 = vrcp.pop %v837
    %v839 = vmul.f32 %v828, %v838
    %v840 = vmul.f32 %v830, %v838
    %841 = vmatprep.subr.mxu0 0.0
    %842 = vmatpush1.msra.mxu0 %v817
    %843 = vmatprep.subr.mxu0 0.0
    %844 = vmatpush1.msra.mxu0 %v816
    %845 = vmatprep.subr.mxu0 0.0
    %846 = vmatpush1.msra.mxu0 %v815
    %847 = vmatprep.subr.mxu0 0.0
    %848 = vmatpush1.msra.mxu0 %v814
    %849 = vmatprep.subr.mxu0 0.0
    %850 = vmatpush1.msra.mxu0 %v813
    %851 = vmatprep.subr.mxu0 0.0
    %852 = vmatpush1.msra.mxu0 %v812
    %853 = vmatprep.subr.mxu0 0.0
    %854 = vmatpush1.msra.mxu0 %v811
    %855 = vmatprep.subr.mxu0 0.0
    %856 = vmatpush1.msra.mxu0 %v810
    %857 = vmatprep.subr.mxu0 0.0
    %858 = vmatpush1.msra.mxu0 %v809
    %859 = vmatprep.subr.mxu0 0.0
    %860 = vmatpush1.msra.mxu0 %v808
    %861 = vmatprep.subr.mxu0 0.0
    %862 = vmatpush1.msra.mxu0 %v807
    %863 = vmatprep.subr.mxu0 0.0
    %864 = vmatpush1.msra.mxu0 %v806
    %865 = vmatprep.subr.mxu0 0.0
    %866 = vmatpush1.msra.mxu0 %v805
    %867 = vmatprep.subr.mxu0 0.0
    %868 = vmatpush1.msra.mxu0 %v804
    %869 = vmatprep.subr.mxu0 0.0
    %870 = vmatpush1.msra.mxu0 %v803
    %871 = vmatprep.subr.mxu0 0.0
    %872 = vmatpush1.msra.mxu0 %v802
    %873 = vmatprep.subr.mxu0 0.0
    %874 = vmatpush2.msra.mxu0 0.0
    %875 = vmatprep.subr.mxu0 0.0
    %876 = vmatpush2.msra.mxu0 0.0
    %877 = vmatprep.subr.mxu0 0.0
    %878 = vmatpush2.msra.mxu0 0.0
    %879 = vmatprep.subr.mxu0 0.0
    %880 = vmatpush2.msra.mxu0 0.0
    %881 = vmatprep.subr.mxu0 0.0
    %882 = vmatpush2.msra.mxu0 0.0
    %883 = vmatprep.subr.mxu0 0.0
    %884 = vmatpush2.msra.mxu0 0.0
    %885 = vmatprep.subr.mxu0 0.0
    %886 = vmatpush2.msra.mxu0 0.0
    %887 = vmatprep.subr.mxu0 0.0
    %888 = vmatpush2.msra.mxu0 0.0
    %889 = vmatprep.subr.mxu0 0.0
    %890 = vmatpush2.msra.mxu0 0.0
    %891 = vmatprep.subr.mxu0 0.0
    %892 = vmatpush2.msra.mxu0 0.0
    %893 = vmatprep.subr.mxu0 0.0
    %894 = vmatpush2.msra.mxu0 0.0
    %895 = vmatprep.subr.mxu0 0.0
    %896 = vmatpush2.msra.mxu0 0.0
    %897 = vmatprep.subr.mxu0 0.0
    %898 = vmatpush2.msra.mxu0 0.0
    %899 = vmatprep.subr.mxu0 0.0
    %900 = vmatpush2.msra.mxu0 0.0
    %901 = vmatprep.subr.mxu0 0.0
    %902 = vmatpush2.msra.mxu0 0.0
    %903 = vmatprep.subr.mxu0 0.0
    %904 = vmatpush2.msra.mxu0 0.0
    %905 = vmatprep.mubr.f32.mxu0 0.0
    %906 = vmatmul.mubr.f32.gmra.mxu0 %v839
    %v907 = vpop.f32.mrf.mxu0
    %v908 = vadd.f32 1e-09, %v907
    %v909 = vpop.f32.mrf.mxu0
    %910 = vmatprep.mubr.f32.mxu0 0.0
    %911 = vmatmul.mubr.f32.gmra.mxu0 %v840
    %v912 = vpop.f32.mrf.mxu0
    %v913 = vadd.f32 1e-09, %v912
    %v914 = vpop.f32.mrf.mxu0
    %915 = vdwg.mxu0
    %v916 = vrcp.pop %v908
    %v917 = vmul.f32 %v839, %v916
    %v918 = vrcp.pop %v913
    %v919 = vmul.f32 %v840, %v918
    %v920 = vmul.f32 %v770, %v748
    %v921 = vmul.f32 %v771, %v754
    %v922 = vmul.f32 %v772, %v748
    %v923 = vmul.f32 %v773, %v754
    %v924 = vmul.f32 %v774, %v748
    %v925 = vmul.f32 %v775, %v754
    %v926 = vmul.f32 %v776, %v748
    %v927 = vmul.f32 %v777, %v754
    %v928 = vmul.f32 %v778, %v748
    %v929 = vmul.f32 %v779, %v754
    %v930 = vmul.f32 %v780, %v748
    %v931 = vmul.f32 %v781, %v754
    %v932 = vmul.f32 %v782, %v748
    %v933 = vmul.f32 %v783, %v754
    %v934 = vmul.f32 %v784, %v748
    %v935 = vmul.f32 %v785, %v754
    %v936 = vmul.f32 %v770, %v750
    %v937 = vmul.f32 %v771, %v756
    %v938 = vmul.f32 %v772, %v750
    %v939 = vmul.f32 %v773, %v756
    %v940 = vmul.f32 %v774, %v750
    %v941 = vmul.f32 %v775, %v756
    %v942 = vmul.f32 %v776, %v750
    %v943 = vmul.f32 %v777, %v756
    %v944 = vmul.f32 %v778, %v750
    %v945 = vmul.f32 %v779, %v756
    %v946 = vmul.f32 %v780, %v750
    %v947 = vmul.f32 %v781, %v756
    %v948 = vmul.f32 %v782, %v750
    %v949 = vmul.f32 %v783, %v756
    %v950 = vmul.f32 %v784, %v750
    %v951 = vmul.f32 %v785, %v756
    %vm952 = vcmask 523264
    %v954 = vsel %vm952, %v661, 0
    %v957 = vsel %vm952, %v667, 0
    %v960 = vsel %vm952, %v920, 0
    %v963 = vsel %vm952, %v921, 0
    %v966 = vsel %vm952, %v922, 0
    %v969 = vsel %vm952, %v923, 0
    %v972 = vsel %vm952, %v924, 0
    %v975 = vsel %vm952, %v925, 0
    %v978 = vsel %vm952, %v926, 0
    %v981 = vsel %vm952, %v927, 0
    %v984 = vsel %vm952, %v928, 0
    %v987 = vsel %vm952, %v929, 0
    %v990 = vsel %vm952, %v930, 0
    %v993 = vsel %vm952, %v931, 0
    %v996 = vsel %vm952, %v932, 0
    %v999 = vsel %vm952, %v933, 0
    %v1002 = vsel %vm952, %v934, 0
    %v1005 = vsel %vm952, %v935, 0
    %1007 = vmatprep.subr.mxu0 0.0
    %1008 = vmatpush1.xpose.msra.mxu0 %v1005
    %1009 = vmatprep.subr.mxu0 0.0
    %1010 = vmatpush1.xpose.msra.mxu0 %v1002
    %1011 = vmatprep.subr.mxu0 0.0
    %1012 = vmatpush1.xpose.msra.mxu0 %v999
    %1013 = vmatprep.subr.mxu0 0.0
    %1014 = vmatpush1.xpose.msra.mxu0 %v996
    %1015 = vmatprep.subr.mxu0 0.0
    %1016 = vmatpush1.xpose.msra.mxu0 %v993
    %1017 = vmatprep.subr.mxu0 0.0
    %1018 = vmatpush1.xpose.msra.mxu0 %v990
    %1019 = vmatprep.subr.mxu0 0.0
    %1020 = vmatpush1.xpose.msra.mxu0 %v987
    %1021 = vmatprep.subr.mxu0 0.0
    %1022 = vmatpush1.xpose.msra.mxu0 %v984
    %1023 = vmatprep.subr.mxu0 0.0
    %1024 = vmatpush1.xpose.msra.mxu0 %v981
    %1025 = vmatprep.subr.mxu0 0.0
    %1026 = vmatpush1.xpose.msra.mxu0 %v978
    %1027 = vmatprep.subr.mxu0 0.0
    %1028 = vmatpush1.xpose.msra.mxu0 %v975
    %1029 = vmatprep.subr.mxu0 0.0
    %1030 = vmatpush1.xpose.msra.mxu0 %v972
    %1031 = vmatprep.subr.mxu0 0.0
    %1032 = vmatpush1.xpose.msra.mxu0 %v969
    %1033 = vmatprep.subr.mxu0 0.0
    %1034 = vmatpush1.xpose.msra.mxu0 %v966
    %1035 = vmatprep.subr.mxu0 0.0
    %1036 = vmatpush1.xpose.msra.mxu0 %v963
    %1037 = vmatprep.subr.mxu0 0.0
    %1038 = vmatpush1.xpose.msra.mxu0 %v960
    %1039 = vmatprep.subr.mxu0 0.0
    %1040 = vmatpush2.xpose.msra.mxu0 0.0
    %1041 = vmatprep.subr.mxu0 0.0
    %1042 = vmatpush2.xpose.msra.mxu0 0.0
    %1043 = vmatprep.subr.mxu0 0.0
    %1044 = vmatpush2.xpose.msra.mxu0 0.0
    %1045 = vmatprep.subr.mxu0 0.0
    %1046 = vmatpush2.xpose.msra.mxu0 0.0
    %1047 = vmatprep.subr.mxu0 0.0
    %1048 = vmatpush2.xpose.msra.mxu0 0.0
    %1049 = vmatprep.subr.mxu0 0.0
    %1050 = vmatpush2.xpose.msra.mxu0 0.0
    %1051 = vmatprep.subr.mxu0 0.0
    %1052 = vmatpush2.xpose.msra.mxu0 0.0
    %1053 = vmatprep.subr.mxu0 0.0
    %1054 = vmatpush2.xpose.msra.mxu0 0.0
    %1055 = vmatprep.subr.mxu0 0.0
    %1056 = vmatpush2.xpose.msra.mxu0 0.0
    %1057 = vmatprep.subr.mxu0 0.0
    %1058 = vmatpush2.xpose.msra.mxu0 0.0
    %1059 = vmatprep.subr.mxu0 0.0
    %1060 = vmatpush2.xpose.msra.mxu0 0.0
    %1061 = vmatprep.subr.mxu0 0.0
    %1062 = vmatpush2.xpose.msra.mxu0 0.0
    %1063 = vmatprep.subr.mxu0 0.0
    %1064 = vmatpush2.xpose.msra.mxu0 0.0
    %1065 = vmatprep.subr.mxu0 0.0
    %1066 = vmatpush2.xpose.msra.mxu0 0.0
    %1067 = vmatprep.subr.mxu0 0.0
    %1068 = vmatpush2.xpose.msra.mxu0 0.0
    %1069 = vmatprep.subr.mxu0 0.0
    %1070 = vmatpush2.xpose.msra.mxu0 0.0
    %1071 = vmatprep.mubr.f32.mxu0 0.0
    %1072 = vmatmul.mubr.f32.gmra.mxu0 %v954
    %v1073 = vpop.f32.mrf.mxu0
    %v1074 = vadd.f32 0.0, %v1073
    %v1075 = vpop.f32.mrf.mxu0
    %1076 = vmatprep.mubr.f32.mxu0 0.0
    %1077 = vmatmul.mubr.f32.gmra.mxu0 %v957
    %v1078 = vpop.f32.mrf.mxu0
    %v1079 = vadd.f32 0.0, %v1078
    %v1080 = vpop.f32.mrf.mxu0
    %1081 = vdwg.mxu0
    %v1082 = vmax.f32 %v1074, %v1079
    %v1083 = vrot.slane %v1082, 4
    %v1084 = vmax.f32 %v1082, %v1083
    %v1085 = vrot.slane %v1084, 2
    %v1086 = vmax.f32 %v1084, %v1085
    %v1087 = vrot.slane %v1086, 1
    %v1088 = vmax.f32 %v1086, %v1087
    %v1089 = vsub.f32 %v1074, %v1088
    %v1090 = vsub.f32 %v1079, %v1088
    %v1091 = vmul.f32 %v1089, 1.442695
    %v1092 = vpow.pop %v1091
    %v1093 = vmul.f32 %v1090, 1.442695
    %v1094 = vpow.pop %v1093
    %v1095 = vadd.f32 %v1092, %v1094
    %v1096 = vrot.slane %v1095, 4
    %v1097 = vadd.f32 %v1095, %v1096
    %v1098 = vrot.slane %v1097, 2
    %v1099 = vadd.f32 %v1097, %v1098
    %v1100 = vrot.slane %v1099, 1
    %v1101 = vadd.f32 %v1099, %v1100
    %v1102 = vrcp.pop %v1101
    %v1103 = vmul.f32 %v1092, %v1102
    %v1104 = vmul.f32 %v1094, %v1102
    %1105 = vmatprep.subr.mxu0 0.0
    %1106 = vmatpush1.msra.mxu0 %v817
    %1107 = vmatprep.subr.mxu0 0.0
    %1108 = vmatpush1.msra.mxu0 %v816
    %1109 = vmatprep.subr.mxu0 0.0
    %1110 = vmatpush1.msra.mxu0 %v815
    %1111 = vmatprep.subr.mxu0 0.0
    %1112 = vmatpush1.msra.mxu0 %v814
    %1113 = vmatprep.subr.mxu0 0.0
    %1114 = vmatpush1.msra.mxu0 %v813
    %1115 = vmatprep.subr.mxu0 0.0
    %1116 = vmatpush1.msra.mxu0 %v812
    %1117 = vmatprep.subr.mxu0 0.0
    %1118 = vmatpush1.msra.mxu0 %v811
    %1119 = vmatprep.subr.mxu0 0.0
    %1120 = vmatpush1.msra.mxu0 %v810
    %1121 = vmatprep.subr.mxu0 0.0
    %1122 = vmatpush1.msra.mxu0 %v809
    %1123 = vmatprep.subr.mxu0 0.0
    %1124 = vmatpush1.msra.mxu0 %v808
    %1125 = vmatprep.subr.mxu0 0.0
    %1126 = vmatpush1.msra.mxu0 %v807
    %1127 = vmatprep.subr.mxu0 0.0
    %1128 = vmatpush1.msra.mxu0 %v806
    %1129 = vmatprep.subr.mxu0 0.0
    %1130 = vmatpush1.msra.mxu0 %v805
    %1131 = vmatprep.subr.mxu0 0.0
    %1132 = vmatpush1.msra.mxu0 %v804
    %1133 = vmatprep.subr.mxu0 0.0
    %1134 = vmatpush1.msra.mxu0 %v803
    %1135 = vmatprep.subr.mxu0 0.0
    %1136 = vmatpush1.msra.mxu0 %v802
    %1137 = vmatprep.subr.mxu0 0.0
    %1138 = vmatpush2.msra.mxu0 0.0
    %1139 = vmatprep.subr.mxu0 0.0
    %1140 = vmatpush2.msra.mxu0 0.0
    %1141 = vmatprep.subr.mxu0 0.0
    %1142 = vmatpush2.msra.mxu0 0.0
    %1143 = vmatprep.subr.mxu0 0.0
    %1144 = vmatpush2.msra.mxu0 0.0
    %1145 = vmatprep.subr.mxu0 0.0
    %1146 = vmatpush2.msra.mxu0 0.0
    %1147 = vmatprep.subr.mxu0 0.0
    %1148 = vmatpush2.msra.mxu0 0.0
    %1149 = vmatprep.subr.mxu0 0.0
    %1150 = vmatpush2.msra.mxu0 0.0
    %1151 = vmatprep.subr.mxu0 0.0
    %1152 = vmatpush2.msra.mxu0 0.0
    %1153 = vmatprep.subr.mxu0 0.0
    %1154 = vmatpush2.msra.mxu0 0.0
    %1155 = vmatprep.subr.mxu0 0.0
    %1156 = vmatpush2.msra.mxu0 0.0
    %1157 = vmatprep.subr.mxu0 0.0
    %1158 = vmatpush2.msra.mxu0 0.0
    %1159 = vmatprep.subr.mxu0 0.0
    %1160 = vmatpush2.msra.mxu0 0.0
    %1161 = vmatprep.subr.mxu0 0.0
    %1162 = vmatpush2.msra.mxu0 0.0
    %1163 = vmatprep.subr.mxu0 0.0
    %1164 = vmatpush2.msra.mxu0 0.0
    %1165 = vmatprep.subr.mxu0 0.0
    %1166 = vmatpush2.msra.mxu0 0.0
    %1167 = vmatprep.subr.mxu0 0.0
    %1168 = vmatpush2.msra.mxu0 0.0
    %1169 = vmatprep.mubr.f32.mxu0 0.0
    %1170 = vmatmul.mubr.f32.gmra.mxu0 %v1103
    %v1171 = vpop.f32.mrf.mxu0
    %v1172 = vadd.f32 1e-09, %v1171
    %v1173 = vpop.f32.mrf.mxu0
    %1174 = vmatprep.mubr.f32.mxu0 0.0
    %1175 = vmatmul.mubr.f32.gmra.mxu0 %v1104
    %v1176 = vpop.f32.mrf.mxu0
    %v1177 = vadd.f32 1e-09, %v1176
    %v1178 = vpop.f32.mrf.mxu0
    %1179 = vdwg.mxu0
    %v1180 = vrcp.pop %v1172
    %v1181 = vmul.f32 %v1103, %v1180
    %v1182 = vrcp.pop %v1177
    %v1183 = vmul.f32 %v1104, %v1182
    %v1184 = vadd.f32 %v786, %v936
    %v1185 = vadd.f32 %v787, %v937
    %v1186 = vadd.f32 %v788, %v938
    %v1187 = vadd.f32 %v789, %v939
    %v1188 = vadd.f32 %v790, %v940
    %v1189 = vadd.f32 %v791, %v941
    %v1190 = vadd.f32 %v792, %v942
    %v1191 = vadd.f32 %v793, %v943
    %v1192 = vadd.f32 %v794, %v944
    %v1193 = vadd.f32 %v795, %v945
    %v1194 = vadd.f32 %v796, %v946
    %v1195 = vadd.f32 %v797, %v947
    %v1196 = vadd.f32 %v798, %v948
    %v1197 = vadd.f32 %v799, %v949
    %v1198 = vadd.f32 %v800, %v950
    %v1199 = vadd.f32 %v801, %v951
    %1200 = vmatprep.subr.mxu0 0.0
    %1201 = vmatpush1.msra.mxu0 %v1199
    %1202 = vmatprep.subr.mxu0 0.0
    %1203 = vmatpush1.msra.mxu0 %v1198
    %1204 = vmatprep.subr.mxu0 0.0
    %1205 = vmatpush1.msra.mxu0 %v1197
    %1206 = vmatprep.subr.mxu0 0.0
    %1207 = vmatpush1.msra.mxu0 %v1196
    %1208 = vmatprep.subr.mxu0 0.0
    %1209 = vmatpush1.msra.mxu0 %v1195
    %1210 = vmatprep.subr.mxu0 0.0
    %1211 = vmatpush1.msra.mxu0 %v1194
    %1212 = vmatprep.subr.mxu0 0.0
    %1213 = vmatpush1.msra.mxu0 %v1193
    %1214 = vmatprep.subr.mxu0 0.0
    %1215 = vmatpush1.msra.mxu0 %v1192
    %1216 = vmatprep.subr.mxu0 0.0
    %1217 = vmatpush1.msra.mxu0 %v1191
    %1218 = vmatprep.subr.mxu0 0.0
    %1219 = vmatpush1.msra.mxu0 %v1190
    %1220 = vmatprep.subr.mxu0 0.0
    %1221 = vmatpush1.msra.mxu0 %v1189
    %1222 = vmatprep.subr.mxu0 0.0
    %1223 = vmatpush1.msra.mxu0 %v1188
    %1224 = vmatprep.subr.mxu0 0.0
    %1225 = vmatpush1.msra.mxu0 %v1187
    %1226 = vmatprep.subr.mxu0 0.0
    %1227 = vmatpush1.msra.mxu0 %v1186
    %1228 = vmatprep.subr.mxu0 0.0
    %1229 = vmatpush1.msra.mxu0 %v1185
    %1230 = vmatprep.subr.mxu0 0.0
    %1231 = vmatpush1.msra.mxu0 %v1184
    %1232 = vmatprep.subr.mxu0 0.0
    %1233 = vmatpush2.msra.mxu0 %v801
    %1234 = vmatprep.subr.mxu0 0.0
    %1235 = vmatpush2.msra.mxu0 %v800
    %1236 = vmatprep.subr.mxu0 0.0
    %1237 = vmatpush2.msra.mxu0 %v799
    %1238 = vmatprep.subr.mxu0 0.0
    %1239 = vmatpush2.msra.mxu0 %v798
    %1240 = vmatprep.subr.mxu0 0.0
    %1241 = vmatpush2.msra.mxu0 %v797
    %1242 = vmatprep.subr.mxu0 0.0
    %1243 = vmatpush2.msra.mxu0 %v796
    %1244 = vmatprep.subr.mxu0 0.0
    %1245 = vmatpush2.msra.mxu0 %v795
    %1246 = vmatprep.subr.mxu0 0.0
    %1247 = vmatpush2.msra.mxu0 %v794
    %1248 = vmatprep.subr.mxu0 0.0
    %1249 = vmatpush2.msra.mxu0 %v793
    %1250 = vmatprep.subr.mxu0 0.0
    %1251 = vmatpush2.msra.mxu0 %v792
    %1252 = vmatprep.subr.mxu0 0.0
    %1253 = vmatpush2.msra.mxu0 %v791
    %1254 = vmatprep.subr.mxu0 0.0
    %1255 = vmatpush2.msra.mxu0 %v790
    %1256 = vmatprep.subr.mxu0 0.0
    %1257 = vmatpush2.msra.mxu0 %v789
    %1258 = vmatprep.subr.mxu0 0.0
    %1259 = vmatpush2.msra.mxu0 %v788
    %1260 = vmatprep.subr.mxu0 0.0
    %1261 = vmatpush2.msra.mxu0 %v787
    %1262 = vmatprep.subr.mxu0 0.0
    %1263 = vmatpush2.msra.mxu0 %v786
    %1264 = vmatprep.mubr.f32.mxu0 %v1181
    %1265 = vmatmul.mubr.f32.gmra.mxu0 %v917
    %v1266 = vpop.f32.mrf.mxu0
    %v1267 = vadd.f32 0.0, %v1266
    %v1268 = vpop.f32.mrf.mxu0
    %1269 = vmatprep.mubr.f32.mxu0 %v1183
    %1270 = vmatmul.mubr.f32.gmra.mxu0 %v919
    %v1271 = vpop.f32.mrf.mxu0
    %v1272 = vadd.f32 0.0, %v1271
    %v1273 = vpop.f32.mrf.mxu0
    %1274 = vdwg.mxu0
    %v1275 = vmax.f32 %v671, %v677
    %v1276 = vrot.slane %v1275, 4
    %v1277 = vmax.f32 %v1275, %v1276
    %v1278 = vrot.slane %v1277, 2
    %v1279 = vmax.f32 %v1277, %v1278
    %v1280 = vrot.slane %v1279, 1
    %v1281 = vmax.f32 %v1279, %v1280
    %v1282 = vsub.f32 %v671, %v1281
    %v1283 = vsub.f32 %v677, %v1281
    %v1284 = vmul.f32 %v1282, 1.442695
    %v1285 = vpow.pop %v1284
    %v1286 = vmul.f32 %v1283, 1.442695
    %v1287 = vpow.pop %v1286
    %v1288 = vadd.f32 %v1285, %v1287
    %v1289 = vrot.slane %v1288, 4
    %v1290 = vadd.f32 %v1288, %v1289
    %v1291 = vrot.slane %v1290, 2
    %v1292 = vadd.f32 %v1290, %v1291
    %v1293 = vrot.slane %v1292, 1
    %v1294 = vadd.f32 %v1292, %v1293
    %v1295 = vrcp.pop %v1294
    %v1296 = vmul.f32 %v1285, %v1295
    %v1297 = vmul.f32 %v1287, %v1295
    %1298 = vmatprep.subr.mxu0 0.0
    %1299 = vmatpush1.msra.mxu0 %v817
    %1300 = vmatprep.subr.mxu0 0.0
    %1301 = vmatpush1.msra.mxu0 %v816
    %1302 = vmatprep.subr.mxu0 0.0
    %1303 = vmatpush1.msra.mxu0 %v815
    %1304 = vmatprep.subr.mxu0 0.0
    %1305 = vmatpush1.msra.mxu0 %v814
    %1306 = vmatprep.subr.mxu0 0.0
    %1307 = vmatpush1.msra.mxu0 %v813
    %1308 = vmatprep.subr.mxu0 0.0
    %1309 = vmatpush1.msra.mxu0 %v812
    %1310 = vmatprep.subr.mxu0 0.0
    %1311 = vmatpush1.msra.mxu0 %v811
    %1312 = vmatprep.subr.mxu0 0.0
    %1313 = vmatpush1.msra.mxu0 %v810
    %1314 = vmatprep.subr.mxu0 0.0
    %1315 = vmatpush1.msra.mxu0 %v809
    %1316 = vmatprep.subr.mxu0 0.0
    %1317 = vmatpush1.msra.mxu0 %v808
    %1318 = vmatprep.subr.mxu0 0.0
    %1319 = vmatpush1.msra.mxu0 %v807
    %1320 = vmatprep.subr.mxu0 0.0
    %1321 = vmatpush1.msra.mxu0 %v806
    %1322 = vmatprep.subr.mxu0 0.0
    %1323 = vmatpush1.msra.mxu0 %v805
    %1324 = vmatprep.subr.mxu0 0.0
    %1325 = vmatpush1.msra.mxu0 %v804
    %1326 = vmatprep.subr.mxu0 0.0
    %1327 = vmatpush1.msra.mxu0 %v803
    %1328 = vmatprep.subr.mxu0 0.0
    %1329 = vmatpush1.msra.mxu0 %v802
    %1330 = vmatprep.subr.mxu0 0.0
    %1331 = vmatpush2.msra.mxu0 0.0
    %1332 = vmatprep.subr.mxu0 0.0
    %1333 = vmatpush2.msra.mxu0 0.0
    %1334 = vmatprep.subr.mxu0 0.0
    %1335 = vmatpush2.msra.mxu0 0.0
    %1336 = vmatprep.subr.mxu0 0.0
    %1337 = vmatpush2.msra.mxu0 0.0
    %1338 = vmatprep.subr.mxu0 0.0
    %1339 = vmatpush2.msra.mxu0 0.0
    %1340 = vmatprep.subr.mxu0 0.0
    %1341 = vmatpush2.msra.mxu0 0.0
    %1342 = vmatprep.subr.mxu0 0.0
    %1343 = vmatpush2.msra.mxu0 0.0
    %1344 = vmatprep.subr.mxu0 0.0
    %1345 = vmatpush2.msra.mxu0 0.0
    %1346 = vmatprep.subr.mxu0 0.0
    %1347 = vmatpush2.msra.mxu0 0.0
    %1348 = vmatprep.subr.mxu0 0.0
    %1349 = vmatpush2.msra.mxu0 0.0
    %1350 = vmatprep.subr.mxu0 0.0
    %1351 = vmatpush2.msra.mxu0 0.0
    %1352 = vmatprep.subr.mxu0 0.0
    %1353 = vmatpush2.msra.mxu0 0.0
    %1354 = vmatprep.subr.mxu0 0.0
    %1355 = vmatpush2.msra.mxu0 0.0
    %1356 = vmatprep.subr.mxu0 0.0
    %1357 = vmatpush2.msra.mxu0 0.0
    %1358 = vmatprep.subr.mxu0 0.0
    %1359 = vmatpush2.msra.mxu0 0.0
    %1360 = vmatprep.subr.mxu0 0.0
    %1361 = vmatpush2.msra.mxu0 0.0
    %1362 = vmatprep.mubr.f32.mxu0 0.0
    %1363 = vmatmul.mubr.f32.gmra.mxu0 %v1296
    %v1364 = vpop.f32.mrf.mxu0
    %v1365 = vadd.f32 1e-09, %v1364
    %v1366 = vpop.f32.mrf.mxu0
    %1367 = vmatprep.mubr.f32.mxu0 0.0
    %1368 = vmatmul.mubr.f32.gmra.mxu0 %v1297
    %v1369 = vpop.f32.mrf.mxu0
    %v1370 = vadd.f32 1e-09, %v1369
    %v1371 = vpop.f32.mrf.mxu0
    %1372 = vdwg.mxu0
    %v1373 = vrcp.pop %v1365
    %v1374 = vmul.f32 %v1296, %v1373
    %v1375 = vrcp.pop %v1370
    %v1376 = vmul.f32 %v1297, %v1375
    %v1377 = vmul.f32 %v770, %v760
    %v1378 = vmul.f32 %v771, %v766
    %v1379 = vmul.f32 %v772, %v760
    %v1380 = vmul.f32 %v773, %v766
    %v1381 = vmul.f32 %v774, %v760
    %v1382 = vmul.f32 %v775, %v766
    %v1383 = vmul.f32 %v776, %v760
    %v1384 = vmul.f32 %v777, %v766
    %v1385 = vmul.f32 %v778, %v760
    %v1386 = vmul.f32 %v779, %v766
    %v1387 = vmul.f32 %v780, %v760
    %v1388 = vmul.f32 %v781, %v766
    %v1389 = vmul.f32 %v782, %v760
    %v1390 = vmul.f32 %v783, %v766
    %v1391 = vmul.f32 %v784, %v760
    %v1392 = vmul.f32 %v785, %v766
    %v1393 = vmul.f32 %v770, %v762
    %v1394 = vmul.f32 %v771, %v768
    %v1395 = vmul.f32 %v772, %v762
    %v1396 = vmul.f32 %v773, %v768
    %v1397 = vmul.f32 %v774, %v762
    %v1398 = vmul.f32 %v775, %v768
    %v1399 = vmul.f32 %v776, %v762
    %v1400 = vmul.f32 %v777, %v768
    %v1401 = vmul.f32 %v778, %v762
    %v1402 = vmul.f32 %v779, %v768
    %v1403 = vmul.f32 %v780, %v762
    %v1404 = vmul.f32 %v781, %v768
    %v1405 = vmul.f32 %v782, %v762
    %v1406 = vmul.f32 %v783, %v768
    %v1407 = vmul.f32 %v784, %v762
    %v1408 = vmul.f32 %v785, %v768
    %v1410 = vsel %vm952, %v673, 0
    %v1413 = vsel %vm952, %v679, 0
    %v1416 = vsel %vm952, %v1377, 0
    %v1419 = vsel %vm952, %v1378, 0
    %v1422 = vsel %vm952, %v1379, 0
    %v1425 = vsel %vm952, %v1380, 0
    %v1428 = vsel %vm952, %v1381, 0
    %v1431 = vsel %vm952, %v1382, 0
    %v1434 = vsel %vm952, %v1383, 0
    %v1437 = vsel %vm952, %v1384, 0
    %v1440 = vsel %vm952, %v1385, 0
    %v1443 = vsel %vm952, %v1386, 0
    %v1446 = vsel %vm952, %v1387, 0
    %v1449 = vsel %vm952, %v1388, 0
    %v1452 = vsel %vm952, %v1389, 0
    %v1455 = vsel %vm952, %v1390, 0
    %v1458 = vsel %vm952, %v1391, 0
    %v1461 = vsel %vm952, %v1392, 0
    %1463 = vmatprep.subr.mxu0 0.0
    %1464 = vmatpush1.xpose.msra.mxu0 %v1461
    %1465 = vmatprep.subr.mxu0 0.0
    %1466 = vmatpush1.xpose.msra.mxu0 %v1458
    %1467 = vmatprep.subr.mxu0 0.0
    %1468 = vmatpush1.xpose.msra.mxu0 %v1455
    %1469 = vmatprep.subr.mxu0 0.0
    %1470 = vmatpush1.xpose.msra.mxu0 %v1452
    %1471 = vmatprep.subr.mxu0 0.0
    %1472 = vmatpush1.xpose.msra.mxu0 %v1449
    %1473 = vmatprep.subr.mxu0 0.0
    %1474 = vmatpush1.xpose.msra.mxu0 %v1446
    %1475 = vmatprep.subr.mxu0 0.0
    %1476 = vmatpush1.xpose.msra.mxu0 %v1443
    %1477 = vmatprep.subr.mxu0 0.0
    %1478 = vmatpush1.xpose.msra.mxu0 %v1440
    %1479 = vmatprep.subr.mxu0 0.0
    %1480 = vmatpush1.xpose.msra.mxu0 %v1437
    %1481 = vmatprep.subr.mxu0 0.0
    %1482 = vmatpush1.xpose.msra.mxu0 %v1434
    %1483 = vmatprep.subr.mxu0 0.0
    %1484 = vmatpush1.xpose.msra.mxu0 %v1431
    %1485 = vmatprep.subr.mxu0 0.0
    %1486 = vmatpush1.xpose.msra.mxu0 %v1428
    %1487 = vmatprep.subr.mxu0 0.0
    %1488 = vmatpush1.xpose.msra.mxu0 %v1425
    %1489 = vmatprep.subr.mxu0 0.0
    %1490 = vmatpush1.xpose.msra.mxu0 %v1422
    %1491 = vmatprep.subr.mxu0 0.0
    %1492 = vmatpush1.xpose.msra.mxu0 %v1419
    %1493 = vmatprep.subr.mxu0 0.0
    %1494 = vmatpush1.xpose.msra.mxu0 %v1416
    %1495 = vmatprep.subr.mxu0 0.0
    %1496 = vmatpush2.xpose.msra.mxu0 0.0
    %1497 = vmatprep.subr.mxu0 0.0
    %1498 = vmatpush2.xpose.msra.mxu0 0.0
    %1499 = vmatprep.subr.mxu0 0.0
    %1500 = vmatpush2.xpose.msra.mxu0 0.0
    %1501 = vmatprep.subr.mxu0 0.0
    %1502 = vmatpush2.xpose.msra.mxu0 0.0
    %1503 = vmatprep.subr.mxu0 0.0
    %1504 = vmatpush2.xpose.msra.mxu0 0.0
    %1505 = vmatprep.subr.mxu0 0.0
    %1506 = vmatpush2.xpose.msra.mxu0 0.0
    %1507 = vmatprep.subr.mxu0 0.0
    %1508 = vmatpush2.xpose.msra.mxu0 0.0
    %1509 = vmatprep.subr.mxu0 0.0
    %1510 = vmatpush2.xpose.msra.mxu0 0.0
    %1511 = vmatprep.subr.mxu0 0.0
    %1512 = vmatpush2.xpose.msra.mxu0 0.0
    %1513 = vmatprep.subr.mxu0 0.0
    %1514 = vmatpush2.xpose.msra.mxu0 0.0
    %1515 = vmatprep.subr.mxu0 0.0
    %1516 = vmatpush2.xpose.msra.mxu0 0.0
    %1517 = vmatprep.subr.mxu0 0.0
    %1518 = vmatpush2.xpose.msra.mxu0 0.0
    %1519 = vmatprep.subr.mxu0 0.0
    %1520 = vmatpush2.xpose.msra.mxu0 0.0
    %1521 = vmatprep.subr.mxu0 0.0
    %1522 = vmatpush2.xpose.msra.mxu0 0.0
    %1523 = vmatprep.subr.mxu0 0.0
    %1524 = vmatpush2.xpose.msra.mxu0 0.0
    %1525 = vmatprep.subr.mxu0 0.0
    %1526 = vmatpush2.xpose.msra.mxu0 0.0
    %1527 = vmatprep.mubr.f32.mxu0 0.0
    %1528 = vmatmul.mubr.f32.gmra.mxu0 %v1410
    %v1529 = vpop.f32.mrf.mxu0
    %v1530 = vadd.f32 0.0, %v1529
    %v1531 = vpop.f32.mrf.mxu0
    %1532 = vmatprep.mubr.f32.mxu0 0.0
    %1533 = vmatmul.mubr.f32.gmra.mxu0 %v1413
    %v1534 = vpop.f32.mrf.mxu0
    %v1535 = vadd.f32 0.0, %v1534
    %v1536 = vpop.f32.mrf.mxu0
    %1537 = vdwg.mxu0
    %v1538 = vmax.f32 %v1530, %v1535
    %v1539 = vrot.slane %v1538, 4
    %v1540 = vmax.f32 %v1538, %v1539
    %v1541 = vrot.slane %v1540, 2
    %v1542 = vmax.f32 %v1540, %v1541
    %v1543 = vrot.slane %v1542, 1
    %v1544 = vmax.f32 %v1542, %v1543
    %v1545 = vsub.f32 %v1530, %v1544
    %v1546 = vsub.f32 %v1535, %v1544
    %v1547 = vmul.f32 %v1545, 1.442695
    %v1548 = vpow.pop %v1547
    %v1549 = vmul.f32 %v1546, 1.442695
    %v1550 = vpow.pop %v1549
    %v1551 = vadd.f32 %v1548, %v1550
    %v1552 = vrot.slane %v1551, 4
    %v1553 = vadd.f32 %v1551, %v1552
    %v1554 = vrot.slane %v1553, 2
    %v1555 = vadd.f32 %v1553, %v1554
    %v1556 = vrot.slane %v1555, 1
    %v1557 = vadd.f32 %v1555, %v1556
    %v1558 = vrcp.pop %v1557
    %v1559 = vmul.f32 %v1548, %v1558
    %v1560 = vmul.f32 %v1550, %v1558
    %1561 = vmatprep.subr.mxu0 0.0
    %1562 = vmatpush1.msra.mxu0 %v817
    %1563 = vmatprep.subr.mxu0 0.0
    %1564 = vmatpush1.msra.mxu0 %v816
    %1565 = vmatprep.subr.mxu0 0.0
    %1566 = vmatpush1.msra.mxu0 %v815
    %1567 = vmatprep.subr.mxu0 0.0
    %1568 = vmatpush1.msra.mxu0 %v814
    %1569 = vmatprep.subr.mxu0 0.0
    %1570 = vmatpush1.msra.mxu0 %v813
    %1571 = vmatprep.subr.mxu0 0.0
    %1572 = vmatpush1.msra.mxu0 %v812
    %1573 = vmatprep.subr.mxu0 0.0
    %1574 = vmatpush1.msra.mxu0 %v811
    %1575 = vmatprep.subr.mxu0 0.0
    %1576 = vmatpush1.msra.mxu0 %v810
    %1577 = vmatprep.subr.mxu0 0.0
    %1578 = vmatpush1.msra.mxu0 %v809
    %1579 = vmatprep.subr.mxu0 0.0
    %1580 = vmatpush1.msra.mxu0 %v808
    %1581 = vmatprep.subr.mxu0 0.0
    %1582 = vmatpush1.msra.mxu0 %v807
    %1583 = vmatprep.subr.mxu0 0.0
    %1584 = vmatpush1.msra.mxu0 %v806
    %1585 = vmatprep.subr.mxu0 0.0
    %1586 = vmatpush1.msra.mxu0 %v805
    %1587 = vmatprep.subr.mxu0 0.0
    %1588 = vmatpush1.msra.mxu0 %v804
    %1589 = vmatprep.subr.mxu0 0.0
    %1590 = vmatpush1.msra.mxu0 %v803
    %1591 = vmatprep.subr.mxu0 0.0
    %1592 = vmatpush1.msra.mxu0 %v802
    %1593 = vmatprep.subr.mxu0 0.0
    %1594 = vmatpush2.msra.mxu0 0.0
    %1595 = vmatprep.subr.mxu0 0.0
    %1596 = vmatpush2.msra.mxu0 0.0
    %1597 = vmatprep.subr.mxu0 0.0
    %1598 = vmatpush2.msra.mxu0 0.0
    %1599 = vmatprep.subr.mxu0 0.0
    %1600 = vmatpush2.msra.mxu0 0.0
    %1601 = vmatprep.subr.mxu0 0.0
    %1602 = vmatpush2.msra.mxu0 0.0
    %1603 = vmatprep.subr.mxu0 0.0
    %1604 = vmatpush2.msra.mxu0 0.0
    %1605 = vmatprep.subr.mxu0 0.0
    %1606 = vmatpush2.msra.mxu0 0.0
    %1607 = vmatprep.subr.mxu0 0.0
    %1608 = vmatpush2.msra.mxu0 0.0
    %1609 = vmatprep.subr.mxu0 0.0
    %1610 = vmatpush2.msra.mxu0 0.0
    %1611 = vmatprep.subr.mxu0 0.0
    %1612 = vmatpush2.msra.mxu0 0.0
    %1613 = vmatprep.subr.mxu0 0.0
    %1614 = vmatpush2.msra.mxu0 0.0
    %1615 = vmatprep.subr.mxu0 0.0
    %1616 = vmatpush2.msra.mxu0 0.0
    %1617 = vmatprep.subr.mxu0 0.0
    %1618 = vmatpush2.msra.mxu0 0.0
    %1619 = vmatprep.subr.mxu0 0.0
    %1620 = vmatpush2.msra.mxu0 0.0
    %1621 = vmatprep.subr.mxu0 0.0
    %1622 = vmatpush2.msra.mxu0 0.0
    %1623 = vmatprep.subr.mxu0 0.0
    %1624 = vmatpush2.msra.mxu0 0.0
    %1625 = vmatprep.mubr.f32.mxu0 0.0
    %1626 = vmatmul.mubr.f32.gmra.mxu0 %v1559
    %v1627 = vpop.f32.mrf.mxu0
    %v1628 = vadd.f32 1e-09, %v1627
    %v1629 = vpop.f32.mrf.mxu0
    %1630 = vmatprep.mubr.f32.mxu0 0.0
    %1631 = vmatmul.mubr.f32.gmra.mxu0 %v1560
    %v1632 = vpop.f32.mrf.mxu0
    %v1633 = vadd.f32 1e-09, %v1632
    %v1634 = vpop.f32.mrf.mxu0
    %1635 = vdwg.mxu0
    %v1636 = vrcp.pop %v1628
    %v1637 = vmul.f32 %v1559, %v1636
    %v1638 = vrcp.pop %v1633
    %v1639 = vmul.f32 %v1560, %v1638
    %v1640 = vadd.f32 %v786, %v1393
    %v1641 = vadd.f32 %v787, %v1394
    %v1642 = vadd.f32 %v788, %v1395
    %v1643 = vadd.f32 %v789, %v1396
    %v1644 = vadd.f32 %v790, %v1397
    %v1645 = vadd.f32 %v791, %v1398
    %v1646 = vadd.f32 %v792, %v1399
    %v1647 = vadd.f32 %v793, %v1400
    %v1648 = vadd.f32 %v794, %v1401
    %v1649 = vadd.f32 %v795, %v1402
    %v1650 = vadd.f32 %v796, %v1403
    %v1651 = vadd.f32 %v797, %v1404
    %v1652 = vadd.f32 %v798, %v1405
    %v1653 = vadd.f32 %v799, %v1406
    %v1654 = vadd.f32 %v800, %v1407
    %v1655 = vadd.f32 %v801, %v1408
    %1656 = vmatprep.subr.mxu0 0.0
    %1657 = vmatpush1.msra.mxu0 %v1655
    %1658 = vmatprep.subr.mxu0 0.0
    %1659 = vmatpush1.msra.mxu0 %v1654
    %1660 = vmatprep.subr.mxu0 0.0
    %1661 = vmatpush1.msra.mxu0 %v1653
    %1662 = vmatprep.subr.mxu0 0.0
    %1663 = vmatpush1.msra.mxu0 %v1652
    %1664 = vmatprep.subr.mxu0 0.0
    %1665 = vmatpush1.msra.mxu0 %v1651
    %1666 = vmatprep.subr.mxu0 0.0
    %1667 = vmatpush1.msra.mxu0 %v1650
    %1668 = vmatprep.subr.mxu0 0.0
    %1669 = vmatpush1.msra.mxu0 %v1649
    %1670 = vmatprep.subr.mxu0 0.0
    %1671 = vmatpush1.msra.mxu0 %v1648
    %1672 = vmatprep.subr.mxu0 0.0
    %1673 = vmatpush1.msra.mxu0 %v1647
    %1674 = vmatprep.subr.mxu0 0.0
    %1675 = vmatpush1.msra.mxu0 %v1646
    %1676 = vmatprep.subr.mxu0 0.0
    %1677 = vmatpush1.msra.mxu0 %v1645
    %1678 = vmatprep.subr.mxu0 0.0
    %1679 = vmatpush1.msra.mxu0 %v1644
    %1680 = vmatprep.subr.mxu0 0.0
    %1681 = vmatpush1.msra.mxu0 %v1643
    %1682 = vmatprep.subr.mxu0 0.0
    %1683 = vmatpush1.msra.mxu0 %v1642
    %1684 = vmatprep.subr.mxu0 0.0
    %1685 = vmatpush1.msra.mxu0 %v1641
    %1686 = vmatprep.subr.mxu0 0.0
    %1687 = vmatpush1.msra.mxu0 %v1640
    %1688 = vmatprep.subr.mxu0 0.0
    %1689 = vmatpush2.msra.mxu0 %v801
    %1690 = vmatprep.subr.mxu0 0.0
    %1691 = vmatpush2.msra.mxu0 %v800
    %1692 = vmatprep.subr.mxu0 0.0
    %1693 = vmatpush2.msra.mxu0 %v799
    %1694 = vmatprep.subr.mxu0 0.0
    %1695 = vmatpush2.msra.mxu0 %v798
    %1696 = vmatprep.subr.mxu0 0.0
    %1697 = vmatpush2.msra.mxu0 %v797
    %1698 = vmatprep.subr.mxu0 0.0
    %1699 = vmatpush2.msra.mxu0 %v796
    %1700 = vmatprep.subr.mxu0 0.0
    %1701 = vmatpush2.msra.mxu0 %v795
    %1702 = vmatprep.subr.mxu0 0.0
    %1703 = vmatpush2.msra.mxu0 %v794
    %1704 = vmatprep.subr.mxu0 0.0
    %1705 = vmatpush2.msra.mxu0 %v793
    %1706 = vmatprep.subr.mxu0 0.0
    %1707 = vmatpush2.msra.mxu0 %v792
    %1708 = vmatprep.subr.mxu0 0.0
    %1709 = vmatpush2.msra.mxu0 %v791
    %1710 = vmatprep.subr.mxu0 0.0
    %1711 = vmatpush2.msra.mxu0 %v790
    %1712 = vmatprep.subr.mxu0 0.0
    %1713 = vmatpush2.msra.mxu0 %v789
    %1714 = vmatprep.subr.mxu0 0.0
    %1715 = vmatpush2.msra.mxu0 %v788
    %1716 = vmatprep.subr.mxu0 0.0
    %1717 = vmatpush2.msra.mxu0 %v787
    %1718 = vmatprep.subr.mxu0 0.0
    %1719 = vmatpush2.msra.mxu0 %v786
    %1720 = vmatprep.mubr.f32.mxu0 %v1637
    %1721 = vmatmul.mubr.f32.gmra.mxu0 %v1374
    %v1722 = vpop.f32.mrf.mxu0
    %v1723 = vadd.f32 0.0, %v1722
    %v1724 = vpop.f32.mrf.mxu0
    %1725 = vmatprep.mubr.f32.mxu0 %v1639
    %1726 = vmatmul.mubr.f32.gmra.mxu0 %v1376
    %v1727 = vpop.f32.mrf.mxu0
    %v1728 = vadd.f32 0.0, %v1727
    %v1729 = vpop.f32.mrf.mxu0
    %1730 = vdwg.mxu0
    %v1731 = vld [vmem:[%s8] sm:$0xff]
    %v1732 = vld [vmem:[%s8 + $0x8] sm:$0xff]
    %v1733 = vld [vmem:[%s8 + $0x10] sm:$0xff]
    %v1734 = vld [vmem:[%s8 + $0x18] sm:$0xff]
    %v1735 = vld [vmem:[%s8 + $0x20] sm:$0xff]
    %v1736 = vld [vmem:[%s8 + $0x28] sm:$0xff]
    %v1737 = vld [vmem:[%s8 + $0x30] sm:$0xff]
    %v1738 = vld [vmem:[%s8 + $0x38] sm:$0xff]
    %v1739 = vld [vmem:[%s1 + $0x3] ss:$0 sm:$0xff]
    %v1741 = vsel %vm952, %v1267, 0
    %v1744 = vsel %vm952, %v1272, 0
    %v1747 = vsel %vm952, %v1723, 0
    %v1750 = vsel %vm952, %v1728, 0
    %1752 = vmatprep.subr.mxu0 0.0
    %1753 = vmatpush1.msra.mxu0 0.0
    %1754 = vmatprep.subr.mxu0 0.0
    %1755 = vmatpush1.msra.mxu0 0.0
    %1756 = vmatprep.subr.mxu0 0.0
    %1757 = vmatpush1.msra.mxu0 0.0
    %1758 = vmatprep.subr.mxu0 0.0
    %1759 = vmatpush1.msra.mxu0 0.0
    %1760 = vmatprep.subr.mxu0 0.0
    %1761 = vmatpush1.msra.mxu0 0.0
    %1762 = vmatprep.subr.mxu0 0.0
    %1763 = vmatpush1.msra.mxu0 0.0
    %1764 = vmatprep.subr.mxu0 0.0
    %1765 = vmatpush1.msra.mxu0 0.0
    %1766 = vmatprep.subr.mxu0 0.0
    %1767 = vmatpush1.msra.mxu0 0.0
    %1768 = vmatprep.subr.mxu0 0.0
    %1769 = vmatpush1.msra.mxu0 %v1738
    %1770 = vmatprep.subr.mxu0 0.0
    %1771 = vmatpush1.msra.mxu0 %v1737
    %1772 = vmatprep.subr.mxu0 0.0
    %1773 = vmatpush1.msra.mxu0 %v1736
    %1774 = vmatprep.subr.mxu0 0.0
    %1775 = vmatpush1.msra.mxu0 %v1735
    %1776 = vmatprep.subr.mxu0 0.0
    %1777 = vmatpush1.msra.mxu0 %v1734
    %1778 = vmatprep.subr.mxu0 0.0
    %1779 = vmatpush1.msra.mxu0 %v1733
    %1780 = vmatprep.subr.mxu0 0.0
    %1781 = vmatpush1.msra.mxu0 %v1732
    %1782 = vmatprep.subr.mxu0 0.0
    %1783 = vmatpush1.msra.mxu0 %v1731
    %1784 = vmatprep.subr.mxu0 0.0
    %1785 = vmatpush2.msra.mxu0 0.0
    %1786 = vmatprep.subr.mxu0 0.0
    %1787 = vmatpush2.msra.mxu0 0.0
    %1788 = vmatprep.subr.mxu0 0.0
    %1789 = vmatpush2.msra.mxu0 0.0
    %1790 = vmatprep.subr.mxu0 0.0
    %1791 = vmatpush2.msra.mxu0 0.0
    %1792 = vmatprep.subr.mxu0 0.0
    %1793 = vmatpush2.msra.mxu0 0.0
    %1794 = vmatprep.subr.mxu0 0.0
    %1795 = vmatpush2.msra.mxu0 0.0
    %1796 = vmatprep.subr.mxu0 0.0
    %1797 = vmatpush2.msra.mxu0 0.0
    %1798 = vmatprep.subr.mxu0 0.0
    %1799 = vmatpush2.msra.mxu0 0.0
    %1800 = vmatprep.subr.mxu0 0.0
    %1801 = vmatpush2.msra.mxu0 0.0
    %1802 = vmatprep.subr.mxu0 0.0
    %1803 = vmatpush2.msra.mxu0 0.0
    %1804 = vmatprep.subr.mxu0 0.0
    %1805 = vmatpush2.msra.mxu0 0.0
    %1806 = vmatprep.subr.mxu0 0.0
    %1807 = vmatpush2.msra.mxu0 0.0
    %1808 = vmatprep.subr.mxu0 0.0
    %1809 = vmatpush2.msra.mxu0 0.0
    %1810 = vmatprep.subr.mxu0 0.0
    %1811 = vmatpush2.msra.mxu0 0.0
    %1812 = vmatprep.subr.mxu0 0.0
    %1813 = vmatpush2.msra.mxu0 0.0
    %1814 = vmatprep.subr.mxu0 0.0
    %1815 = vmatpush2.msra.mxu0 0.0
    %1816 = vmatprep.mubr.f32.mxu0 0.0
    %1817 = vmatmul.mubr.f32.gmra.mxu0 %v1741
    %v1818 = vpop.f32.mrf.mxu0
    %v1819 = vadd.f32 %v1739, %v1818
    %v1820 = vpop.f32.mrf.mxu0
    %1821 = vmatprep.mubr.f32.mxu0 0.0
    %1822 = vmatmul.mubr.f32.gmra.mxu0 %v1744
    %v1823 = vpop.f32.mrf.mxu0
    %v1824 = vadd.f32 %v1739, %v1823
    %v1825 = vpop.f32.mrf.mxu0
    %1826 = vmatprep.mubr.f32.mxu0 0.0
    %1827 = vmatmul.mubr.f32.gmra.mxu0 %v1747
    %v1828 = vpop.f32.mrf.mxu0
    %v1829 = vadd.f32 %v1739, %v1828
    %v1830 = vpop.f32.mrf.mxu0
    %1831 = vmatprep.mubr.f32.mxu0 0.0
    %1832 = vmatmul.mubr.f32.gmra.mxu0 %v1750
    %v1833 = vpop.f32.mrf.mxu0
    %v1834 = vadd.f32 %v1739, %v1833
    %v1835 = vpop.f32.mrf.mxu0
    %1836 = vdwg.mxu0
    %v1837 = vadd.f32 %v537, %v1819
    %v1838 = vadd.f32 %v538, %v1824
    %v1839 = vadd.f32 %v539, %v1829
    %v1840 = vadd.f32 %v540, %v1834
    %v1841 = vmax.f32 %v1837, 0.0
    %v1842 = vmax.f32 %v1838, 0.0
    %v1843 = vmax.f32 %v1839, 0.0
    %v1844 = vmax.f32 %v1840, 0.0
    %v1845 = vld [vmem:[%s9] sm:$0xff]
    %v1846 = vld [vmem:[%s9 + $0x8] sm:$0xff]
    %v1847 = vld [vmem:[%s9 + $0x10] sm:$0xff]
    %v1848 = vld [vmem:[%s9 + $0x18] sm:$0xff]
    %v1849 = vld [vmem:[%s9 + $0x20] sm:$0xff]
    %v1850 = vld [vmem:[%s9 + $0x28] sm:$0xff]
    %v1851 = vld [vmem:[%s9 + $0x30] sm:$0xff]
    %v1852 = vld [vmem:[%s9 + $0x38] sm:$0xff]
    %v1853 = vld [vmem:[%s9 + $0x40] sm:$0xff]
    %v1854 = vld [vmem:[%s9 + $0x48] sm:$0xff]
    %v1855 = vld [vmem:[%s9 + $0x50] sm:$0xff]
    %v1856 = vld [vmem:[%s9 + $0x58] sm:$0xff]
    %v1857 = vld [vmem:[%s9 + $0x60] sm:$0xff]
    %v1858 = vld [vmem:[%s9 + $0x68] sm:$0xff]
    %v1859 = vld [vmem:[%s9 + $0x70] sm:$0xff]
    %v1860 = vld [vmem:[%s9 + $0x78] sm:$0xff]
    %v1861 = vld [vmem:[%s9 + $0x80] sm:$0xff]
    %v1862 = vld [vmem:[%s9 + $0x88] sm:$0xff]
    %v1863 = vld [vmem:[%s9 + $0x90] sm:$0xff]
    %v1864 = vld [vmem:[%s9 + $0x98] sm:$0xff]
    %v1865 = vld [vmem:[%s9 + $0xa0] sm:$0xff]
    %v1866 = vld [vmem:[%s9 + $0xa8] sm:$0xff]
    %v1867 = vld [vmem:[%s9 + $0xb0] sm:$0xff]
    %v1868 = vld [vmem:[%s9 + $0xb8] sm:$0xff]
    %v1869 = vld [vmem:[%s9 + $0xc0] sm:$0xff]
    %v1870 = vld [vmem:[%s9 + $0xc8] sm:$0xff]
    %v1871 = vld [vmem:[%s9 + $0xd0] sm:$0xff]
    %v1872 = vld [vmem:[%s9 + $0xd8] sm:$0xff]
    %v1873 = vld [vmem:[%s9 + $0xe0] sm:$0xff]
    %v1874 = vld [vmem:[%s9 + $0xe8] sm:$0xff]
    %v1875 = vld [vmem:[%s9 + $0xf0] sm:$0xff]
    %v1876 = vld [vmem:[%s9 + $0xf8] sm:$0xff]
    %v1878 = vsel %vm74, %v1841, 0
    %v1881 = vsel %vm74, %v1842, 0
    %v1884 = vsel %vm74, %v1843, 0
    %v1887 = vsel %vm74, %v1844, 0
    %1889 = vmatprep.subr.mxu0 0.0
    %1890 = vmatpush1.msra.mxu0 0.0
    %1891 = vmatprep.subr.mxu0 0.0
    %1892 = vmatpush1.msra.mxu0 0.0
    %1893 = vmatprep.subr.mxu0 0.0
    %1894 = vmatpush1.msra.mxu0 0.0
    %1895 = vmatprep.subr.mxu0 0.0
    %1896 = vmatpush1.msra.mxu0 0.0
    %1897 = vmatprep.subr.mxu0 0.0
    %1898 = vmatpush1.msra.mxu0 0.0
    %1899 = vmatprep.subr.mxu0 0.0
    %1900 = vmatpush1.msra.mxu0 0.0
    %1901 = vmatprep.subr.mxu0 0.0
    %1902 = vmatpush1.msra.mxu0 0.0
    %1903 = vmatprep.subr.mxu0 0.0
    %1904 = vmatpush1.msra.mxu0 0.0
    %1905 = vmatprep.subr.mxu0 0.0
    %1906 = vmatpush1.msra.mxu0 0.0
    %1907 = vmatprep.subr.mxu0 0.0
    %1908 = vmatpush1.msra.mxu0 0.0
    %1909 = vmatprep.subr.mxu0 0.0
    %1910 = vmatpush1.msra.mxu0 0.0
    %1911 = vmatprep.subr.mxu0 0.0
    %1912 = vmatpush1.msra.mxu0 0.0
    %1913 = vmatprep.subr.mxu0 %v1870
    %1914 = vmatpush1.msra.mxu0 %v1869
    %1915 = vmatprep.subr.mxu0 %v1862
    %1916 = vmatpush1.msra.mxu0 %v1861
    %1917 = vmatprep.subr.mxu0 %v1854
    %1918 = vmatpush1.msra.mxu0 %v1853
    %1919 = vmatprep.subr.mxu0 %v1846
    %1920 = vmatpush1.msra.mxu0 %v1845
    %1921 = vmatprep.subr.mxu0 0.0
    %1922 = vmatpush2.msra.mxu0 0.0
    %1923 = vmatprep.subr.mxu0 0.0
    %1924 = vmatpush2.msra.mxu0 0.0
    %1925 = vmatprep.subr.mxu0 0.0
    %1926 = vmatpush2.msra.mxu0 0.0
    %1927 = vmatprep.subr.mxu0 0.0
    %1928 = vmatpush2.msra.mxu0 0.0
    %1929 = vmatprep.subr.mxu0 0.0
    %1930 = vmatpush2.msra.mxu0 0.0
    %1931 = vmatprep.subr.mxu0 0.0
    %1932 = vmatpush2.msra.mxu0 0.0
    %1933 = vmatprep.subr.mxu0 0.0
    %1934 = vmatpush2.msra.mxu0 0.0
    %1935 = vmatprep.subr.mxu0 0.0
    %1936 = vmatpush2.msra.mxu0 0.0
    %1937 = vmatprep.subr.mxu0 0.0
    %1938 = vmatpush2.msra.mxu0 0.0
    %1939 = vmatprep.subr.mxu0 0.0
    %1940 = vmatpush2.msra.mxu0 0.0
    %1941 = vmatprep.subr.mxu0 0.0
    %1942 = vmatpush2.msra.mxu0 0.0
    %1943 = vmatprep.subr.mxu0 0.0
    %1944 = vmatpush2.msra.mxu0 0.0
    %1945 = vmatprep.subr.mxu0 0.0
    %1946 = vmatpush2.msra.mxu0 0.0
    %1947 = vmatprep.subr.mxu0 0.0
    %1948 = vmatpush2.msra.mxu0 0.0
    %1949 = vmatprep.subr.mxu0 0.0
    %1950 = vmatpush2.msra.mxu0 0.0
    %1951 = vmatprep.subr.mxu0 0.0
    %1952 = vmatpush2.msra.mxu0 0.0
    %1953 = vmatprep.mubr.f32.mxu0 0.0
    %1954 = vmatmul.mubr.f32.gmra.mxu0 %v1878
    %v1955 = vpop.f32.mrf.mxu0
    %v1956 = vadd.f32 0.0, %v1955
    %v1957 = vpop.f32.mrf.mxu0
    %v1958 = vadd.f32 0.0, %v1957
    %1959 = vmatprep.mubr.f32.mxu0 0.0
    %1960 = vmatmul.mubr.f32.gmra.mxu0 %v1881
    %v1961 = vpop.f32.mrf.mxu0
    %v1962 = vadd.f32 0.0, %v1961
    %v1963 = vpop.f32.mrf.mxu0
    %v1964 = vadd.f32 0.0, %v1963
    %1965 = vmatprep.mubr.f32.mxu0 0.0
    %1966 = vmatmul.mubr.f32.gmra.mxu0 %v1884
    %v1967 = vpop.f32.mrf.mxu0
    %v1968 = vadd.f32 0.0, %v1967
    %v1969 = vpop.f32.mrf.mxu0
    %v1970 = vadd.f32 0.0, %v1969
    %1971 = vmatprep.mubr.f32.mxu0 0.0
    %1972 = vmatmul.mubr.f32.gmra.mxu0 %v1887
    %v1973 = vpop.f32.mrf.mxu0
    %v1974 = vadd.f32 0.0, %v1973
    %v1975 = vpop.f32.mrf.mxu0
    %v1976 = vadd.f32 0.0, %v1975
    %1977 = vdwg.mxu0
    %1978 = vmatprep.subr.mxu0 0.0
    %1979 = vmatpush1.msra.mxu0 0.0
    %1980 = vmatprep.subr.mxu0 0.0
    %1981 = vmatpush1.msra.mxu0 0.0
    %1982 = vmatprep.subr.mxu0 0.0
    %1983 = vmatpush1.msra.mxu0 0.0
    %1984 = vmatprep.subr.mxu0 0.0
    %1985 = vmatpush1.msra.mxu0 0.0
    %1986 = vmatprep.subr.mxu0 0.0
    %1987 = vmatpush1.msra.mxu0 0.0
    %1988 = vmatprep.subr.mxu0 0.0
    %1989 = vmatpush1.msra.mxu0 0.0
    %1990 = vmatprep.subr.mxu0 0.0
    %1991 = vmatpush1.msra.mxu0 0.0
    %1992 = vmatprep.subr.mxu0 0.0
    %1993 = vmatpush1.msra.mxu0 0.0
    %1994 = vmatprep.subr.mxu0 0.0
    %1995 = vmatpush1.msra.mxu0 0.0
    %1996 = vmatprep.subr.mxu0 0.0
    %1997 = vmatpush1.msra.mxu0 0.0
    %1998 = vmatprep.subr.mxu0 0.0
    %1999 = vmatpush1.msra.mxu0 0.0
    %2000 = vmatprep.subr.mxu0 0.0
    %2001 = vmatpush1.msra.mxu0 0.0
    %2002 = vmatprep.subr.mxu0 %v1872
    %2003 = vmatpush1.msra.mxu0 %v1871
    %2004 = vmatprep.subr.mxu0 %v1864
    %2005 = vmatpush1.msra.mxu0 %v1863
    %2006 = vmatprep.subr.mxu0 %v1856
    %2007 = vmatpush1.msra.mxu0 %v1855
    %2008 = vmatprep.subr.mxu0 %v1848
    %2009 = vmatpush1.msra.mxu0 %v1847
    %2010 = vmatprep.subr.mxu0 0.0
    %2011 = vmatpush2.msra.mxu0 0.0
    %2012 = vmatprep.subr.mxu0 0.0
    %2013 = vmatpush2.msra.mxu0 0.0
    %2014 = vmatprep.subr.mxu0 0.0
    %2015 = vmatpush2.msra.mxu0 0.0
    %2016 = vmatprep.subr.mxu0 0.0
    %2017 = vmatpush2.msra.mxu0 0.0
    %2018 = vmatprep.subr.mxu0 0.0
    %2019 = vmatpush2.msra.mxu0 0.0
    %2020 = vmatprep.subr.mxu0 0.0
    %2021 = vmatpush2.msra.mxu0 0.0
    %2022 = vmatprep.subr.mxu0 0.0
    %2023 = vmatpush2.msra.mxu0 0.0
    %2024 = vmatprep.subr.mxu0 0.0
    %2025 = vmatpush2.msra.mxu0 0.0
    %2026 = vmatprep.subr.mxu0 0.0
    %2027 = vmatpush2.msra.mxu0 0.0
    %2028 = vmatprep.subr.mxu0 0.0
    %2029 = vmatpush2.msra.mxu0 0.0
    %2030 = vmatprep.subr.mxu0 0.0
    %2031 = vmatpush2.msra.mxu0 0.0
    %2032 = vmatprep.subr.mxu0 0.0
    %2033 = vmatpush2.msra.mxu0 0.0
    %2034 = vmatprep.subr.mxu0 0.0
    %2035 = vmatpush2.msra.mxu0 0.0
    %2036 = vmatprep.subr.mxu0 0.0
    %2037 = vmatpush2.msra.mxu0 0.0
    %2038 = vmatprep.subr.mxu0 0.0
    %2039 = vmatpush2.msra.mxu0 0.0
    %2040 = vmatprep.subr.mxu0 0.0
    %2041 = vmatpush2.msra.mxu0 0.0
    %2042 = vmatprep.mubr.f32.mxu0 0.0
    %2043 = vmatmul.mubr.f32.gmra.mxu0 %v1878
    %v2044 = vpop.f32.mrf.mxu0
    %v2045 = vadd.f32 0.0, %v2044
    %v2046 = vpop.f32.mrf.mxu0
    %v2047 = vadd.f32 0.0, %v2046
    %2048 = vmatprep.mubr.f32.mxu0 0.0
    %2049 = vmatmul.mubr.f32.gmra.mxu0 %v1881
    %v2050 = vpop.f32.mrf.mxu0
    %v2051 = vadd.f32 0.0, %v2050
    %v2052 = vpop.f32.mrf.mxu0
    %v2053 = vadd.f32 0.0, %v2052
    %2054 = vmatprep.mubr.f32.mxu0 0.0
    %2055 = vmatmul.mubr.f32.gmra.mxu0 %v1884
    %v2056 = vpop.f32.mrf.mxu0
    %v2057 = vadd.f32 0.0, %v2056
    %v2058 = vpop.f32.mrf.mxu0
    %v2059 = vadd.f32 0.0, %v2058
    %2060 = vmatprep.mubr.f32.mxu0 0.0
    %2061 = vmatmul.mubr.f32.gmra.mxu0 %v1887
    %v2062 = vpop.f32.mrf.mxu0
    %v2063 = vadd.f32 0.0, %v2062
    %v2064 = vpop.f32.mrf.mxu0
    %v2065 = vadd.f32 0.0, %v2064
    %2066 = vdwg.mxu0
    %2067 = vmatprep.subr.mxu0 0.0
    %2068 = vmatpush1.msra.mxu0 0.0
    %2069 = vmatprep.subr.mxu0 0.0
    %2070 = vmatpush1.msra.mxu0 0.0
    %2071 = vmatprep.subr.mxu0 0.0
    %2072 = vmatpush1.msra.mxu0 0.0
    %2073 = vmatprep.subr.mxu0 0.0
    %2074 = vmatpush1.msra.mxu0 0.0
    %2075 = vmatprep.subr.mxu0 0.0
    %2076 = vmatpush1.msra.mxu0 0.0
    %2077 = vmatprep.subr.mxu0 0.0
    %2078 = vmatpush1.msra.mxu0 0.0
    %2079 = vmatprep.subr.mxu0 0.0
    %2080 = vmatpush1.msra.mxu0 0.0
    %2081 = vmatprep.subr.mxu0 0.0
    %2082 = vmatpush1.msra.mxu0 0.0
    %2083 = vmatprep.subr.mxu0 0.0
    %2084 = vmatpush1.msra.mxu0 0.0
    %2085 = vmatprep.subr.mxu0 0.0
    %2086 = vmatpush1.msra.mxu0 0.0
    %2087 = vmatprep.subr.mxu0 0.0
    %2088 = vmatpush1.msra.mxu0 0.0
    %2089 = vmatprep.subr.mxu0 0.0
    %2090 = vmatpush1.msra.mxu0 0.0
    %2091 = vmatprep.subr.mxu0 %v1874
    %2092 = vmatpush1.msra.mxu0 %v1873
    %2093 = vmatprep.subr.mxu0 %v1866
    %2094 = vmatpush1.msra.mxu0 %v1865
    %2095 = vmatprep.subr.mxu0 %v1858
    %2096 = vmatpush1.msra.mxu0 %v1857
    %2097 = vmatprep.subr.mxu0 %v1850
    %2098 = vmatpush1.msra.mxu0 %v1849
    %2099 = vmatprep.subr.mxu0 0.0
    %2100 = vmatpush2.msra.mxu0 0.0
    %2101 = vmatprep.subr.mxu0 0.0
    %2102 = vmatpush2.msra.mxu0 0.0
    %2103 = vmatprep.subr.mxu0 0.0
    %2104 = vmatpush2.msra.mxu0 0.0
    %2105 = vmatprep.subr.mxu0 0.0
    %2106 = vmatpush2.msra.mxu0 0.0
    %2107 = vmatprep.subr.mxu0 0.0
    %2108 = vmatpush2.msra.mxu0 0.0
    %2109 = vmatprep.subr.mxu0 0.0
    %2110 = vmatpush2.msra.mxu0 0.0
    %2111 = vmatprep.subr.mxu0 0.0
    %2112 = vmatpush2.msra.mxu0 0.0
    %2113 = vmatprep.subr.mxu0 0.0
    %2114 = vmatpush2.msra.mxu0 0.0
    %2115 = vmatprep.subr.mxu0 0.0
    %2116 = vmatpush2.msra.mxu0 0.0
    %2117 = vmatprep.subr.mxu0 0.0
    %2118 = vmatpush2.msra.mxu0 0.0
    %2119 = vmatprep.subr.mxu0 0.0
    %2120 = vmatpush2.msra.mxu0 0.0
    %2121 = vmatprep.subr.mxu0 0.0
    %2122 = vmatpush2.msra.mxu0 0.0
    %2123 = vmatprep.subr.mxu0 0.0
    %2124 = vmatpush2.msra.mxu0 0.0
    %2125 = vmatprep.subr.mxu0 0.0
    %2126 = vmatpush2.msra.mxu0 0.0
    %2127 = vmatprep.subr.mxu0 0.0
    %2128 = vmatpush2.msra.mxu0 0.0
    %2129 = vmatprep.subr.mxu0 0.0
    %2130 = vmatpush2.msra.mxu0 0.0
    %2131 = vmatprep.mubr.f32.mxu0 0.0
    %2132 = vmatmul.mubr.f32.gmra.mxu0 %v1878
    %v2133 = vpop.f32.mrf.mxu0
    %v2134 = vadd.f32 0.0, %v2133
    %v2135 = vpop.f32.mrf.mxu0
    %v2136 = vadd.f32 0.0, %v2135
    %2137 = vmatprep.mubr.f32.mxu0 0.0
    %2138 = vmatmul.mubr.f32.gmra.mxu0 %v1881
    %v2139 = vpop.f32.mrf.mxu0
    %v2140 = vadd.f32 0.0, %v2139
    %v2141 = vpop.f32.mrf.mxu0
    %v2142 = vadd.f32 0.0, %v2141
    %2143 = vmatprep.mubr.f32.mxu0 0.0
    %2144 = vmatmul.mubr.f32.gmra.mxu0 %v1884
    %v2145 = vpop.f32.mrf.mxu0
    %v2146 = vadd.f32 0.0, %v2145
    %v2147 = vpop.f32.mrf.mxu0
    %v2148 = vadd.f32 0.0, %v2147
    %2149 = vmatprep.mubr.f32.mxu0 0.0
    %2150 = vmatmul.mubr.f32.gmra.mxu0 %v1887
    %v2151 = vpop.f32.mrf.mxu0
    %v2152 = vadd.f32 0.0, %v2151
    %v2153 = vpop.f32.mrf.mxu0
    %v2154 = vadd.f32 0.0, %v2153
    %2155 = vdwg.mxu0
    %2156 = vmatprep.subr.mxu0 0.0
    %2157 = vmatpush1.msra.mxu0 0.0
    %2158 = vmatprep.subr.mxu0 0.0
    %2159 = vmatpush1.msra.mxu0 0.0
    %2160 = vmatprep.subr.mxu0 0.0
    %2161 = vmatpush1.msra.mxu0 0.0
    %2162 = vmatprep.subr.mxu0 0.0
    %2163 = vmatpush1.msra.mxu0 0.0
    %2164 = vmatprep.subr.mxu0 0.0
    %2165 = vmatpush1.msra.mxu0 0.0
    %2166 = vmatprep.subr.mxu0 0.0
    %2167 = vmatpush1.msra.mxu0 0.0
    %2168 = vmatprep.subr.mxu0 0.0
    %2169 = vmatpush1.msra.mxu0 0.0
    %2170 = vmatprep.subr.mxu0 0.0
    %2171 = vmatpush1.msra.mxu0 0.0
    %2172 = vmatprep.subr.mxu0 0.0
    %2173 = vmatpush1.msra.mxu0 0.0
    %2174 = vmatprep.subr.mxu0 0.0
    %2175 = vmatpush1.msra.mxu0 0.0
    %2176 = vmatprep.subr.mxu0 0.0
    %2177 = vmatpush1.msra.mxu0 0.0
    %2178 = vmatprep.subr.mxu0 0.0
    %2179 = vmatpush1.msra.mxu0 0.0
    %2180 = vmatprep.subr.mxu0 %v1876
    %2181 = vmatpush1.msra.mxu0 %v1875
    %2182 = vmatprep.subr.mxu0 %v1868
    %2183 = vmatpush1.msra.mxu0 %v1867
    %2184 = vmatprep.subr.mxu0 %v1860
    %2185 = vmatpush1.msra.mxu0 %v1859
    %2186 = vmatprep.subr.mxu0 %v1852
    %2187 = vmatpush1.msra.mxu0 %v1851
    %2188 = vmatprep.subr.mxu0 0.0
    %2189 = vmatpush2.msra.mxu0 0.0
    %2190 = vmatprep.subr.mxu0 0.0
    %2191 = vmatpush2.msra.mxu0 0.0
    %2192 = vmatprep.subr.mxu0 0.0
    %2193 = vmatpush2.msra.mxu0 0.0
    %2194 = vmatprep.subr.mxu0 0.0
    %2195 = vmatpush2.msra.mxu0 0.0
    %2196 = vmatprep.subr.mxu0 0.0
    %2197 = vmatpush2.msra.mxu0 0.0
    %2198 = vmatprep.subr.mxu0 0.0
    %2199 = vmatpush2.msra.mxu0 0.0
    %2200 = vmatprep.subr.mxu0 0.0
    %2201 = vmatpush2.msra.mxu0 0.0
    %2202 = vmatprep.subr.mxu0 0.0
    %2203 = vmatpush2.msra.mxu0 0.0
    %2204 = vmatprep.subr.mxu0 0.0
    %2205 = vmatpush2.msra.mxu0 0.0
    %2206 = vmatprep.subr.mxu0 0.0
    %2207 = vmatpush2.msra.mxu0 0.0
    %2208 = vmatprep.subr.mxu0 0.0
    %2209 = vmatpush2.msra.mxu0 0.0
    %2210 = vmatprep.subr.mxu0 0.0
    %2211 = vmatpush2.msra.mxu0 0.0
    %2212 = vmatprep.subr.mxu0 0.0
    %2213 = vmatpush2.msra.mxu0 0.0
    %2214 = vmatprep.subr.mxu0 0.0
    %2215 = vmatpush2.msra.mxu0 0.0
    %2216 = vmatprep.subr.mxu0 0.0
    %2217 = vmatpush2.msra.mxu0 0.0
    %2218 = vmatprep.subr.mxu0 0.0
    %2219 = vmatpush2.msra.mxu0 0.0
    %2220 = vmatprep.mubr.f32.mxu0 0.0
    %2221 = vmatmul.mubr.f32.gmra.mxu0 %v1878
    %v2222 = vpop.f32.mrf.mxu0
    %v2223 = vadd.f32 0.0, %v2222
    %v2224 = vpop.f32.mrf.mxu0
    %v2225 = vadd.f32 0.0, %v2224
    %2226 = vmatprep.mubr.f32.mxu0 0.0
    %2227 = vmatmul.mubr.f32.gmra.mxu0 %v1881
    %v2228 = vpop.f32.mrf.mxu0
    %v2229 = vadd.f32 0.0, %v2228
    %v2230 = vpop.f32.mrf.mxu0
    %v2231 = vadd.f32 0.0, %v2230
    %2232 = vmatprep.mubr.f32.mxu0 0.0
    %2233 = vmatmul.mubr.f32.gmra.mxu0 %v1884
    %v2234 = vpop.f32.mrf.mxu0
    %v2235 = vadd.f32 0.0, %v2234
    %v2236 = vpop.f32.mrf.mxu0
    %v2237 = vadd.f32 0.0, %v2236
    %2238 = vmatprep.mubr.f32.mxu0 0.0
    %2239 = vmatmul.mubr.f32.gmra.mxu0 %v1887
    %v2240 = vpop.f32.mrf.mxu0
    %v2241 = vadd.f32 0.0, %v2240
    %v2242 = vpop.f32.mrf.mxu0
    %v2243 = vadd.f32 0.0, %v2242
    %2244 = vdwg.mxu0
    %v2245 = vld [vmem:[%s10] sm:$0xff]
    %v2246 = vld [vmem:[%s10 + $0x8] sm:$0xff]
    %v2247 = vld [vmem:[%s10 + $0x10] sm:$0xff]
    %v2248 = vld [vmem:[%s10 + $0x18] sm:$0xff]
    %v2249 = vld [vmem:[%s10 + $0x20] sm:$0xff]
    %v2250 = vld [vmem:[%s10 + $0x28] sm:$0xff]
    %v2251 = vld [vmem:[%s10 + $0x30] sm:$0xff]
    %v2252 = vld [vmem:[%s10 + $0x38] sm:$0xff]
    %v2253 = vld [vmem:[%s10 + $0x40] sm:$0xff]
    %v2254 = vld [vmem:[%s10 + $0x48] sm:$0xff]
    %v2255 = vld [vmem:[%s10 + $0x50] sm:$0xff]
    %v2256 = vld [vmem:[%s10 + $0x58] sm:$0xff]
    %v2257 = vld [vmem:[%s10 + $0x60] sm:$0xff]
    %v2258 = vld [vmem:[%s10 + $0x68] sm:$0xff]
    %v2259 = vld [vmem:[%s10 + $0x70] sm:$0xff]
    %v2260 = vld [vmem:[%s10 + $0x78] sm:$0xff]
    %v2261 = vld [vmem:[%s10 + $0x80] sm:$0xff]
    %v2262 = vld [vmem:[%s10 + $0x88] sm:$0xff]
    %v2263 = vld [vmem:[%s10 + $0x90] sm:$0xff]
    %v2264 = vld [vmem:[%s10 + $0x98] sm:$0xff]
    %v2265 = vld [vmem:[%s10 + $0xa0] sm:$0xff]
    %v2266 = vld [vmem:[%s10 + $0xa8] sm:$0xff]
    %v2267 = vld [vmem:[%s10 + $0xb0] sm:$0xff]
    %v2268 = vld [vmem:[%s10 + $0xb8] sm:$0xff]
    %v2269 = vld [vmem:[%s10 + $0xc0] sm:$0xff]
    %v2270 = vld [vmem:[%s10 + $0xc8] sm:$0xff]
    %v2271 = vld [vmem:[%s10 + $0xd0] sm:$0xff]
    %v2272 = vld [vmem:[%s10 + $0xd8] sm:$0xff]
    %v2273 = vld [vmem:[%s10 + $0xe0] sm:$0xff]
    %v2274 = vld [vmem:[%s10 + $0xe8] sm:$0xff]
    %v2275 = vld [vmem:[%s10 + $0xf0] sm:$0xff]
    %v2276 = vld [vmem:[%s10 + $0xf8] sm:$0xff]
    %v2277 = vmul.f32 %v1956, %v2245
    %v2278 = vmul.f32 %v1958, %v2246
    %v2279 = vmul.f32 %v2045, %v2247
    %v2280 = vmul.f32 %v2047, %v2248
    %v2281 = vmul.f32 %v2134, %v2249
    %v2282 = vmul.f32 %v2136, %v2250
    %v2283 = vmul.f32 %v2223, %v2251
    %v2284 = vmul.f32 %v2225, %v2252
    %v2285 = vmul.f32 %v1962, %v2253
    %v2286 = vmul.f32 %v1964, %v2254
    %v2287 = vmul.f32 %v2051, %v2255
    %v2288 = vmul.f32 %v2053, %v2256
    %v2289 = vmul.f32 %v2140, %v2257
    %v2290 = vmul.f32 %v2142, %v2258
    %v2291 = vmul.f32 %v2229, %v2259
    %v2292 = vmul.f32 %v2231, %v2260
    %v2293 = vmul.f32 %v1968, %v2261
    %v2294 = vmul.f32 %v1970, %v2262
    %v2295 = vmul.f32 %v2057, %v2263
    %v2296 = vmul.f32 %v2059, %v2264
    %v2297 = vmul.f32 %v2146, %v2265
    %v2298 = vmul.f32 %v2148, %v2266
    %v2299 = vmul.f32 %v2235, %v2267
    %v2300 = vmul.f32 %v2237, %v2268
    %v2301 = vmul.f32 %v1974, %v2269
    %v2302 = vmul.f32 %v1976, %v2270
    %v2303 = vmul.f32 %v2063, %v2271
    %v2304 = vmul.f32 %v2065, %v2272
    %v2305 = vmul.f32 %v2152, %v2273
    %v2306 = vmul.f32 %v2154, %v2274
    %v2307 = vmul.f32 %v2241, %v2275
    %v2308 = vmul.f32 %v2243, %v2276
    %v2309 = vld [vmem:[%s11] sm:$0x3]
    %v2311 = vsel %vm74, %v2309, 0
    %2313 = vmatprep.subr.mxu0 0.0
    %2314 = vmatpush1.msra.mxu0 0.0
    %2315 = vmatprep.subr.mxu0 0.0
    %2316 = vmatpush1.msra.mxu0 0.0
    %2317 = vmatprep.subr.mxu0 0.0
    %2318 = vmatpush1.msra.mxu0 0.0
    %2319 = vmatprep.subr.mxu0 0.0
    %2320 = vmatpush1.msra.mxu0 0.0
    %2321 = vmatprep.subr.mxu0 0.0
    %2322 = vmatpush1.msra.mxu0 0.0
    %2323 = vmatprep.subr.mxu0 0.0
    %2324 = vmatpush1.msra.mxu0 0.0
    %2325 = vmatprep.subr.mxu0 0.0
    %2326 = vmatpush1.msra.mxu0 0.0
    %2327 = vmatprep.subr.mxu0 0.0
    %2328 = vmatpush1.msra.mxu0 0.0
    %2329 = vmatprep.subr.mxu0 0.0
    %2330 = vmatpush1.msra.mxu0 0.0
    %2331 = vmatprep.subr.mxu0 0.0
    %2332 = vmatpush1.msra.mxu0 0.0
    %2333 = vmatprep.subr.mxu0 0.0
    %2334 = vmatpush1.msra.mxu0 0.0
    %2335 = vmatprep.subr.mxu0 0.0
    %2336 = vmatpush1.msra.mxu0 0.0
    %2337 = vmatprep.subr.mxu0 %v2302
    %2338 = vmatpush1.msra.mxu0 %v2301
    %2339 = vmatprep.subr.mxu0 %v2294
    %2340 = vmatpush1.msra.mxu0 %v2293
    %2341 = vmatprep.subr.mxu0 %v2286
    %2342 = vmatpush1.msra.mxu0 %v2285
    %2343 = vmatprep.subr.mxu0 %v2278
    %2344 = vmatpush1.msra.mxu0 %v2277
    %2345 = vmatprep.subr.mxu0 0.0
    %2346 = vmatpush2.msra.mxu0 0.0
    %2347 = vmatprep.subr.mxu0 0.0
    %2348 = vmatpush2.msra.mxu0 0.0
    %2349 = vmatprep.subr.mxu0 0.0
    %2350 = vmatpush2.msra.mxu0 0.0
    %2351 = vmatprep.subr.mxu0 0.0
    %2352 = vmatpush2.msra.mxu0 0.0
    %2353 = vmatprep.subr.mxu0 0.0
    %2354 = vmatpush2.msra.mxu0 0.0
    %2355 = vmatprep.subr.mxu0 0.0
    %2356 = vmatpush2.msra.mxu0 0.0
    %2357 = vmatprep.subr.mxu0 0.0
    %2358 = vmatpush2.msra.mxu0 0.0
    %2359 = vmatprep.subr.mxu0 0.0
    %2360 = vmatpush2.msra.mxu0 0.0
    %2361 = vmatprep.subr.mxu0 0.0
    %2362 = vmatpush2.msra.mxu0 0.0
    %2363 = vmatprep.subr.mxu0 0.0
    %2364 = vmatpush2.msra.mxu0 0.0
    %2365 = vmatprep.subr.mxu0 0.0
    %2366 = vmatpush2.msra.mxu0 0.0
    %2367 = vmatprep.subr.mxu0 0.0
    %2368 = vmatpush2.msra.mxu0 0.0
    %2369 = vmatprep.subr.mxu0 0.0
    %2370 = vmatpush2.msra.mxu0 0.0
    %2371 = vmatprep.subr.mxu0 0.0
    %2372 = vmatpush2.msra.mxu0 0.0
    %2373 = vmatprep.subr.mxu0 0.0
    %2374 = vmatpush2.msra.mxu0 0.0
    %2375 = vmatprep.subr.mxu0 0.0
    %2376 = vmatpush2.msra.mxu0 0.0
    %2377 = vmatprep.mubr.f32.mxu0 0.0
    %2378 = vmatmul.mubr.f32.gmra.mxu0 %v2311
    %v2379 = vpop.f32.mrf.mxu0
    %v2380 = vadd.f32 0.0, %v2379
    %v2381 = vpop.f32.mrf.mxu0
    %v2382 = vadd.f32 0.0, %v2381
    %2383 = vdwg.mxu0
    %2384 = vmatprep.subr.mxu0 0.0
    %2385 = vmatpush1.msra.mxu0 0.0
    %2386 = vmatprep.subr.mxu0 0.0
    %2387 = vmatpush1.msra.mxu0 0.0
    %2388 = vmatprep.subr.mxu0 0.0
    %2389 = vmatpush1.msra.mxu0 0.0
    %2390 = vmatprep.subr.mxu0 0.0
    %2391 = vmatpush1.msra.mxu0 0.0
    %2392 = vmatprep.subr.mxu0 0.0
    %2393 = vmatpush1.msra.mxu0 0.0
    %2394 = vmatprep.subr.mxu0 0.0
    %2395 = vmatpush1.msra.mxu0 0.0
    %2396 = vmatprep.subr.mxu0 0.0
    %2397 = vmatpush1.msra.mxu0 0.0
    %2398 = vmatprep.subr.mxu0 0.0
    %2399 = vmatpush1.msra.mxu0 0.0
    %2400 = vmatprep.subr.mxu0 0.0
    %2401 = vmatpush1.msra.mxu0 0.0
    %2402 = vmatprep.subr.mxu0 0.0
    %2403 = vmatpush1.msra.mxu0 0.0
    %2404 = vmatprep.subr.mxu0 0.0
    %2405 = vmatpush1.msra.mxu0 0.0
    %2406 = vmatprep.subr.mxu0 0.0
    %2407 = vmatpush1.msra.mxu0 0.0
    %2408 = vmatprep.subr.mxu0 %v2304
    %2409 = vmatpush1.msra.mxu0 %v2303
    %2410 = vmatprep.subr.mxu0 %v2296
    %2411 = vmatpush1.msra.mxu0 %v2295
    %2412 = vmatprep.subr.mxu0 %v2288
    %2413 = vmatpush1.msra.mxu0 %v2287
    %2414 = vmatprep.subr.mxu0 %v2280
    %2415 = vmatpush1.msra.mxu0 %v2279
    %2416 = vmatprep.subr.mxu0 0.0
    %2417 = vmatpush2.msra.mxu0 0.0
    %2418 = vmatprep.subr.mxu0 0.0
    %2419 = vmatpush2.msra.mxu0 0.0
    %2420 = vmatprep.subr.mxu0 0.0
    %2421 = vmatpush2.msra.mxu0 0.0
    %2422 = vmatprep.subr.mxu0 0.0
    %2423 = vmatpush2.msra.mxu0 0.0
    %2424 = vmatprep.subr.mxu0 0.0
    %2425 = vmatpush2.msra.mxu0 0.0
    %2426 = vmatprep.subr.mxu0 0.0
    %2427 = vmatpush2.msra.mxu0 0.0
    %2428 = vmatprep.subr.mxu0 0.0
    %2429 = vmatpush2.msra.mxu0 0.0
    %2430 = vmatprep.subr.mxu0 0.0
    %2431 = vmatpush2.msra.mxu0 0.0
    %2432 = vmatprep.subr.mxu0 0.0
    %2433 = vmatpush2.msra.mxu0 0.0
    %2434 = vmatprep.subr.mxu0 0.0
    %2435 = vmatpush2.msra.mxu0 0.0
    %2436 = vmatprep.subr.mxu0 0.0
    %2437 = vmatpush2.msra.mxu0 0.0
    %2438 = vmatprep.subr.mxu0 0.0
    %2439 = vmatpush2.msra.mxu0 0.0
    %2440 = vmatprep.subr.mxu0 0.0
    %2441 = vmatpush2.msra.mxu0 0.0
    %2442 = vmatprep.subr.mxu0 0.0
    %2443 = vmatpush2.msra.mxu0 0.0
    %2444 = vmatprep.subr.mxu0 0.0
    %2445 = vmatpush2.msra.mxu0 0.0
    %2446 = vmatprep.subr.mxu0 0.0
    %2447 = vmatpush2.msra.mxu0 0.0
    %2448 = vmatprep.mubr.f32.mxu0 0.0
    %2449 = vmatmul.mubr.f32.gmra.mxu0 %v2311
    %v2450 = vpop.f32.mrf.mxu0
    %v2451 = vadd.f32 0.0, %v2450
    %v2452 = vpop.f32.mrf.mxu0
    %v2453 = vadd.f32 0.0, %v2452
    %2454 = vdwg.mxu0
    %2455 = vmatprep.subr.mxu0 0.0
    %2456 = vmatpush1.msra.mxu0 0.0
    %2457 = vmatprep.subr.mxu0 0.0
    %2458 = vmatpush1.msra.mxu0 0.0
    %2459 = vmatprep.subr.mxu0 0.0
    %2460 = vmatpush1.msra.mxu0 0.0
    %2461 = vmatprep.subr.mxu0 0.0
    %2462 = vmatpush1.msra.mxu0 0.0
    %2463 = vmatprep.subr.mxu0 0.0
    %2464 = vmatpush1.msra.mxu0 0.0
    %2465 = vmatprep.subr.mxu0 0.0
    %2466 = vmatpush1.msra.mxu0 0.0
    %2467 = vmatprep.subr.mxu0 0.0
    %2468 = vmatpush1.msra.mxu0 0.0
    %2469 = vmatprep.subr.mxu0 0.0
    %2470 = vmatpush1.msra.mxu0 0.0
    %2471 = vmatprep.subr.mxu0 0.0
    %2472 = vmatpush1.msra.mxu0 0.0
    %2473 = vmatprep.subr.mxu0 0.0
    %2474 = vmatpush1.msra.mxu0 0.0
    %2475 = vmatprep.subr.mxu0 0.0
    %2476 = vmatpush1.msra.mxu0 0.0
    %2477 = vmatprep.subr.mxu0 0.0
    %2478 = vmatpush1.msra.mxu0 0.0
    %2479 = vmatprep.subr.mxu0 %v2306
    %2480 = vmatpush1.msra.mxu0 %v2305
    %2481 = vmatprep.subr.mxu0 %v2298
    %2482 = vmatpush1.msra.mxu0 %v2297
    %2483 = vmatprep.subr.mxu0 %v2290
    %2484 = vmatpush1.msra.mxu0 %v2289
    %2485 = vmatprep.subr.mxu0 %v2282
    %2486 = vmatpush1.msra.mxu0 %v2281
    %2487 = vmatprep.subr.mxu0 0.0
    %2488 = vmatpush2.msra.mxu0 0.0
    %2489 = vmatprep.subr.mxu0 0.0
    %2490 = vmatpush2.msra.mxu0 0.0
    %2491 = vmatprep.subr.mxu0 0.0
    %2492 = vmatpush2.msra.mxu0 0.0
    %2493 = vmatprep.subr.mxu0 0.0
    %2494 = vmatpush2.msra.mxu0 0.0
    %2495 = vmatprep.subr.mxu0 0.0
    %2496 = vmatpush2.msra.mxu0 0.0
    %2497 = vmatprep.subr.mxu0 0.0
    %2498 = vmatpush2.msra.mxu0 0.0
    %2499 = vmatprep.subr.mxu0 0.0
    %2500 = vmatpush2.msra.mxu0 0.0
    %2501 = vmatprep.subr.mxu0 0.0
    %2502 = vmatpush2.msra.mxu0 0.0
    %2503 = vmatprep.subr.mxu0 0.0
    %2504 = vmatpush2.msra.mxu0 0.0
    %2505 = vmatprep.subr.mxu0 0.0
    %2506 = vmatpush2.msra.mxu0 0.0
    %2507 = vmatprep.subr.mxu0 0.0
    %2508 = vmatpush2.msra.mxu0 0.0
    %2509 = vmatprep.subr.mxu0 0.0
    %2510 = vmatpush2.msra.mxu0 0.0
    %2511 = vmatprep.subr.mxu0 0.0
    %2512 = vmatpush2.msra.mxu0 0.0
    %2513 = vmatprep.subr.mxu0 0.0
    %2514 = vmatpush2.msra.mxu0 0.0
    %2515 = vmatprep.subr.mxu0 0.0
    %2516 = vmatpush2.msra.mxu0 0.0
    %2517 = vmatprep.subr.mxu0 0.0
    %2518 = vmatpush2.msra.mxu0 0.0
    %2519 = vmatprep.mubr.f32.mxu0 0.0
    %2520 = vmatmul.mubr.f32.gmra.mxu0 %v2311
    %v2521 = vpop.f32.mrf.mxu0
    %v2522 = vadd.f32 0.0, %v2521
    %v2523 = vpop.f32.mrf.mxu0
    %v2524 = vadd.f32 0.0, %v2523
    %2525 = vdwg.mxu0
    %2526 = vmatprep.subr.mxu0 0.0
    %2527 = vmatpush1.msra.mxu0 0.0
    %2528 = vmatprep.subr.mxu0 0.0
    %2529 = vmatpush1.msra.mxu0 0.0
    %2530 = vmatprep.subr.mxu0 0.0
    %2531 = vmatpush1.msra.mxu0 0.0
    %2532 = vmatprep.subr.mxu0 0.0
    %2533 = vmatpush1.msra.mxu0 0.0
    %2534 = vmatprep.subr.mxu0 0.0
    %2535 = vmatpush1.msra.mxu0 0.0
    %2536 = vmatprep.subr.mxu0 0.0
    %2537 = vmatpush1.msra.mxu0 0.0
    %2538 = vmatprep.subr.mxu0 0.0
    %2539 = vmatpush1.msra.mxu0 0.0
    %2540 = vmatprep.subr.mxu0 0.0
    %2541 = vmatpush1.msra.mxu0 0.0
    %2542 = vmatprep.subr.mxu0 0.0
    %2543 = vmatpush1.msra.mxu0 0.0
    %2544 = vmatprep.subr.mxu0 0.0
    %2545 = vmatpush1.msra.mxu0 0.0
    %2546 = vmatprep.subr.mxu0 0.0
    %2547 = vmatpush1.msra.mxu0 0.0
    %2548 = vmatprep.subr.mxu0 0.0
    %2549 = vmatpush1.msra.mxu0 0.0
    %2550 = vmatprep.subr.mxu0 %v2308
    %2551 = vmatpush1.msra.mxu0 %v2307
    %2552 = vmatprep.subr.mxu0 %v2300
    %2553 = vmatpush1.msra.mxu0 %v2299
    %2554 = vmatprep.subr.mxu0 %v2292
    %2555 = vmatpush1.msra.mxu0 %v2291
    %2556 = vmatprep.subr.mxu0 %v2284
    %2557 = vmatpush1.msra.mxu0 %v2283
    %2558 = vmatprep.subr.mxu0 0.0
    %2559 = vmatpush2.msra.mxu0 0.0
    %2560 = vmatprep.subr.mxu0 0.0
    %2561 = vmatpush2.msra.mxu0 0.0
    %2562 = vmatprep.subr.mxu0 0.0
    %2563 = vmatpush2.msra.mxu0 0.0
    %2564 = vmatprep.subr.mxu0 0.0
    %2565 = vmatpush2.msra.mxu0 0.0
    %2566 = vmatprep.subr.mxu0 0.0
    %2567 = vmatpush2.msra.mxu0 0.0
    %2568 = vmatprep.subr.mxu0 0.0
    %2569 = vmatpush2.msra.mxu0 0.0
    %2570 = vmatprep.subr.mxu0 0.0
    %2571 = vmatpush2.msra.mxu0 0.0
    %2572 = vmatprep.subr.mxu0 0.0
    %2573 = vmatpush2.msra.mxu0 0.0
    %2574 = vmatprep.subr.mxu0 0.0
    %2575 = vmatpush2.msra.mxu0 0.0
    %2576 = vmatprep.subr.mxu0 0.0
    %2577 = vmatpush2.msra.mxu0 0.0
    %2578 = vmatprep.subr.mxu0 0.0
    %2579 = vmatpush2.msra.mxu0 0.0
    %2580 = vmatprep.subr.mxu0 0.0
    %2581 = vmatpush2.msra.mxu0 0.0
    %2582 = vmatprep.subr.mxu0 0.0
    %2583 = vmatpush2.msra.mxu0 0.0
    %2584 = vmatprep.subr.mxu0 0.0
    %2585 = vmatpush2.msra.mxu0 0.0
    %2586 = vmatprep.subr.mxu0 0.0
    %2587 = vmatpush2.msra.mxu0 0.0
    %2588 = vmatprep.subr.mxu0 0.0
    %2589 = vmatpush2.msra.mxu0 0.0
    %2590 = vmatprep.mubr.f32.mxu0 0.0
    %2591 = vmatmul.mubr.f32.gmra.mxu0 %v2311
    %v2592 = vpop.f32.mrf.mxu0
    %v2593 = vadd.f32 0.0, %v2592
    %v2594 = vpop.f32.mrf.mxu0
    %v2595 = vadd.f32 0.0, %v2594
    %2596 = vdwg.mxu0
    %v2597 = vld [vmem:[%s12] sm:$0xff]
    %v2598 = vld [vmem:[%s12 + $0x8] sm:$0xff]
    %v2599 = vld [vmem:[%s12 + $0x10] sm:$0xff]
    %v2600 = vld [vmem:[%s12 + $0x18] sm:$0xff]
    %v2601 = vld [vmem:[%s12 + $0x20] sm:$0xff]
    %v2602 = vld [vmem:[%s12 + $0x28] sm:$0xff]
    %v2603 = vld [vmem:[%s12 + $0x30] sm:$0xff]
    %v2604 = vld [vmem:[%s12 + $0x38] sm:$0xff]
    %v2605 = vld [vmem:[%s12 + $0x40] sm:$0xff]
    %v2606 = vld [vmem:[%s12 + $0x48] sm:$0xff]
    %v2607 = vld [vmem:[%s12 + $0x50] sm:$0xff]
    %v2608 = vld [vmem:[%s12 + $0x58] sm:$0xff]
    %v2609 = vld [vmem:[%s12 + $0x60] sm:$0xff]
    %v2610 = vld [vmem:[%s12 + $0x68] sm:$0xff]
    %v2611 = vld [vmem:[%s12 + $0x70] sm:$0xff]
    %v2612 = vld [vmem:[%s12 + $0x78] sm:$0xff]
    %v2613 = vld [vmem:[%s12 + $0x80] sm:$0xff]
    %v2614 = vld [vmem:[%s12 + $0x88] sm:$0xff]
    %v2615 = vld [vmem:[%s12 + $0x90] sm:$0xff]
    %v2616 = vld [vmem:[%s12 + $0x98] sm:$0xff]
    %v2617 = vld [vmem:[%s12 + $0xa0] sm:$0xff]
    %v2618 = vld [vmem:[%s12 + $0xa8] sm:$0xff]
    %v2619 = vld [vmem:[%s12 + $0xb0] sm:$0xff]
    %v2620 = vld [vmem:[%s12 + $0xb8] sm:$0xff]
    %v2621 = vld [vmem:[%s12 + $0xc0] sm:$0xff]
    %v2622 = vld [vmem:[%s12 + $0xc8] sm:$0xff]
    %v2623 = vld [vmem:[%s12 + $0xd0] sm:$0xff]
    %v2624 = vld [vmem:[%s12 + $0xd8] sm:$0xff]
    %v2625 = vld [vmem:[%s12 + $0xe0] sm:$0xff]
    %v2626 = vld [vmem:[%s12 + $0xe8] sm:$0xff]
    %v2627 = vld [vmem:[%s12 + $0xf0] sm:$0xff]
    %v2628 = vld [vmem:[%s12 + $0xf8] sm:$0xff]
    %v2629 = vld [vmem:[%s12 + $0x100] sm:$0xff]
    %v2630 = vld [vmem:[%s12 + $0x108] sm:$0xff]
    %v2631 = vld [vmem:[%s12 + $0x110] sm:$0xff]
    %v2632 = vld [vmem:[%s12 + $0x118] sm:$0xff]
    %v2633 = vld [vmem:[%s12 + $0x120] sm:$0xff]
    %v2634 = vld [vmem:[%s12 + $0x128] sm:$0xff]
    %v2635 = vld [vmem:[%s12 + $0x130] sm:$0xff]
    %v2636 = vld [vmem:[%s12 + $0x138] sm:$0xff]
    %v2637 = vld [vmem:[%s12 + $0x140] sm:$0xff]
    %v2638 = vld [vmem:[%s12 + $0x148] sm:$0xff]
    %v2639 = vld [vmem:[%s12 + $0x150] sm:$0xff]
    %v2640 = vld [vmem:[%s12 + $0x158] sm:$0xff]
    %v2641 = vld [vmem:[%s12 + $0x160] sm:$0xff]
    %v2642 = vld [vmem:[%s12 + $0x168] sm:$0xff]
    %v2643 = vld [vmem:[%s12 + $0x170] sm:$0xff]
    %v2644 = vld [vmem:[%s12 + $0x178] sm:$0xff]
    %v2645 = vld [vmem:[%s12 + $0x180] sm:$0xff]
    %v2646 = vld [vmem:[%s12 + $0x188] sm:$0xff]
    %v2647 = vld [vmem:[%s12 + $0x190] sm:$0xff]
    %v2648 = vld [vmem:[%s12 + $0x198] sm:$0xff]
    %v2649 = vld [vmem:[%s12 + $0x1a0] sm:$0xff]
    %v2650 = vld [vmem:[%s12 + $0x1a8] sm:$0xff]
    %v2651 = vld [vmem:[%s12 + $0x1b0] sm:$0xff]
    %v2652 = vld [vmem:[%s12 + $0x1b8] sm:$0xff]
    %v2653 = vld [vmem:[%s12 + $0x1c0] sm:$0xff]
    %v2654 = vld [vmem:[%s12 + $0x1c8] sm:$0xff]
    %v2655 = vld [vmem:[%s12 + $0x1d0] sm:$0xff]
    %v2656 = vld [vmem:[%s12 + $0x1d8] sm:$0xff]
    %v2657 = vld [vmem:[%s12 + $0x1e0] sm:$0xff]
    %v2658 = vld [vmem:[%s12 + $0x1e8] sm:$0xff]
    %v2659 = vld [vmem:[%s12 + $0x1f0] sm:$0xff]
    %v2660 = vld [vmem:[%s12 + $0x1f8] sm:$0xff]
    %v2661 = vld [vmem:[%s12 + $0x200] sm:$0xff]
    %v2662 = vld [vmem:[%s12 + $0x208] sm:$0xff]
    %v2663 = vld [vmem:[%s12 + $0x210] sm:$0xff]
    %v2664 = vld [vmem:[%s12 + $0x218] sm:$0xff]
    %v2665 = vld [vmem:[%s12 + $0x220] sm:$0xff]
    %v2666 = vld [vmem:[%s12 + $0x228] sm:$0xff]
    %v2667 = vld [vmem:[%s12 + $0x230] sm:$0xff]
    %v2668 = vld [vmem:[%s12 + $0x238] sm:$0xff]
    %v2669 = vld [vmem:[%s12 + $0x240] sm:$0xff]
    %v2670 = vld [vmem:[%s12 + $0x248] sm:$0xff]
    %v2671 = vld [vmem:[%s12 + $0x250] sm:$0xff]
    %v2672 = vld [vmem:[%s12 + $0x258] sm:$0xff]
    %v2673 = vld [vmem:[%s12 + $0x260] sm:$0xff]
    %v2674 = vld [vmem:[%s12 + $0x268] sm:$0xff]
    %v2675 = vld [vmem:[%s12 + $0x270] sm:$0xff]
    %v2676 = vld [vmem:[%s12 + $0x278] sm:$0xff]
    %v2677 = vld [vmem:[%s12 + $0x280] sm:$0xff]
    %v2678 = vld [vmem:[%s12 + $0x288] sm:$0xff]
    %v2679 = vld [vmem:[%s12 + $0x290] sm:$0xff]
    %v2680 = vld [vmem:[%s12 + $0x298] sm:$0xff]
    %v2681 = vld [vmem:[%s12 + $0x2a0] sm:$0xff]
    %v2682 = vld [vmem:[%s12 + $0x2a8] sm:$0xff]
    %v2683 = vld [vmem:[%s12 + $0x2b0] sm:$0xff]
    %v2684 = vld [vmem:[%s12 + $0x2b8] sm:$0xff]
    %v2685 = vld [vmem:[%s12 + $0x2c0] sm:$0xff]
    %v2686 = vld [vmem:[%s12 + $0x2c8] sm:$0xff]
    %v2687 = vld [vmem:[%s12 + $0x2d0] sm:$0xff]
    %v2688 = vld [vmem:[%s12 + $0x2d8] sm:$0xff]
    %v2689 = vld [vmem:[%s12 + $0x2e0] sm:$0xff]
    %v2690 = vld [vmem:[%s12 + $0x2e8] sm:$0xff]
    %v2691 = vld [vmem:[%s12 + $0x2f0] sm:$0xff]
    %v2692 = vld [vmem:[%s12 + $0x2f8] sm:$0xff]
    %v2693 = vld [vmem:[%s12 + $0x300] sm:$0xff]
    %v2694 = vld [vmem:[%s12 + $0x308] sm:$0xff]
    %v2695 = vld [vmem:[%s12 + $0x310] sm:$0xff]
    %v2696 = vld [vmem:[%s12 + $0x318] sm:$0xff]
    %v2697 = vld [vmem:[%s12 + $0x320] sm:$0xff]
    %v2698 = vld [vmem:[%s12 + $0x328] sm:$0xff]
    %v2699 = vld [vmem:[%s12 + $0x330] sm:$0xff]
    %v2700 = vld [vmem:[%s12 + $0x338] sm:$0xff]
    %v2701 = vld [vmem:[%s12 + $0x340] sm:$0xff]
    %v2702 = vld [vmem:[%s12 + $0x348] sm:$0xff]
    %v2703 = vld [vmem:[%s12 + $0x350] sm:$0xff]
    %v2704 = vld [vmem:[%s12 + $0x358] sm:$0xff]
    %v2705 = vld [vmem:[%s12 + $0x360] sm:$0xff]
    %v2706 = vld [vmem:[%s12 + $0x368] sm:$0xff]
    %v2707 = vld [vmem:[%s12 + $0x370] sm:$0xff]
    %v2708 = vld [vmem:[%s12 + $0x378] sm:$0xff]
    %v2709 = vld [vmem:[%s12 + $0x380] sm:$0xff]
    %v2710 = vld [vmem:[%s12 + $0x388] sm:$0xff]
    %v2711 = vld [vmem:[%s12 + $0x390] sm:$0xff]
    %v2712 = vld [vmem:[%s12 + $0x398] sm:$0xff]
    %v2713 = vld [vmem:[%s12 + $0x3a0] sm:$0xff]
    %v2714 = vld [vmem:[%s12 + $0x3a8] sm:$0xff]
    %v2715 = vld [vmem:[%s12 + $0x3b0] sm:$0xff]
    %v2716 = vld [vmem:[%s12 + $0x3b8] sm:$0xff]
    %v2717 = vld [vmem:[%s12 + $0x3c0] sm:$0xff]
    %v2718 = vld [vmem:[%s12 + $0x3c8] sm:$0xff]
    %v2719 = vld [vmem:[%s12 + $0x3d0] sm:$0xff]
    %v2720 = vld [vmem:[%s12 + $0x3d8] sm:$0xff]
    %v2721 = vld [vmem:[%s12 + $0x3e0] sm:$0xff]
    %v2722 = vld [vmem:[%s12 + $0x3e8] sm:$0xff]
    %v2723 = vld [vmem:[%s12 + $0x3f0] sm:$0xff]
    %v2724 = vld [vmem:[%s12 + $0x3f8] sm:$0xff]
    %v2725 = vld [vmem:[%s1 + $0x4] ss:$0 sm:$0xff]
    %2726 = vmatprep.subr.mxu0 0.0
    %2727 = vmatpush1.msra.mxu0 %v2612
    %2728 = vmatprep.subr.mxu0 0.0
    %2729 = vmatpush1.msra.mxu0 %v2611
    %2730 = vmatprep.subr.mxu0 0.0
    %2731 = vmatpush1.msra.mxu0 %v2610
    %2732 = vmatprep.subr.mxu0 0.0
    %2733 = vmatpush1.msra.mxu0 %v2609
    %2734 = vmatprep.subr.mxu0 0.0
    %2735 = vmatpush1.msra.mxu0 %v2608
    %2736 = vmatprep.subr.mxu0 0.0
    %2737 = vmatpush1.msra.mxu0 %v2607
    %2738 = vmatprep.subr.mxu0 0.0
    %2739 = vmatpush1.msra.mxu0 %v2606
    %2740 = vmatprep.subr.mxu0 0.0
    %2741 = vmatpush1.msra.mxu0 %v2605
    %2742 = vmatprep.subr.mxu0 0.0
    %2743 = vmatpush1.msra.mxu0 %v2604
    %2744 = vmatprep.subr.mxu0 0.0
    %2745 = vmatpush1.msra.mxu0 %v2603
    %2746 = vmatprep.subr.mxu0 0.0
    %2747 = vmatpush1.msra.mxu0 %v2602
    %2748 = vmatprep.subr.mxu0 0.0
    %2749 = vmatpush1.msra.mxu0 %v2601
    %2750 = vmatprep.subr.mxu0 0.0
    %2751 = vmatpush1.msra.mxu0 %v2600
    %2752 = vmatprep.subr.mxu0 0.0
    %2753 = vmatpush1.msra.mxu0 %v2599
    %2754 = vmatprep.subr.mxu0 0.0
    %2755 = vmatpush1.msra.mxu0 %v2598
    %2756 = vmatprep.subr.mxu0 0.0
    %2757 = vmatpush1.msra.mxu0 %v2597
    %2758 = vmatprep.subr.mxu0 0.0
    %2759 = vmatpush2.msra.mxu0 %v2628
    %2760 = vmatprep.subr.mxu0 0.0
    %2761 = vmatpush2.msra.mxu0 %v2627
    %2762 = vmatprep.subr.mxu0 0.0
    %2763 = vmatpush2.msra.mxu0 %v2626
    %2764 = vmatprep.subr.mxu0 0.0
    %2765 = vmatpush2.msra.mxu0 %v2625
    %2766 = vmatprep.subr.mxu0 0.0
    %2767 = vmatpush2.msra.mxu0 %v2624
    %2768 = vmatprep.subr.mxu0 0.0
    %2769 = vmatpush2.msra.mxu0 %v2623
    %2770 = vmatprep.subr.mxu0 0.0
    %2771 = vmatpush2.msra.mxu0 %v2622
    %2772 = vmatprep.subr.mxu0 0.0
    %2773 = vmatpush2.msra.mxu0 %v2621
    %2774 = vmatprep.subr.mxu0 0.0
    %2775 = vmatpush2.msra.mxu0 %v2620
    %2776 = vmatprep.subr.mxu0 0.0
    %2777 = vmatpush2.msra.mxu0 %v2619
    %2778 = vmatprep.subr.mxu0 0.0
    %2779 = vmatpush2.msra.mxu0 %v2618
    %2780 = vmatprep.subr.mxu0 0.0
    %2781 = vmatpush2.msra.mxu0 %v2617
    %2782 = vmatprep.subr.mxu0 0.0
    %2783 = vmatpush2.msra.mxu0 %v2616
    %2784 = vmatprep.subr.mxu0 0.0
    %2785 = vmatpush2.msra.mxu0 %v2615
    %2786 = vmatprep.subr.mxu0 0.0
    %2787 = vmatpush2.msra.mxu0 %v2614
    %2788 = vmatprep.subr.mxu0 0.0
    %2789 = vmatpush2.msra.mxu0 %v2613
    %2790 = vmatprep.mubr.f32.mxu0 %v2382
    %2791 = vmatmul.mubr.f32.gmra.mxu0 %v2380
    %v2792 = vpop.f32.mrf.mxu0
    %v2793 = vadd.f32 %v2725, %v2792
    %v2794 = vpop.f32.mrf.mxu0
    %2795 = vdwg.mxu0
    %2796 = vmatprep.subr.mxu0 0.0
    %2797 = vmatpush1.msra.mxu0 %v2644
    %2798 = vmatprep.subr.mxu0 0.0
    %2799 = vmatpush1.msra.mxu0 %v2643
    %2800 = vmatprep.subr.mxu0 0.0
    %2801 = vmatpush1.msra.mxu0 %v2642
    %2802 = vmatprep.subr.mxu0 0.0
    %2803 = vmatpush1.msra.mxu0 %v2641
    %2804 = vmatprep.subr.mxu0 0.0
    %2805 = vmatpush1.msra.mxu0 %v2640
    %2806 = vmatprep.subr.mxu0 0.0
    %2807 = vmatpush1.msra.mxu0 %v2639
    %2808 = vmatprep.subr.mxu0 0.0
    %2809 = vmatpush1.msra.mxu0 %v2638
    %2810 = vmatprep.subr.mxu0 0.0
    %2811 = vmatpush1.msra.mxu0 %v2637
    %2812 = vmatprep.subr.mxu0 0.0
    %2813 = vmatpush1.msra.mxu0 %v2636
    %2814 = vmatprep.subr.mxu0 0.0
    %2815 = vmatpush1.msra.mxu0 %v2635
    %2816 = vmatprep.subr.mxu0 0.0
    %2817 = vmatpush1.msra.mxu0 %v2634
    %2818 = vmatprep.subr.mxu0 0.0
    %2819 = vmatpush1.msra.mxu0 %v2633
    %2820 = vmatprep.subr.mxu0 0.0
    %2821 = vmatpush1.msra.mxu0 %v2632
    %2822 = vmatprep.subr.mxu0 0.0
    %2823 = vmatpush1.msra.mxu0 %v2631
    %2824 = vmatprep.subr.mxu0 0.0
    %2825 = vmatpush1.msra.mxu0 %v2630
    %2826 = vmatprep.subr.mxu0 0.0
    %2827 = vmatpush1.msra.mxu0 %v2629
    %2828 = vmatprep.subr.mxu0 0.0
    %2829 = vmatpush2.msra.mxu0 %v2660
    %2830 = vmatprep.subr.mxu0 0.0
    %2831 = vmatpush2.msra.mxu0 %v2659
    %2832 = vmatprep.subr.mxu0 0.0
    %2833 = vmatpush2.msra.mxu0 %v2658
    %2834 = vmatprep.subr.mxu0 0.0
    %2835 = vmatpush2.msra.mxu0 %v2657
    %2836 = vmatprep.subr.mxu0 0.0
    %2837 = vmatpush2.msra.mxu0 %v2656
    %2838 = vmatprep.subr.mxu0 0.0
    %2839 = vmatpush2.msra.mxu0 %v2655
    %2840 = vmatprep.subr.mxu0 0.0
    %2841 = vmatpush2.msra.mxu0 %v2654
    %2842 = vmatprep.subr.mxu0 0.0
    %2843 = vmatpush2.msra.mxu0 %v2653
    %2844 = vmatprep.subr.mxu0 0.0
    %2845 = vmatpush2.msra.mxu0 %v2652
    %2846 = vmatprep.subr.mxu0 0.0
    %2847 = vmatpush2.msra.mxu0 %v2651
    %2848 = vmatprep.subr.mxu0 0.0
    %2849 = vmatpush2.msra.mxu0 %v2650
    %2850 = vmatprep.subr.mxu0 0.0
    %2851 = vmatpush2.msra.mxu0 %v2649
    %2852 = vmatprep.subr.mxu0 0.0
    %2853 = vmatpush2.msra.mxu0 %v2648
    %2854 = vmatprep.subr.mxu0 0.0
    %2855 = vmatpush2.msra.mxu0 %v2647
    %2856 = vmatprep.subr.mxu0 0.0
    %2857 = vmatpush2.msra.mxu0 %v2646
    %2858 = vmatprep.subr.mxu0 0.0
    %2859 = vmatpush2.msra.mxu0 %v2645
    %2860 = vmatprep.mubr.f32.mxu0 %v2453
    %2861 = vmatmul.mubr.f32.gmra.mxu0 %v2451
    %v2862 = vpop.f32.mrf.mxu0
    %v2863 = vadd.f32 %v2793, %v2862
    %v2864 = vpop.f32.mrf.mxu0
    %2865 = vdwg.mxu0
    %2866 = vmatprep.subr.mxu0 0.0
    %2867 = vmatpush1.msra.mxu0 %v2676
    %2868 = vmatprep.subr.mxu0 0.0
    %2869 = vmatpush1.msra.mxu0 %v2675
    %2870 = vmatprep.subr.mxu0 0.0
    %2871 = vmatpush1.msra.mxu0 %v2674
    %2872 = vmatprep.subr.mxu0 0.0
    %2873 = vmatpush1.msra.mxu0 %v2673
    %2874 = vmatprep.subr.mxu0 0.0
    %2875 = vmatpush1.msra.mxu0 %v2672
    %2876 = vmatprep.subr.mxu0 0.0
    %2877 = vmatpush1.msra.mxu0 %v2671
    %2878 = vmatprep.subr.mxu0 0.0
    %2879 = vmatpush1.msra.mxu0 %v2670
    %2880 = vmatprep.subr.mxu0 0.0
    %2881 = vmatpush1.msra.mxu0 %v2669
    %2882 = vmatprep.subr.mxu0 0.0
    %2883 = vmatpush1.msra.mxu0 %v2668
    %2884 = vmatprep.subr.mxu0 0.0
    %2885 = vmatpush1.msra.mxu0 %v2667
    %2886 = vmatprep.subr.mxu0 0.0
    %2887 = vmatpush1.msra.mxu0 %v2666
    %2888 = vmatprep.subr.mxu0 0.0
    %2889 = vmatpush1.msra.mxu0 %v2665
    %2890 = vmatprep.subr.mxu0 0.0
    %2891 = vmatpush1.msra.mxu0 %v2664
    %2892 = vmatprep.subr.mxu0 0.0
    %2893 = vmatpush1.msra.mxu0 %v2663
    %2894 = vmatprep.subr.mxu0 0.0
    %2895 = vmatpush1.msra.mxu0 %v2662
    %2896 = vmatprep.subr.mxu0 0.0
    %2897 = vmatpush1.msra.mxu0 %v2661
    %2898 = vmatprep.subr.mxu0 0.0
    %2899 = vmatpush2.msra.mxu0 %v2692
    %2900 = vmatprep.subr.mxu0 0.0
    %2901 = vmatpush2.msra.mxu0 %v2691
    %2902 = vmatprep.subr.mxu0 0.0
    %2903 = vmatpush2.msra.mxu0 %v2690
    %2904 = vmatprep.subr.mxu0 0.0
    %2905 = vmatpush2.msra.mxu0 %v2689
    %2906 = vmatprep.subr.mxu0 0.0
    %2907 = vmatpush2.msra.mxu0 %v2688
    %2908 = vmatprep.subr.mxu0 0.0
    %2909 = vmatpush2.msra.mxu0 %v2687
    %2910 = vmatprep.subr.mxu0 0.0
    %2911 = vmatpush2.msra.mxu0 %v2686
    %2912 = vmatprep.subr.mxu0 0.0
    %2913 = vmatpush2.msra.mxu0 %v2685
    %2914 = vmatprep.subr.mxu0 0.0
    %2915 = vmatpush2.msra.mxu0 %v2684
    %2916 = vmatprep.subr.mxu0 0.0
    %2917 = vmatpush2.msra.mxu0 %v2683
    %2918 = vmatprep.subr.mxu0 0.0
    %2919 = vmatpush2.msra.mxu0 %v2682
    %2920 = vmatprep.subr.mxu0 0.0
    %2921 = vmatpush2.msra.mxu0 %v2681
    %2922 = vmatprep.subr.mxu0 0.0
    %2923 = vmatpush2.msra.mxu0 %v2680
    %2924 = vmatprep.subr.mxu0 0.0
    %2925 = vmatpush2.msra.mxu0 %v2679
    %2926 = vmatprep.subr.mxu0 0.0
    %2927 = vmatpush2.msra.mxu0 %v2678
    %2928 = vmatprep.subr.mxu0 0.0
    %2929 = vmatpush2.msra.mxu0 %v2677
    %2930 = vmatprep.mubr.f32.mxu0 %v2524
    %2931 = vmatmul.mubr.f32.gmra.mxu0 %v2522
    %v2932 = vpop.f32.mrf.mxu0
    %v2933 = vadd.f32 %v2863, %v2932
    %v2934 = vpop.f32.mrf.mxu0
    %2935 = vdwg.mxu0
    %2936 = vmatprep.subr.mxu0 0.0
    %2937 = vmatpush1.msra.mxu0 %v2708
    %2938 = vmatprep.subr.mxu0 0.0
    %2939 = vmatpush1.msra.mxu0 %v2707
    %2940 = vmatprep.subr.mxu0 0.0
    %2941 = vmatpush1.msra.mxu0 %v2706
    %2942 = vmatprep.subr.mxu0 0.0
    %2943 = vmatpush1.msra.mxu0 %v2705
    %2944 = vmatprep.subr.mxu0 0.0
    %2945 = vmatpush1.msra.mxu0 %v2704
    %2946 = vmatprep.subr.mxu0 0.0
    %2947 = vmatpush1.msra.mxu0 %v2703
    %2948 = vmatprep.subr.mxu0 0.0
    %2949 = vmatpush1.msra.mxu0 %v2702
    %2950 = vmatprep.subr.mxu0 0.0
    %2951 = vmatpush1.msra.mxu0 %v2701
    %2952 = vmatprep.subr.mxu0 0.0
    %2953 = vmatpush1.msra.mxu0 %v2700
    %2954 = vmatprep.subr.mxu0 0.0
    %2955 = vmatpush1.msra.mxu0 %v2699
    %2956 = vmatprep.subr.mxu0 0.0
    %2957 = vmatpush1.msra.mxu0 %v2698
    %2958 = vmatprep.subr.mxu0 0.0
    %2959 = vmatpush1.msra.mxu0 %v2697
    %2960 = vmatprep.subr.mxu0 0.0
    %2961 = vmatpush1.msra.mxu0 %v2696
    %2962 = vmatprep.subr.mxu0 0.0
    %2963 = vmatpush1.msra.mxu0 %v2695
    %2964 = vmatprep.subr.mxu0 0.0
    %2965 = vmatpush1.msra.mxu0 %v2694
    %2966 = vmatprep.subr.mxu0 0.0
    %2967 = vmatpush1.msra.mxu0 %v2693
    %2968 = vmatprep.subr.mxu0 0.0
    %2969 = vmatpush2.msra.mxu0 %v2724
    %2970 = vmatprep.subr.mxu0 0.0
    %2971 = vmatpush2.msra.mxu0 %v2723
    %2972 = vmatprep.subr.mxu0 0.0
    %2973 = vmatpush2.msra.mxu0 %v2722
    %2974 = vmatprep.subr.mxu0 0.0
    %2975 = vmatpush2.msra.mxu0 %v2721
    %2976 = vmatprep.subr.mxu0 0.0
    %2977 = vmatpush2.msra.mxu0 %v2720
    %2978 = vmatprep.subr.mxu0 0.0
    %2979 = vmatpush2.msra.mxu0 %v2719
    %2980 = vmatprep.subr.mxu0 0.0
    %2981 = vmatpush2.msra.mxu0 %v2718
    %2982 = vmatprep.subr.mxu0 0.0
    %2983 = vmatpush2.msra.mxu0 %v2717
    %2984 = vmatprep.subr.mxu0 0.0
    %2985 = vmatpush2.msra.mxu0 %v2716
    %2986 = vmatprep.subr.mxu0 0.0
    %2987 = vmatpush2.msra.mxu0 %v2715
    %2988 = vmatprep.subr.mxu0 0.0
    %2989 = vmatpush2.msra.mxu0 %v2714
    %2990 = vmatprep.subr.mxu0 0.0
    %2991 = vmatpush2.msra.mxu0 %v2713
    %2992 = vmatprep.subr.mxu0 0.0
    %2993 = vmatpush2.msra.mxu0 %v2712
    %2994 = vmatprep.subr.mxu0 0.0
    %2995 = vmatpush2.msra.mxu0 %v2711
    %2996 = vmatprep.subr.mxu0 0.0
    %2997 = vmatpush2.msra.mxu0 %v2710
    %2998 = vmatprep.subr.mxu0 0.0
    %2999 = vmatpush2.msra.mxu0 %v2709
    %3000 = vmatprep.mubr.f32.mxu0 %v2595
    %3001 = vmatmul.mubr.f32.gmra.mxu0 %v2593
    %v3002 = vpop.f32.mrf.mxu0
    %v3003 = vadd.f32 %v2933, %v3002
    %v3004 = vpop.f32.mrf.mxu0
    %3005 = vdwg.mxu0
    %v3006 = vmax.f32 %v3003, 0.0
    %v3007 = vld [vmem:[%s13] sm:$0xff]
    %v3008 = vld [vmem:[%s13 + $0x8] sm:$0xff]
    %v3009 = vld [vmem:[%s13 + $0x10] sm:$0xff]
    %v3010 = vld [vmem:[%s13 + $0x18] sm:$0xff]
    %v3011 = vld [vmem:[%s13 + $0x20] sm:$0xff]
    %v3012 = vld [vmem:[%s13 + $0x28] sm:$0xff]
    %v3013 = vld [vmem:[%s13 + $0x30] sm:$0xff]
    %v3014 = vld [vmem:[%s13 + $0x38] sm:$0xff]
    %v3015 = vld [vmem:[%s1 + $0x5] ss:$0 sm:$0xff]
    %v3017 = vsel %vm952, %v3006, 0
    %3019 = vmatprep.subr.mxu0 0.0
    %3020 = vmatpush1.msra.mxu0 0.0
    %3021 = vmatprep.subr.mxu0 0.0
    %3022 = vmatpush1.msra.mxu0 0.0
    %3023 = vmatprep.subr.mxu0 0.0
    %3024 = vmatpush1.msra.mxu0 0.0
    %3025 = vmatprep.subr.mxu0 0.0
    %3026 = vmatpush1.msra.mxu0 0.0
    %3027 = vmatprep.subr.mxu0 0.0
    %3028 = vmatpush1.msra.mxu0 0.0
    %3029 = vmatprep.subr.mxu0 0.0
    %3030 = vmatpush1.msra.mxu0 0.0
    %3031 = vmatprep.subr.mxu0 0.0
    %3032 = vmatpush1.msra.mxu0 0.0
    %3033 = vmatprep.subr.mxu0 0.0
    %3034 = vmatpush1.msra.mxu0 0.0
    %3035 = vmatprep.subr.mxu0 0.0
    %3036 = vmatpush1.msra.mxu0 %v3014
    %3037 = vmatprep.subr.mxu0 0.0
    %3038 = vmatpush1.msra.mxu0 %v3013
    %3039 = vmatprep.subr.mxu0 0.0
    %3040 = vmatpush1.msra.mxu0 %v3012
    %3041 = vmatprep.subr.mxu0 0.0
    %3042 = vmatpush1.msra.mxu0 %v3011
    %3043 = vmatprep.subr.mxu0 0.0
    %3044 = vmatpush1.msra.mxu0 %v3010
    %3045 = vmatprep.subr.mxu0 0.0
    %3046 = vmatpush1.msra.mxu0 %v3009
    %3047 = vmatprep.subr.mxu0 0.0
    %3048 = vmatpush1.msra.mxu0 %v3008
    %3049 = vmatprep.subr.mxu0 0.0
    %3050 = vmatpush1.msra.mxu0 %v3007
    %3051 = vmatprep.subr.mxu0 0.0
    %3052 = vmatpush2.msra.mxu0 0.0
    %3053 = vmatprep.subr.mxu0 0.0
    %3054 = vmatpush2.msra.mxu0 0.0
    %3055 = vmatprep.subr.mxu0 0.0
    %3056 = vmatpush2.msra.mxu0 0.0
    %3057 = vmatprep.subr.mxu0 0.0
    %3058 = vmatpush2.msra.mxu0 0.0
    %3059 = vmatprep.subr.mxu0 0.0
    %3060 = vmatpush2.msra.mxu0 0.0
    %3061 = vmatprep.subr.mxu0 0.0
    %3062 = vmatpush2.msra.mxu0 0.0
    %3063 = vmatprep.subr.mxu0 0.0
    %3064 = vmatpush2.msra.mxu0 0.0
    %3065 = vmatprep.subr.mxu0 0.0
    %3066 = vmatpush2.msra.mxu0 0.0
    %3067 = vmatprep.subr.mxu0 0.0
    %3068 = vmatpush2.msra.mxu0 0.0
    %3069 = vmatprep.subr.mxu0 0.0
    %3070 = vmatpush2.msra.mxu0 0.0
    %3071 = vmatprep.subr.mxu0 0.0
    %3072 = vmatpush2.msra.mxu0 0.0
    %3073 = vmatprep.subr.mxu0 0.0
    %3074 = vmatpush2.msra.mxu0 0.0
    %3075 = vmatprep.subr.mxu0 0.0
    %3076 = vmatpush2.msra.mxu0 0.0
    %3077 = vmatprep.subr.mxu0 0.0
    %3078 = vmatpush2.msra.mxu0 0.0
    %3079 = vmatprep.subr.mxu0 0.0
    %3080 = vmatpush2.msra.mxu0 0.0
    %3081 = vmatprep.subr.mxu0 0.0
    %3082 = vmatpush2.msra.mxu0 0.0
    %3083 = vmatprep.mubr.f32.mxu0 0.0
    %3084 = vmatmul.mubr.f32.gmra.mxu0 %v3017
    %v3085 = vpop.f32.mrf.mxu0
    %v3086 = vadd.f32 %v3015, %v3085
    %v3087 = vpop.f32.mrf.mxu0
    %3088 = vdwg.mxu0
    %3089 = vst [vmem:[#allocation2] sm:$0x3] %v3086
    // Predicated region
    $region58: #{gcn_hyper_attention_forward.1} parent=1 // pred_check
      _
    $region59: #{gcn_hyper_attention_forward.1} parent=1 // pred_check_branch
      %3091 = sbr.rel (0) target = $region61
    $region60: #{gcn_hyper_attention_forward.1} parent=1 // pred_region
      %s3093 = ssub.s32 32, 32
      %3094 = vsyncadd [#allocation3], %s3093
      %s3096 = sshll.u32 [#allocation2], 4
      %s3097 = int_to_ptr.vmem [resolvable:$true] %s3096
      %3099 = dma.vmem_to_hbm [thread:$0]  %s3097, 32, %s14, [#allocation3]
    $region61: #{gcn_hyper_attention_forward.1} parent=1 // pred_fallthru
      _
    // Predicated region
    $region62: #{gcn_hyper_attention_forward.1} parent=1 // pred_check
      _
    $region63: #{gcn_hyper_attention_forward.1} parent=1 // pred_check_branch
      %3101 = sbr.rel (0) target = $region65
    $region64: #{gcn_hyper_attention_forward.1} parent=1 // pred_region
      %3102 = dma.done [#allocation3], 32
    $region65: #{gcn_hyper_attention_forward.1} parent=1 // pred_fallthru
      _
    %3103 = vsyncpa [#allocation3], 1

</llo_original>
